<compile_context>
chip_gen: v5e
topology: v5e:2x2
jax: 0.10.0
libtpu: 0.0.40
codegen_flags: <defaults>
</compile_context>

<pallas_src>
import functools

import jax
import jax.numpy as jnp
from jax.experimental import pallas as pl
from jax.experimental.pallas import tpu as pltpu


def _round_up(n, m):
    return ((n + m - 1) // m) * m


# ---------------------------------------------------------------------------
# Lane realignment: circularly shift lanes so that lane `off` moves to lane 0.
# The hardware rotate direction is probed once with a tiny kernel.
# ---------------------------------------------------------------------------
_ALIGN_MODE = None  # "roll_jnp" | "roll_rev" | "concat"


def _detect_align_mode():
    global _ALIGN_MODE
    if _ALIGN_MODE is not None:
        return _ALIGN_MODE
    try:
        def probe(x_ref, o_ref):
            o_ref[...] = pltpu.roll(x_ref[...], 1, axis=1)

        xi = jax.lax.broadcasted_iota(jnp.float32, (8, 128), 1)
        y = jax.block_until_ready(
            pl.pallas_call(
                probe,
                out_shape=jax.ShapeDtypeStruct((8, 128), jnp.float32),
            )(xi))
        # jnp.roll convention: y[:, 1] == x[:, 0] == 0
        _ALIGN_MODE = "roll_jnp" if float(y[0, 1]) == 0.0 else "roll_rev"
    except Exception:  # conservative fallback if roll does not lower here
        _ALIGN_MODE = "concat"
    return _ALIGN_MODE


def _align_lane0(x, off, mode):
    """Circular lane shift so that input lane `off` lands on output lane 0."""
    gw = x.shape[-1]
    off = off % gw
    if off == 0:
        return x
    if mode == "roll_jnp":
        return pltpu.roll(x, gw - off, axis=1)
    if mode == "roll_rev":
        return pltpu.roll(x, off, axis=1)
    # fallback: explicit slice + concat (unambiguous semantics)
    return jnp.concatenate([x[:, off:], x[:, :off]], axis=1)


# ---------------------------------------------------------------------------
# Fused kernel: 3 LSTM layers (wavefront) + FC head, everything VMEM-resident.
# Gate order follows PyTorch nn.LSTM: [i | f | g | o], packed into one 128-lane
# slab per layer (gate k at lanes [k*H, (k+1)*H)).
# ---------------------------------------------------------------------------
def _fused_lstm_kernel(x_ref,
                       w1i_ref, w1h_ref, b1_ref,
                       w2i_ref, w2h_ref, b2_ref,
                       w3i_ref, w3h_ref, b3_ref,
                       fcw_ref, fcb_ref,
                       o_ref,
                       g1_scr,
                       *, T, Bp, H, GW, align_mode):
    H1, H2, H3 = H
    f32 = jnp.float32

    def mm(a, w_ref):
        # matmul operands in the packed-weight dtype (bf16 on the MXU when
        # enabled); accumulate in f32.  Weight refs are read at the dot site.
        return jnp.dot(a.astype(w_ref.dtype), w_ref[...],
                       preferred_element_type=f32)

    def align(x, off):
        return _align_lane0(x, off, align_mode)

    def cell(g, c_prev, Hl):
        # Packed-gate LSTM cell.  g: (Bp, GW) f32 pre-activations holding
        # [i|f|g|o] at lane offsets 0, Hl, 2*Hl, 3*Hl.  Lanes >= Hl of h/c hold
        # bounded junk that only ever multiplies zero weight rows downstream.
        sg = 0.5 * jnp.tanh(0.5 * g) + 0.5      # sigmoid of all slots, 1 EUP op
        tg = jnp.tanh(g)                        # tanh of all slots, 1 EUP op
        c_new = align(sg, Hl) * c_prev + sg * align(tg, 2 * Hl)
        h_new = align(sg, 3 * Hl) * jnp.tanh(c_new)
        return h_new, c_new

    # ---- layer-1 input-side matmul hoisted over the whole sequence ----
    g1_scr[...] = mm(x_ref[...], w1i_ref) + b1_ref[...]

    zeros = jnp.zeros((Bp, GW), f32)
    h1, c1 = zeros, zeros
    h2, c2 = zeros, zeros
    h3, c3 = zeros, zeros
    h1_out = [None] * T
    h2_out = [None] * T
    b2 = b2_ref[...]
    b3 = b3_ref[...]

    # ---- wavefront over (layer, timestep): layer l runs t = s - (l-1) ----
    for s in range(T + 2):
        if s < T:                                           # layer 1, t = s
            g1 = g1_scr[s * Bp:(s + 1) * Bp, :] + mm(h1, w1h_ref)
            h1, c1 = cell(g1, c1, H1)
            h1_out[s] = h1
        t2 = s - 1
        if 0 <= t2 < T:                                     # layer 2, t = s-1
            # dropout between layers is identity (eval mode)
            g2 = b2 + mm(h1_out[t2], w2i_ref) + mm(h2, w2h_ref)
            h2, c2 = cell(g2, c2, H2)
            h2_out[t2] = h2
        t3 = s - 2
        if 0 <= t3 < T:                                     # layer 3, t = s-2
            g3 = b3 + mm(h2_out[t3], w3i_ref) + mm(h3, w3h_ref)
            h3, c3 = cell(g3, c3, H3)

    # ---- FC head on the final hidden state only (lane-dense (Bp, 128)) ----
    o_ref[...] = mm(h3, fcw_ref) + fcb_ref[...]


def _full_spec(a):
    nd = a.ndim
    return pl.BlockSpec(a.shape, lambda i, _nd=nd: (0,) * _nd)


def _fused_forward_call(x_flat, packed, *, T, Bp):
    GW = packed["GW"]
    args = [x_flat,
            packed["w_ih"][0], packed["w_hh"][0], packed["b"][0],
            packed["w_ih"][1], packed["w_hh"][1], packed["b"][1],
            packed["w_ih"][2], packed["w_hh"][2], packed["b"][2],
            packed["fc_w"], packed["fc_b"]]
    kernel = functools.partial(
        _fused_lstm_kernel, T=T, Bp=Bp, H=packed["H"], GW=GW,
        align_mode=_detect_align_mode())
    return pl.pallas_call(
        kernel,
        out_shape=jax.ShapeDtypeStruct((Bp, 128), jnp.float32),
        grid_spec=pltpu.PrefetchScalarGridSpec(
            num_scalar_prefetch=0,
            grid=(1,),
            in_specs=[_full_spec(a) for a in args],
            out_specs=pl.BlockSpec((Bp, 128), lambda i: (0, 0)),
            scratch_shapes=[
                pltpu.VMEM((T * Bp, GW), jnp.float32),   # layer-1 hoisted gates
            ],
        ),
        compiler_params=pltpu.CompilerParams(
            dimension_semantics=("arbitrary",),
            vmem_limit_bytes=32 * 1024 * 1024),
    )(*args)


# ---------------------------------------------------------------------------
# Parameters: PyTorch-layout raw weights + packed/padded kernel layout.
# ---------------------------------------------------------------------------
def init_raw_params(key, input_size, hidden_sizes):
    raw = {"lstm": [], "fc": None}
    in_sz = input_size
    for H in hidden_sizes:
        key, k1, k2, k3, k4 = jax.random.split(key, 5)
        bound = 1.0 / (H ** 0.5)
        w_ih = jax.random.uniform(k1, (4 * H, in_sz), jnp.float32, -bound, bound)
        w_hh = jax.random.uniform(k2, (4 * H, H), jnp.float32, -bound, bound)
        b_ih = jax.random.uniform(k3, (4 * H,), jnp.float32, -bound, bound)
        b_hh = jax.random.uniform(k4, (4 * H,), jnp.float32, -bound, bound)
        raw["lstm"].append((w_ih, w_hh, b_ih, b_hh))
        in_sz = H
    key, k1, k2 = jax.random.split(key, 3)
    H_last = hidden_sizes[-1]
    bound = 1.0 / (H_last ** 0.5)
    fc_w = jax.random.uniform(k1, (1, H_last), jnp.float32, -bound, bound)
    fc_b = jax.random.uniform(k2, (1,), jnp.float32, -bound, bound)
    raw["fc"] = (fc_w, fc_b)
    return raw


def pack_params(raw, input_size, hidden_sizes, dtype=jnp.bfloat16):
    """Pack weights: all 4 gates in one 128-lane slab, zero-padded rows/lanes.

    Padding rows/lanes are exactly zero, which is what keeps the bounded junk
    in padded h/c lanes from ever contaminating live lanes.
    """
    GW = 128   # one 128-lane slab holds all 4 gates
    HW = 128   # hidden-state lane width
    for H in hidden_sizes:
        assert 4 * H <= GW, (
            "TODO(synk): fall back to 4*ceil(H/128)*128-wide gate slabs when 4*H > 128")
    Ip = _round_up(max(input_size, 1), 128)
    packed = {"w_ih": [], "w_hh": [], "b": [], "Ip": Ip, "GW": GW, "HW": HW,
              "H": tuple(hidden_sizes), "dtype": dtype}
    in_sz, in_p = input_size, Ip
    for (w_ih, w_hh, b_ih, b_hh), H in zip(raw["lstm"], hidden_sizes):
        # PyTorch: w_ih (4H, in), rows ordered [i|f|g|o]; packed gate k sits at
        # lanes [k*H, (k+1)*H) == contiguous columns of w_ih.T.
        wi = jnp.zeros((in_p, GW), jnp.float32).at[:in_sz, :4 * H].set(w_ih.T)
        wh = jnp.zeros((HW, GW), jnp.float32).at[:H, :4 * H].set(w_hh.T)
        bp = jnp.zeros((1, GW), jnp.float32).at[0, :4 * H].set(b_ih + b_hh)
        packed["w_ih"].append(wi.astype(dtype))
        packed["w_hh"].append(wh.astype(dtype))
        packed["b"].append(bp)            # biases stay f32 (added post-matmul)
        in_sz, in_p = H, HW
    fc_w, fc_b = raw["fc"]
    H_last = hidden_sizes[-1]
    packed["fc_w"] = (jnp.zeros((HW, 128), jnp.float32)
                      .at[:H_last, 0].set(fc_w[0, :]).astype(dtype))
    packed["fc_b"] = jnp.zeros((1, 128), jnp.float32).at[0, 0].set(fc_b[0])
    return packed


def lstm_predictor_forward(packed, x):
    """x: (B, T, input_size) batch-first, like PyTorch. Returns (B, 1)."""
    B, T, I = x.shape
    Bp = _round_up(B, 8)
    Ip = packed["Ip"]
    x_tm = jnp.transpose(x, (1, 0, 2)).astype(jnp.float32)        # (T, B, I)
    x_p = jnp.zeros((T, Bp, Ip), jnp.float32).at[:, :B, :I].set(x_tm)
    x_flat = x_p.reshape(T * Bp, Ip).astype(packed["dtype"])      # (T*Bp, Ip)
    out_p = _fused_forward_call(x_flat, packed, T=T, Bp=Bp)       # (Bp, 128)
    return out_p[:B, 0:1]


# ---------------------------------------------------------------------------
# Pure-JAX reference (PyTorch nn.LSTM eval semantics) for correctness check.
# ---------------------------------------------------------------------------
def lstm_predictor_ref(raw, x):
    h_seq = x
    for (w_ih, w_hh, b_ih, b_hh) in raw["lstm"]:
        B, T, _ = h_seq.shape
        H = w_hh.shape[1]
        h = jnp.zeros((B, H), jnp.float32)
        c = jnp.zeros((B, H), jnp.float32)
        outs = []
        for t in range(T):
            gates = h_seq[:, t, :] @ w_ih.T + h @ w_hh.T + b_ih + b_hh
            i_g = jax.nn.sigmoid(gates[:, 0:H])
            f_g = jax.nn.sigmoid(gates[:, H:2 * H])
            g_g = jnp.tanh(gates[:, 2 * H:3 * H])
            o_g = jax.nn.sigmoid(gates[:, 3 * H:4 * H])
            c = f_g * c + i_g * g_g
            h = o_g * jnp.tanh(c)
            outs.append(h)
        h_seq = jnp.stack(outs, axis=1)
    fc_w, fc_b = raw["fc"]
    return h_seq[:, -1, :] @ fc_w.T + fc_b


if __name__ == "__main__":
    B, T = 2, 8
    input_size = 8
    hidden_sizes = (16, 32, 32)
    dropout_rate = 0.2   # identity in eval mode

    key = jax.random.PRNGKey(0)
    key, kx, kp = jax.random.split(key, 3)
    x = jax.random.normal(kx, (B, T, input_size), jnp.float32)
    raw = init_raw_params(kp, input_size, hidden_sizes)

    with jax.default_matmul_precision("highest"):
        ref = lstm_predictor_ref(raw, x)
    ref = jax.block_until_ready(ref)

    # 1) f32 packed weights: validates gate packing / wavefront / lane rolls
    #    exactly against the fp32 PyTorch-semantics reference.
    packed_f32 = pack_params(raw, input_size, hidden_sizes, dtype=jnp.float32)
    out_f32 = jax.block_until_ready(lstm_predictor_forward(packed_f32, x))
    assert out_f32.shape == (B, 1), out_f32.shape
    assert jnp.allclose(out_f32, ref, atol=2e-3, rtol=2e-3), (out_f32, ref)

    # 2) bf16 matmul operands (production config, MXU-native): looser tolerance.
    packed_bf16 = pack_params(raw, input_size, hidden_sizes, dtype=jnp.bfloat16)
    out_bf16 = jax.block_until_ready(lstm_predictor_forward(packed_bf16, x))
    assert out_bf16.shape == (B, 1), out_bf16.shape
    assert jnp.allclose(out_bf16, ref, atol=5e-2, rtol=5e-2), (out_bf16, ref)

    print("KERNEL_OK")
</pallas_src>

<mosaic_0001>
module attributes {stable_mosaic.version = 11 : i64} {
  func.func @probe(%arg0: memref<8x128xf32, #tpu.memory_space<vmem>>, %arg1: memref<8x128xf32, #tpu.memory_space<vmem>>) attributes {dimension_semantics = [], scalar_prefetch = 0 : i64, scratch_operands = 0 : i64, tpu.core_type = #tpu.core_type<tc>} {
    %c0 = arith.constant 0 : index
    %c0_0 = arith.constant 0 : index
    %0 = vector.load %arg0[%c0, %c0_0] : memref<8x128xf32, #tpu.memory_space<vmem>>, vector<8x128xf32>
    %c1_i32 = arith.constant 1 : i32
    %1 = tpu.dynamic_rotate %0 by %c1_i32 dim 1 : vector<8x128xf32>, i32 -> vector<8x128xf32>
    %c0_1 = arith.constant 0 : index
    %c0_2 = arith.constant 0 : index
    %2 = vector.load %arg1[%c0_1, %c0_2] : memref<8x128xf32, #tpu.memory_space<vmem>>, vector<8x128xf32>
    tpu.vector_store %arg1[%c0_1, %c0_2], %1 {strides = array<i32>} : memref<8x128xf32, #tpu.memory_space<vmem>>, vector<8x128xf32>,
    return
  }
}

module attributes {stable_mosaic.version = 11 : i64} {
  func.func @_fused_lstm_kernel(%arg0: i32, %arg1: memref<64x128xf32, #tpu.memory_space<vmem>>, %arg2: memref<128x128xf32, #tpu.memory_space<vmem>>, %arg3: memref<128x128xf32, #tpu.memory_space<vmem>>, %arg4: memref<1x128xf32, #tpu.memory_space<vmem>>, %arg5: memref<128x128xf32, #tpu.memory_space<vmem>>, %arg6: memref<128x128xf32, #tpu.memory_space<vmem>>, %arg7: memref<1x128xf32, #tpu.memory_space<vmem>>, %arg8: memref<128x128xf32, #tpu.memory_space<vmem>>, %arg9: memref<128x128xf32, #tpu.memory_space<vmem>>, %arg10: memref<1x128xf32, #tpu.memory_space<vmem>>, %arg11: memref<128x128xf32, #tpu.memory_space<vmem>>, %arg12: memref<1x128xf32, #tpu.memory_space<vmem>>, %arg13: memref<8x128xf32, #tpu.memory_space<vmem>>, %arg14: memref<64x128xf32, #tpu.memory_space<vmem>>) attributes {dimension_semantics = [#tpu.dimension_semantics<arbitrary>], iteration_bounds = array<i64: 1>, scalar_prefetch = 0 : i64, scratch_operands = 1 : i64, tpu.core_type = #tpu.core_type<tc>, window_params = [{pipeline_mode = #tpu.pipeline_mode<synchronous>, transform_indices = @transform_0, window_bounds = array<i64: 64, 128>}, {pipeline_mode = #tpu.pipeline_mode<synchronous>, transform_indices = @transform_1, window_bounds = array<i64: 128, 128>}, {pipeline_mode = #tpu.pipeline_mode<synchronous>, transform_indices = @transform_2, window_bounds = array<i64: 128, 128>}, {pipeline_mode = #tpu.pipeline_mode<synchronous>, transform_indices = @transform_3, window_bounds = array<i64: 1, 128>}, {pipeline_mode = #tpu.pipeline_mode<synchronous>, transform_indices = @transform_4, window_bounds = array<i64: 128, 128>}, {pipeline_mode = #tpu.pipeline_mode<synchronous>, transform_indices = @transform_5, window_bounds = array<i64: 128, 128>}, {pipeline_mode = #tpu.pipeline_mode<synchronous>, transform_indices = @transform_6, window_bounds = array<i64: 1, 128>}, {pipeline_mode = #tpu.pipeline_mode<synchronous>, transform_indices = @transform_7, window_bounds = array<i64: 128, 128>}, {pipeline_mode = #tpu.pipeline_mode<synchronous>, transform_indices = @transform_8, window_bounds = array<i64: 128, 128>}, {pipeline_mode = #tpu.pipeline_mode<synchronous>, transform_indices = @transform_9, window_bounds = array<i64: 1, 128>}, {pipeline_mode = #tpu.pipeline_mode<synchronous>, transform_indices = @transform_10, window_bounds = array<i64: 128, 128>}, {pipeline_mode = #tpu.pipeline_mode<synchronous>, transform_indices = @transform_11, window_bounds = array<i64: 1, 128>}, {pipeline_mode = #tpu.pipeline_mode<synchronous>, transform_indices = @transform_12, window_bounds = array<i64: 8, 128>}]} {
    %c0 = arith.constant 0 : index
    %c0_0 = arith.constant 0 : index
    %0 = vector.load %arg1[%c0, %c0_0] : memref<64x128xf32, #tpu.memory_space<vmem>>, vector<64x128xf32>
    %c0_1 = arith.constant 0 : index
    %c0_2 = arith.constant 0 : index
    %1 = vector.load %arg2[%c0_1, %c0_2] : memref<128x128xf32, #tpu.memory_space<vmem>>, vector<128x128xf32>
    %cst = arith.constant dense<0.000000e+00> : vector<64x128xf32>
    %2 = tpu.matmul %0, %1, %cst {dimension_numbers = #tpu.dot_dimension_numbers<[1], [0], [0], [1], [0, 0, 1, 1], [], []>} : vector<64x128xf32>, vector<128x128xf32>, vector<64x128xf32> -> vector<64x128xf32>
    %c0_3 = arith.constant 0 : index
    %c0_4 = arith.constant 0 : index
    %3 = vector.load %arg4[%c0_3, %c0_4] : memref<1x128xf32, #tpu.memory_space<vmem>>, vector<1x128xf32>
    %4 = vector.broadcast %3 : vector<1x128xf32> to vector<64x128xf32>
    %5 = arith.addf %2, %4 : vector<64x128xf32>
    %c0_5 = arith.constant 0 : index
    %c0_6 = arith.constant 0 : index
    %6 = vector.load %arg14[%c0_5, %c0_6] : memref<64x128xf32, #tpu.memory_space<vmem>>, vector<64x128xf32>
    tpu.vector_store %arg14[%c0_5, %c0_6], %5 {strides = array<i32>} : memref<64x128xf32, #tpu.memory_space<vmem>>, vector<64x128xf32>,
    %cst_7 = arith.constant 0.000000e+00 : f32
    %7 = vector.broadcast %cst_7 : f32 to vector<8x128xf32>
    %c0_8 = arith.constant 0 : index
    %c0_9 = arith.constant 0 : index
    %8 = vector.load %arg7[%c0_8, %c0_9] : memref<1x128xf32, #tpu.memory_space<vmem>>, vector<1x128xf32>
    %c0_10 = arith.constant 0 : index
    %c0_11 = arith.constant 0 : index
    %9 = vector.load %arg10[%c0_10, %c0_11] : memref<1x128xf32, #tpu.memory_space<vmem>>, vector<1x128xf32>
    %c0_12 = arith.constant 0 : index
    %c0_13 = arith.constant 0 : index
    %10 = vector.load %arg14[%c0_12, %c0_13] : memref<64x128xf32, #tpu.memory_space<vmem>>, vector<8x128xf32>
    %c0_14 = arith.constant 0 : index
    %c0_15 = arith.constant 0 : index
    %11 = vector.load %arg3[%c0_14, %c0_15] : memref<128x128xf32, #tpu.memory_space<vmem>>, vector<128x128xf32>
    %cst_16 = arith.constant dense<0.000000e+00> : vector<8x128xf32>
    %12 = tpu.matmul %7, %11, %cst_16 {dimension_numbers = #tpu.dot_dimension_numbers<[1], [0], [0], [1], [0, 0, 1, 1], [], []>} : vector<8x128xf32>, vector<128x128xf32>, vector<8x128xf32> -> vector<8x128xf32>
    %13 = arith.addf %10, %12 : vector<8x128xf32>
    %cst_17 = arith.constant 5.000000e-01 : f32
    %14 = vector.broadcast %cst_17 : f32 to vector<8x128xf32>
    %15 = arith.mulf %14, %13 : vector<8x128xf32>
    %16 = math.tanh %15 : vector<8x128xf32>
    %cst_18 = arith.constant 5.000000e-01 : f32
    %17 = vector.broadcast %cst_18 : f32 to vector<8x128xf32>
    %18 = arith.mulf %17, %16 : vector<8x128xf32>
    %cst_19 = arith.constant 5.000000e-01 : f32
    %19 = vector.broadcast %cst_19 : f32 to vector<8x128xf32>
    %20 = arith.addf %18, %19 : vector<8x128xf32>
    %21 = math.tanh %13 : vector<8x128xf32>
    %22 = vector.extract_strided_slice %20 {offsets = [0, 16], sizes = [8, 112], strides = [1, 1]} : vector<8x128xf32> to vector<8x112xf32>
    %23 = vector.extract_strided_slice %20 {offsets = [0, 0], sizes = [8, 16], strides = [1, 1]} : vector<8x128xf32> to vector<8x16xf32>
    %24 = tpu.concatenate %22, %23 in 1 : vector<8x112xf32>, vector<8x16xf32> -> vector<8x128xf32>
    %25 = arith.mulf %24, %7 : vector<8x128xf32>
    %26 = vector.extract_strided_slice %21 {offsets = [0, 32], sizes = [8, 96], strides = [1, 1]} : vector<8x128xf32> to vector<8x96xf32>
    %27 = vector.extract_strided_slice %21 {offsets = [0, 0], sizes = [8, 32], strides = [1, 1]} : vector<8x128xf32> to vector<8x32xf32>
    %28 = tpu.concatenate %26, %27 in 1 : vector<8x96xf32>, vector<8x32xf32> -> vector<8x128xf32>
    %29 = arith.mulf %20, %28 : vector<8x128xf32>
    %30 = arith.addf %25, %29 : vector<8x128xf32>
    %31 = vector.extract_strided_slice %20 {offsets = [0, 48], sizes = [8, 80], strides = [1, 1]} : vector<8x128xf32> to vector<8x80xf32>
    %32 = vector.extract_strided_slice %20 {offsets = [0, 0], sizes = [8, 48], strides = [1, 1]} : vector<8x128xf32> to vector<8x48xf32>
    %33 = tpu.concatenate %31, %32 in 1 : vector<8x80xf32>, vector<8x48xf32> -> vector<8x128xf32>
    %34 = math.tanh %30 : vector<8x128xf32>
    %35 = arith.mulf %33, %34 : vector<8x128xf32>
    %c8 = arith.constant 8 : index
    %c0_20 = arith.constant 0 : index
    %36 = vector.load %arg14[%c8, %c0_20] : memref<64x128xf32, #tpu.memory_space<vmem>>, vector<8x128xf32>
    %c0_21 = arith.constant 0 : index
    %c0_22 = arith.constant 0 : index
    %37 = vector.load %arg3[%c0_21, %c0_22] : memref<128x128xf32, #tpu.memory_space<vmem>>, vector<128x128xf32>
    %cst_23 = arith.constant dense<0.000000e+00> : vector<8x128xf32>
    %38 = tpu.matmul %35, %37, %cst_23 {dimension_numbers = #tpu.dot_dimension_numbers<[1], [0], [0], [1], [0, 0, 1, 1], [], []>} : vector<8x128xf32>, vector<128x128xf32>, vector<8x128xf32> -> vector<8x128xf32>
    %39 = arith.addf %36, %38 : vector<8x128xf32>
    %cst_24 = arith.constant 5.000000e-01 : f32
    %40 = vector.broadcast %cst_24 : f32 to vector<8x128xf32>
    %41 = arith.mulf %40, %39 : vector<8x128xf32>
    %42 = math.tanh %41 : vector<8x128xf32>
    %cst_25 = arith.constant 5.000000e-01 : f32
    %43 = vector.broadcast %cst_25 : f32 to vector<8x128xf32>
    %44 = arith.mulf %43, %42 : vector<8x128xf32>
    %cst_26 = arith.constant 5.000000e-01 : f32
    %45 = vector.broadcast %cst_26 : f32 to vector<8x128xf32>
    %46 = arith.addf %44, %45 : vector<8x128xf32>
    %47 = math.tanh %39 : vector<8x128xf32>
    %48 = vector.extract_strided_slice %46 {offsets = [0, 16], sizes = [8, 112], strides = [1, 1]} : vector<8x128xf32> to vector<8x112xf32>
    %49 = vector.extract_strided_slice %46 {offsets = [0, 0], sizes = [8, 16], strides = [1, 1]} : vector<8x128xf32> to vector<8x16xf32>
    %50 = tpu.concatenate %48, %49 in 1 : vector<8x112xf32>, vector<8x16xf32> -> vector<8x128xf32>
    %51 = arith.mulf %50, %30 : vector<8x128xf32>
    %52 = vector.extract_strided_slice %47 {offsets = [0, 32], sizes = [8, 96], strides = [1, 1]} : vector<8x128xf32> to vector<8x96xf32>
    %53 = vector.extract_strided_slice %47 {offsets = [0, 0], sizes = [8, 32], strides = [1, 1]} : vector<8x128xf32> to vector<8x32xf32>
    %54 = tpu.concatenate %52, %53 in 1 : vector<8x96xf32>, vector<8x32xf32> -> vector<8x128xf32>
    %55 = arith.mulf %46, %54 : vector<8x128xf32>
    %56 = arith.addf %51, %55 : vector<8x128xf32>
    %57 = vector.extract_strided_slice %46 {offsets = [0, 48], sizes = [8, 80], strides = [1, 1]} : vector<8x128xf32> to vector<8x80xf32>
    %58 = vector.extract_strided_slice %46 {offsets = [0, 0], sizes = [8, 48], strides = [1, 1]} : vector<8x128xf32> to vector<8x48xf32>
    %59 = tpu.concatenate %57, %58 in 1 : vector<8x80xf32>, vector<8x48xf32> -> vector<8x128xf32>
    %60 = math.tanh %56 : vector<8x128xf32>
    %61 = arith.mulf %59, %60 : vector<8x128xf32>
    %c0_27 = arith.constant 0 : index
    %c0_28 = arith.constant 0 : index
    %62 = vector.load %arg5[%c0_27, %c0_28] : memref<128x128xf32, #tpu.memory_space<vmem>>, vector<128x128xf32>
    %cst_29 = arith.constant dense<0.000000e+00> : vector<8x128xf32>
    %63 = tpu.matmul %35, %62, %cst_29 {dimension_numbers = #tpu.dot_dimension_numbers<[1], [0], [0], [1], [0, 0, 1, 1], [], []>} : vector<8x128xf32>, vector<128x128xf32>, vector<8x128xf32> -> vector<8x128xf32>
    %64 = vector.broadcast %8 : vector<1x128xf32> to vector<8x128xf32>
    %65 = arith.addf %64, %63 : vector<8x128xf32>
    %c0_30 = arith.constant 0 : index
    %c0_31 = arith.constant 0 : index
    %66 = vector.load %arg6[%c0_30, %c0_31] : memref<128x128xf32, #tpu.memory_space<vmem>>, vector<128x128xf32>
    %cst_32 = arith.constant dense<0.000000e+00> : vector<8x128xf32>
    %67 = tpu.matmul %7, %66, %cst_32 {dimension_numbers = #tpu.dot_dimension_numbers<[1], [0], [0], [1], [0, 0, 1, 1], [], []>} : vector<8x128xf32>, vector<128x128xf32>, vector<8x128xf32> -> vector<8x128xf32>
    %68 = arith.addf %65, %67 : vector<8x128xf32>
    %cst_33 = arith.constant 5.000000e-01 : f32
    %69 = vector.broadcast %cst_33 : f32 to vector<8x128xf32>
    %70 = arith.mulf %69, %68 : vector<8x128xf32>
    %71 = math.tanh %70 : vector<8x128xf32>
    %cst_34 = arith.constant 5.000000e-01 : f32
    %72 = vector.broadcast %cst_34 : f32 to vector<8x128xf32>
    %73 = arith.mulf %72, %71 : vector<8x128xf32>
    %cst_35 = arith.constant 5.000000e-01 : f32
    %74 = vector.broadcast %cst_35 : f32 to vector<8x128xf32>
    %75 = arith.addf %73, %74 : vector<8x128xf32>
    %76 = math.tanh %68 : vector<8x128xf32>
    %77 = vector.extract_strided_slice %75 {offsets = [0, 32], sizes = [8, 96], strides = [1, 1]} : vector<8x128xf32> to vector<8x96xf32>
    %78 = vector.extract_strided_slice %75 {offsets = [0, 0], sizes = [8, 32], strides = [1, 1]} : vector<8x128xf32> to vector<8x32xf32>
    %79 = tpu.concatenate %77, %78 in 1 : vector<8x96xf32>, vector<8x32xf32> -> vector<8x128xf32>
    %80 = arith.mulf %79, %7 : vector<8x128xf32>
    %81 = vector.extract_strided_slice %76 {offsets = [0, 64], sizes = [8, 64], strides = [1, 1]} : vector<8x128xf32> to vector<8x64xf32>
    %82 = vector.extract_strided_slice %76 {offsets = [0, 0], sizes = [8, 64], strides = [1, 1]} : vector<8x128xf32> to vector<8x64xf32>
    %83 = tpu.concatenate %81, %82 in 1 : vector<8x64xf32>, vector<8x64xf32> -> vector<8x128xf32>
    %84 = arith.mulf %75, %83 : vector<8x128xf32>
    %85 = arith.addf %80, %84 : vector<8x128xf32>
    %86 = vector.extract_strided_slice %75 {offsets = [0, 96], sizes = [8, 32], strides = [1, 1]} : vector<8x128xf32> to vector<8x32xf32>
    %87 = vector.extract_strided_slice %75 {offsets = [0, 0], sizes = [8, 96], strides = [1, 1]} : vector<8x128xf32> to vector<8x96xf32>
    %88 = tpu.concatenate %86, %87 in 1 : vector<8x32xf32>, vector<8x96xf32> -> vector<8x128xf32>
    %89 = math.tanh %85 : vector<8x128xf32>
    %90 = arith.mulf %88, %89 : vector<8x128xf32>
    %c16 = arith.constant 16 : index
    %c0_36 = arith.constant 0 : index
    %91 = vector.load %arg14[%c16, %c0_36] : memref<64x128xf32, #tpu.memory_space<vmem>>, vector<8x128xf32>
    %c0_37 = arith.constant 0 : index
    %c0_38 = arith.constant 0 : index
    %92 = vector.load %arg3[%c0_37, %c0_38] : memref<128x128xf32, #tpu.memory_space<vmem>>, vector<128x128xf32>
    %cst_39 = arith.constant dense<0.000000e+00> : vector<8x128xf32>
    %93 = tpu.matmul %61, %92, %cst_39 {dimension_numbers = #tpu.dot_dimension_numbers<[1], [0], [0], [1], [0, 0, 1, 1], [], []>} : vector<8x128xf32>, vector<128x128xf32>, vector<8x128xf32> -> vector<8x128xf32>
    %94 = arith.addf %91, %93 : vector<8x128xf32>
    %cst_40 = arith.constant 5.000000e-01 : f32
    %95 = vector.broadcast %cst_40 : f32 to vector<8x128xf32>
    %96 = arith.mulf %95, %94 : vector<8x128xf32>
    %97 = math.tanh %96 : vector<8x128xf32>
    %cst_41 = arith.constant 5.000000e-01 : f32
    %98 = vector.broadcast %cst_41 : f32 to vector<8x128xf32>
    %99 = arith.mulf %98, %97 : vector<8x128xf32>
    %cst_42 = arith.constant 5.000000e-01 : f32
    %100 = vector.broadcast %cst_42 : f32 to vector<8x128xf32>
    %101 = arith.addf %99, %100 : vector<8x128xf32>
    %102 = math.tanh %94 : vector<8x128xf32>
    %103 = vector.extract_strided_slice %101 {offsets = [0, 16], sizes = [8, 112], strides = [1, 1]} : vector<8x128xf32> to vector<8x112xf32>
    %104 = vector.extract_strided_slice %101 {offsets = [0, 0], sizes = [8, 16], strides = [1, 1]} : vector<8x128xf32> to vector<8x16xf32>
    %105 = tpu.concatenate %103, %104 in 1 : vector<8x112xf32>, vector<8x16xf32> -> vector<8x128xf32>
    %106 = arith.mulf %105, %56 : vector<8x128xf32>
    %107 = vector.extract_strided_slice %102 {offsets = [0, 32], sizes = [8, 96], strides = [1, 1]} : vector<8x128xf32> to vector<8x96xf32>
    %108 = vector.extract_strided_slice %102 {offsets = [0, 0], sizes = [8, 32], strides = [1, 1]} : vector<8x128xf32> to vector<8x32xf32>
    %109 = tpu.concatenate %107, %108 in 1 : vector<8x96xf32>, vector<8x32xf32> -> vector<8x128xf32>
    %110 = arith.mulf %101, %109 : vector<8x128xf32>
    %111 = arith.addf %106, %110 : vector<8x128xf32>
    %112 = vector.extract_strided_slice %101 {offsets = [0, 48], sizes = [8, 80], strides = [1, 1]} : vector<8x128xf32> to vector<8x80xf32>
    %113 = vector.extract_strided_slice %101 {offsets = [0, 0], sizes = [8, 48], strides = [1, 1]} : vector<8x128xf32> to vector<8x48xf32>
    %114 = tpu.concatenate %112, %113 in 1 : vector<8x80xf32>, vector<8x48xf32> -> vector<8x128xf32>
    %115 = math.tanh %111 : vector<8x128xf32>
    %116 = arith.mulf %114, %115 : vector<8x128xf32>
    %c0_43 = arith.constant 0 : index
    %c0_44 = arith.constant 0 : index
    %117 = vector.load %arg5[%c0_43, %c0_44] : memref<128x128xf32, #tpu.memory_space<vmem>>, vector<128x128xf32>
    %cst_45 = arith.constant dense<0.000000e+00> : vector<8x128xf32>
    %118 = tpu.matmul %61, %117, %cst_45 {dimension_numbers = #tpu.dot_dimension_numbers<[1], [0], [0], [1], [0, 0, 1, 1], [], []>} : vector<8x128xf32>, vector<128x128xf32>, vector<8x128xf32> -> vector<8x128xf32>
    %119 = vector.broadcast %8 : vector<1x128xf32> to vector<8x128xf32>
    %120 = arith.addf %119, %118 : vector<8x128xf32>
    %c0_46 = arith.constant 0 : index
    %c0_47 = arith.constant 0 : index
    %121 = vector.load %arg6[%c0_46, %c0_47] : memref<128x128xf32, #tpu.memory_space<vmem>>, vector<128x128xf32>
    %cst_48 = arith.constant dense<0.000000e+00> : vector<8x128xf32>
    %122 = tpu.matmul %90, %121, %cst_48 {dimension_numbers = #tpu.dot_dimension_numbers<[1], [0], [0], [1], [0, 0, 1, 1], [], []>} : vector<8x128xf32>, vector<128x128xf32>, vector<8x128xf32> -> vector<8x128xf32>
    %123 = arith.addf %120, %122 : vector<8x128xf32>
    %cst_49 = arith.constant 5.000000e-01 : f32
    %124 = vector.broadcast %cst_49 : f32 to vector<8x128xf32>
    %125 = arith.mulf %124, %123 : vector<8x128xf32>
    %126 = math.tanh %125 : vector<8x128xf32>
    %cst_50 = arith.constant 5.000000e-01 : f32
    %127 = vector.broadcast %cst_50 : f32 to vector<8x128xf32>
    %128 = arith.mulf %127, %126 : vector<8x128xf32>
    %cst_51 = arith.constant 5.000000e-01 : f32
    %129 = vector.broadcast %cst_51 : f32 to vector<8x128xf32>
    %130 = arith.addf %128, %129 : vector<8x128xf32>
    %131 = math.tanh %123 : vector<8x128xf32>
    %132 = vector.extract_strided_slice %130 {offsets = [0, 32], sizes = [8, 96], strides = [1, 1]} : vector<8x128xf32> to vector<8x96xf32>
    %133 = vector.extract_strided_slice %130 {offsets = [0, 0], sizes = [8, 32], strides = [1, 1]} : vector<8x128xf32> to vector<8x32xf32>
    %134 = tpu.concatenate %132, %133 in 1 : vector<8x96xf32>, vector<8x32xf32> -> vector<8x128xf32>
    %135 = arith.mulf %134, %85 : vector<8x128xf32>
    %136 = vector.extract_strided_slice %131 {offsets = [0, 64], sizes = [8, 64], strides = [1, 1]} : vector<8x128xf32> to vector<8x64xf32>
    %137 = vector.extract_strided_slice %131 {offsets = [0, 0], sizes = [8, 64], strides = [1, 1]} : vector<8x128xf32> to vector<8x64xf32>
    %138 = tpu.concatenate %136, %137 in 1 : vector<8x64xf32>, vector<8x64xf32> -> vector<8x128xf32>
    %139 = arith.mulf %130, %138 : vector<8x128xf32>
    %140 = arith.addf %135, %139 : vector<8x128xf32>
    %141 = vector.extract_strided_slice %130 {offsets = [0, 96], sizes = [8, 32], strides = [1, 1]} : vector<8x128xf32> to vector<8x32xf32>
    %142 = vector.extract_strided_slice %130 {offsets = [0, 0], sizes = [8, 96], strides = [1, 1]} : vector<8x128xf32> to vector<8x96xf32>
    %143 = tpu.concatenate %141, %142 in 1 : vector<8x32xf32>, vector<8x96xf32> -> vector<8x128xf32>
    %144 = math.tanh %140 : vector<8x128xf32>
    %145 = arith.mulf %143, %144 : vector<8x128xf32>
    %c0_52 = arith.constant 0 : index
    %c0_53 = arith.constant 0 : index
    %146 = vector.load %arg8[%c0_52, %c0_53] : memref<128x128xf32, #tpu.memory_space<vmem>>, vector<128x128xf32>
    %cst_54 = arith.constant dense<0.000000e+00> : vector<8x128xf32>
    %147 = tpu.matmul %90, %146, %cst_54 {dimension_numbers = #tpu.dot_dimension_numbers<[1], [0], [0], [1], [0, 0, 1, 1], [], []>} : vector<8x128xf32>, vector<128x128xf32>, vector<8x128xf32> -> vector<8x128xf32>
    %148 = vector.broadcast %9 : vector<1x128xf32> to vector<8x128xf32>
    %149 = arith.addf %148, %147 : vector<8x128xf32>
    %c0_55 = arith.constant 0 : index
    %c0_56 = arith.constant 0 : index
    %150 = vector.load %arg9[%c0_55, %c0_56] : memref<128x128xf32, #tpu.memory_space<vmem>>, vector<128x128xf32>
    %cst_57 = arith.constant dense<0.000000e+00> : vector<8x128xf32>
    %151 = tpu.matmul %7, %150, %cst_57 {dimension_numbers = #tpu.dot_dimension_numbers<[1], [0], [0], [1], [0, 0, 1, 1], [], []>} : vector<8x128xf32>, vector<128x128xf32>, vector<8x128xf32> -> vector<8x128xf32>
    %152 = arith.addf %149, %151 : vector<8x128xf32>
    %cst_58 = arith.constant 5.000000e-01 : f32
    %153 = vector.broadcast %cst_58 : f32 to vector<8x128xf32>
    %154 = arith.mulf %153, %152 : vector<8x128xf32>
    %155 = math.tanh %154 : vector<8x128xf32>
    %cst_59 = arith.constant 5.000000e-01 : f32
    %156 = vector.broadcast %cst_59 : f32 to vector<8x128xf32>
    %157 = arith.mulf %156, %155 : vector<8x128xf32>
    %cst_60 = arith.constant 5.000000e-01 : f32
    %158 = vector.broadcast %cst_60 : f32 to vector<8x128xf32>
    %159 = arith.addf %157, %158 : vector<8x128xf32>
    %160 = math.tanh %152 : vector<8x128xf32>
    %161 = vector.extract_strided_slice %159 {offsets = [0, 32], sizes = [8, 96], strides = [1, 1]} : vector<8x128xf32> to vector<8x96xf32>
    %162 = vector.extract_strided_slice %159 {offsets = [0, 0], sizes = [8, 32], strides = [1, 1]} : vector<8x128xf32> to vector<8x32xf32>
    %163 = tpu.concatenate %161, %162 in 1 : vector<8x96xf32>, vector<8x32xf32> -> vector<8x128xf32>
    %164 = arith.mulf %163, %7 : vector<8x128xf32>
    %165 = vector.extract_strided_slice %160 {offsets = [0, 64], sizes = [8, 64], strides = [1, 1]} : vector<8x128xf32> to vector<8x64xf32>
    %166 = vector.extract_strided_slice %160 {offsets = [0, 0], sizes = [8, 64], strides = [1, 1]} : vector<8x128xf32> to vector<8x64xf32>
    %167 = tpu.concatenate %165, %166 in 1 : vector<8x64xf32>, vector<8x64xf32> -> vector<8x128xf32>
    %168 = arith.mulf %159, %167 : vector<8x128xf32>
    %169 = arith.addf %164, %168 : vector<8x128xf32>
    %170 = vector.extract_strided_slice %159 {offsets = [0, 96], sizes = [8, 32], strides = [1, 1]} : vector<8x128xf32> to vector<8x32xf32>
    %171 = vector.extract_strided_slice %159 {offsets = [0, 0], sizes = [8, 96], strides = [1, 1]} : vector<8x128xf32> to vector<8x96xf32>
    %172 = tpu.concatenate %170, %171 in 1 : vector<8x32xf32>, vector<8x96xf32> -> vector<8x128xf32>
    %173 = math.tanh %169 : vector<8x128xf32>
    %174 = arith.mulf %172, %173 : vector<8x128xf32>
    %c24 = arith.constant 24 : index
    %c0_61 = arith.constant 0 : index
    %175 = vector.load %arg14[%c24, %c0_61] : memref<64x128xf32, #tpu.memory_space<vmem>>, vector<8x128xf32>
    %c0_62 = arith.constant 0 : index
    %c0_63 = arith.constant 0 : index
    %176 = vector.load %arg3[%c0_62, %c0_63] : memref<128x128xf32, #tpu.memory_space<vmem>>, vector<128x128xf32>
    %cst_64 = arith.constant dense<0.000000e+00> : vector<8x128xf32>
    %177 = tpu.matmul %116, %176, %cst_64 {dimension_numbers = #tpu.dot_dimension_numbers<[1], [0], [0], [1], [0, 0, 1, 1], [], []>} : vector<8x128xf32>, vector<128x128xf32>, vector<8x128xf32> -> vector<8x128xf32>
    %178 = arith.addf %175, %177 : vector<8x128xf32>
    %cst_65 = arith.constant 5.000000e-01 : f32
    %179 = vector.broadcast %cst_65 : f32 to vector<8x128xf32>
    %180 = arith.mulf %179, %178 : vector<8x128xf32>
    %181 = math.tanh %180 : vector<8x128xf32>
    %cst_66 = arith.constant 5.000000e-01 : f32
    %182 = vector.broadcast %cst_66 : f32 to vector<8x128xf32>
    %183 = arith.mulf %182, %181 : vector<8x128xf32>
    %cst_67 = arith.constant 5.000000e-01 : f32
    %184 = vector.broadcast %cst_67 : f32 to vector<8x128xf32>
    %185 = arith.addf %183, %184 : vector<8x128xf32>
    %186 = math.tanh %178 : vector<8x128xf32>
    %187 = vector.extract_strided_slice %185 {offsets = [0, 16], sizes = [8, 112], strides = [1, 1]} : vector<8x128xf32> to vector<8x112xf32>
    %188 = vector.extract_strided_slice %185 {offsets = [0, 0], sizes = [8, 16], strides = [1, 1]} : vector<8x128xf32> to vector<8x16xf32>
    %189 = tpu.concatenate %187, %188 in 1 : vector<8x112xf32>, vector<8x16xf32> -> vector<8x128xf32>
    %190 = arith.mulf %189, %111 : vector<8x128xf32>
    %191 = vector.extract_strided_slice %186 {offsets = [0, 32], sizes = [8, 96], strides = [1, 1]} : vector<8x128xf32> to vector<8x96xf32>
    %192 = vector.extract_strided_slice %186 {offsets = [0, 0], sizes = [8, 32], strides = [1, 1]} : vector<8x128xf32> to vector<8x32xf32>
    %193 = tpu.concatenate %191, %192 in 1 : vector<8x96xf32>, vector<8x32xf32> -> vector<8x128xf32>
    %194 = arith.mulf %185, %193 : vector<8x128xf32>
    %195 = arith.addf %190, %194 : vector<8x128xf32>
    %196 = vector.extract_strided_slice %185 {offsets = [0, 48], sizes = [8, 80], strides = [1, 1]} : vector<8x128xf32> to vector<8x80xf32>
    %197 = vector.extract_strided_slice %185 {offsets = [0, 0], sizes = [8, 48], strides = [1, 1]} : vector<8x128xf32> to vector<8x48xf32>
    %198 = tpu.concatenate %196, %197 in 1 : vector<8x80xf32>, vector<8x48xf32> -> vector<8x128xf32>
    %199 = math.tanh %195 : vector<8x128xf32>
    %200 = arith.mulf %198, %199 : vector<8x128xf32>
    %c0_68 = arith.constant 0 : index
    %c0_69 = arith.constant 0 : index
    %201 = vector.load %arg5[%c0_68, %c0_69] : memref<128x128xf32, #tpu.memory_space<vmem>>, vector<128x128xf32>
    %cst_70 = arith.constant dense<0.000000e+00> : vector<8x128xf32>
    %202 = tpu.matmul %116, %201, %cst_70 {dimension_numbers = #tpu.dot_dimension_numbers<[1], [0], [0], [1], [0, 0, 1, 1], [], []>} : vector<8x128xf32>, vector<128x128xf32>, vector<8x128xf32> -> vector<8x128xf32>
    %203 = vector.broadcast %8 : vector<1x128xf32> to vector<8x128xf32>
    %204 = arith.addf %203, %202 : vector<8x128xf32>
    %c0_71 = arith.constant 0 : index
    %c0_72 = arith.constant 0 : index
    %205 = vector.load %arg6[%c0_71, %c0_72] : memref<128x128xf32, #tpu.memory_space<vmem>>, vector<128x128xf32>
    %cst_73 = arith.constant dense<0.000000e+00> : vector<8x128xf32>
    %206 = tpu.matmul %145, %205, %cst_73 {dimension_numbers = #tpu.dot_dimension_numbers<[1], [0], [0], [1], [0, 0, 1, 1], [], []>} : vector<8x128xf32>, vector<128x128xf32>, vector<8x128xf32> -> vector<8x128xf32>
    %207 = arith.addf %204, %206 : vector<8x128xf32>
    %cst_74 = arith.constant 5.000000e-01 : f32
    %208 = vector.broadcast %cst_74 : f32 to vector<8x128xf32>
    %209 = arith.mulf %208, %207 : vector<8x128xf32>
    %210 = math.tanh %209 : vector<8x128xf32>
    %cst_75 = arith.constant 5.000000e-01 : f32
    %211 = vector.broadcast %cst_75 : f32 to vector<8x128xf32>
    %212 = arith.mulf %211, %210 : vector<8x128xf32>
    %cst_76 = arith.constant 5.000000e-01 : f32
    %213 = vector.broadcast %cst_76 : f32 to vector<8x128xf32>
    %214 = arith.addf %212, %213 : vector<8x128xf32>
    %215 = math.tanh %207 : vector<8x128xf32>
    %216 = vector.extract_strided_slice %214 {offsets = [0, 32], sizes = [8, 96], strides = [1, 1]} : vector<8x128xf32> to vector<8x96xf32>
    %217 = vector.extract_strided_slice %214 {offsets = [0, 0], sizes = [8, 32], strides = [1, 1]} : vector<8x128xf32> to vector<8x32xf32>
    %218 = tpu.concatenate %216, %217 in 1 : vector<8x96xf32>, vector<8x32xf32> -> vector<8x128xf32>
    %219 = arith.mulf %218, %140 : vector<8x128xf32>
    %220 = vector.extract_strided_slice %215 {offsets = [0, 64], sizes = [8, 64], strides = [1, 1]} : vector<8x128xf32> to vector<8x64xf32>
    %221 = vector.extract_strided_slice %215 {offsets = [0, 0], sizes = [8, 64], strides = [1, 1]} : vector<8x128xf32> to vector<8x64xf32>
    %222 = tpu.concatenate %220, %221 in 1 : vector<8x64xf32>, vector<8x64xf32> -> vector<8x128xf32>
    %223 = arith.mulf %214, %222 : vector<8x128xf32>
    %224 = arith.addf %219, %223 : vector<8x128xf32>
    %225 = vector.extract_strided_slice %214 {offsets = [0, 96], sizes = [8, 32], strides = [1, 1]} : vector<8x128xf32> to vector<8x32xf32>
    %226 = vector.extract_strided_slice %214 {offsets = [0, 0], sizes = [8, 96], strides = [1, 1]} : vector<8x128xf32> to vector<8x96xf32>
    %227 = tpu.concatenate %225, %226 in 1 : vector<8x32xf32>, vector<8x96xf32> -> vector<8x128xf32>
    %228 = math.tanh %224 : vector<8x128xf32>
    %229 = arith.mulf %227, %228 : vector<8x128xf32>
    %c0_77 = arith.constant 0 : index
    %c0_78 = arith.constant 0 : index
    %230 = vector.load %arg8[%c0_77, %c0_78] : memref<128x128xf32, #tpu.memory_space<vmem>>, vector<128x128xf32>
    %cst_79 = arith.constant dense<0.000000e+00> : vector<8x128xf32>
    %231 = tpu.matmul %145, %230, %cst_79 {dimension_numbers = #tpu.dot_dimension_numbers<[1], [0], [0], [1], [0, 0, 1, 1], [], []>} : vector<8x128xf32>, vector<128x128xf32>, vector<8x128xf32> -> vector<8x128xf32>
    %232 = vector.broadcast %9 : vector<1x128xf32> to vector<8x128xf32>
    %233 = arith.addf %232, %231 : vector<8x128xf32>
    %c0_80 = arith.constant 0 : index
    %c0_81 = arith.constant 0 : index
    %234 = vector.load %arg9[%c0_80, %c0_81] : memref<128x128xf32, #tpu.memory_space<vmem>>, vector<128x128xf32>
    %cst_82 = arith.constant dense<0.000000e+00> : vector<8x128xf32>
    %235 = tpu.matmul %174, %234, %cst_82 {dimension_numbers = #tpu.dot_dimension_numbers<[1], [0], [0], [1], [0, 0, 1, 1], [], []>} : vector<8x128xf32>, vector<128x128xf32>, vector<8x128xf32> -> vector<8x128xf32>
    %236 = arith.addf %233, %235 : vector<8x128xf32>
    %cst_83 = arith.constant 5.000000e-01 : f32
    %237 = vector.broadcast %cst_83 : f32 to vector<8x128xf32>
    %238 = arith.mulf %237, %236 : vector<8x128xf32>
    %239 = math.tanh %238 : vector<8x128xf32>
    %cst_84 = arith.constant 5.000000e-01 : f32
    %240 = vector.broadcast %cst_84 : f32 to vector<8x128xf32>
    %241 = arith.mulf %240, %239 : vector<8x128xf32>
    %cst_85 = arith.constant 5.000000e-01 : f32
    %242 = vector.broadcast %cst_85 : f32 to vector<8x128xf32>
    %243 = arith.addf %241, %242 : vector<8x128xf32>
    %244 = math.tanh %236 : vector<8x128xf32>
    %245 = vector.extract_strided_slice %243 {offsets = [0, 32], sizes = [8, 96], strides = [1, 1]} : vector<8x128xf32> to vector<8x96xf32>
    %246 = vector.extract_strided_slice %243 {offsets = [0, 0], sizes = [8, 32], strides = [1, 1]} : vector<8x128xf32> to vector<8x32xf32>
    %247 = tpu.concatenate %245, %246 in 1 : vector<8x96xf32>, vector<8x32xf32> -> vector<8x128xf32>
    %248 = arith.mulf %247, %169 : vector<8x128xf32>
    %249 = vector.extract_strided_slice %244 {offsets = [0, 64], sizes = [8, 64], strides = [1, 1]} : vector<8x128xf32> to vector<8x64xf32>
    %250 = vector.extract_strided_slice %244 {offsets = [0, 0], sizes = [8, 64], strides = [1, 1]} : vector<8x128xf32> to vector<8x64xf32>
    %251 = tpu.concatenate %249, %250 in 1 : vector<8x64xf32>, vector<8x64xf32> -> vector<8x128xf32>
    %252 = arith.mulf %243, %251 : vector<8x128xf32>
    %253 = arith.addf %248, %252 : vector<8x128xf32>
    %254 = vector.extract_strided_slice %243 {offsets = [0, 96], sizes = [8, 32], strides = [1, 1]} : vector<8x128xf32> to vector<8x32xf32>
    %255 = vector.extract_strided_slice %243 {offsets = [0, 0], sizes = [8, 96], strides = [1, 1]} : vector<8x128xf32> to vector<8x96xf32>
    %256 = tpu.concatenate %254, %255 in 1 : vector<8x32xf32>, vector<8x96xf32> -> vector<8x128xf32>
    %257 = math.tanh %253 : vector<8x128xf32>
    %258 = arith.mulf %256, %257 : vector<8x128xf32>
    %c32 = arith.constant 32 : index
    %c0_86 = arith.constant 0 : index
    %259 = vector.load %arg14[%c32, %c0_86] : memref<64x128xf32, #tpu.memory_space<vmem>>, vector<8x128xf32>
    %c0_87 = arith.constant 0 : index
    %c0_88 = arith.constant 0 : index
    %260 = vector.load %arg3[%c0_87, %c0_88] : memref<128x128xf32, #tpu.memory_space<vmem>>, vector<128x128xf32>
    %cst_89 = arith.constant dense<0.000000e+00> : vector<8x128xf32>
    %261 = tpu.matmul %200, %260, %cst_89 {dimension_numbers = #tpu.dot_dimension_numbers<[1], [0], [0], [1], [0, 0, 1, 1], [], []>} : vector<8x128xf32>, vector<128x128xf32>, vector<8x128xf32> -> vector<8x128xf32>
    %262 = arith.addf %259, %261 : vector<8x128xf32>
    %cst_90 = arith.constant 5.000000e-01 : f32
    %263 = vector.broadcast %cst_90 : f32 to vector<8x128xf32>
    %264 = arith.mulf %263, %262 : vector<8x128xf32>
    %265 = math.tanh %264 : vector<8x128xf32>
    %cst_91 = arith.constant 5.000000e-01 : f32
    %266 = vector.broadcast %cst_91 : f32 to vector<8x128xf32>
    %267 = arith.mulf %266, %265 : vector<8x128xf32>
    %cst_92 = arith.constant 5.000000e-01 : f32
    %268 = vector.broadcast %cst_92 : f32 to vector<8x128xf32>
    %269 = arith.addf %267, %268 : vector<8x128xf32>
    %270 = math.tanh %262 : vector<8x128xf32>
    %271 = vector.extract_strided_slice %269 {offsets = [0, 16], sizes = [8, 112], strides = [1, 1]} : vector<8x128xf32> to vector<8x112xf32>
    %272 = vector.extract_strided_slice %269 {offsets = [0, 0], sizes = [8, 16], strides = [1, 1]} : vector<8x128xf32> to vector<8x16xf32>
    %273 = tpu.concatenate %271, %272 in 1 : vector<8x112xf32>, vector<8x16xf32> -> vector<8x128xf32>
    %274 = arith.mulf %273, %195 : vector<8x128xf32>
    %275 = vector.extract_strided_slice %270 {offsets = [0, 32], sizes = [8, 96], strides = [1, 1]} : vector<8x128xf32> to vector<8x96xf32>
    %276 = vector.extract_strided_slice %270 {offsets = [0, 0], sizes = [8, 32], strides = [1, 1]} : vector<8x128xf32> to vector<8x32xf32>
    %277 = tpu.concatenate %275, %276 in 1 : vector<8x96xf32>, vector<8x32xf32> -> vector<8x128xf32>
    %278 = arith.mulf %269, %277 : vector<8x128xf32>
    %279 = arith.addf %274, %278 : vector<8x128xf32>
    %280 = vector.extract_strided_slice %269 {offsets = [0, 48], sizes = [8, 80], strides = [1, 1]} : vector<8x128xf32> to vector<8x80xf32>
    %281 = vector.extract_strided_slice %269 {offsets = [0, 0], sizes = [8, 48], strides = [1, 1]} : vector<8x128xf32> to vector<8x48xf32>
    %282 = tpu.concatenate %280, %281 in 1 : vector<8x80xf32>, vector<8x48xf32> -> vector<8x128xf32>
    %283 = math.tanh %279 : vector<8x128xf32>
    %284 = arith.mulf %282, %283 : vector<8x128xf32>
    %c0_93 = arith.constant 0 : index
    %c0_94 = arith.constant 0 : index
    %285 = vector.load %arg5[%c0_93, %c0_94] : memref<128x128xf32, #tpu.memory_space<vmem>>, vector<128x128xf32>
    %cst_95 = arith.constant dense<0.000000e+00> : vector<8x128xf32>
    %286 = tpu.matmul %200, %285, %cst_95 {dimension_numbers = #tpu.dot_dimension_numbers<[1], [0], [0], [1], [0, 0, 1, 1], [], []>} : vector<8x128xf32>, vector<128x128xf32>, vector<8x128xf32> -> vector<8x128xf32>
    %287 = vector.broadcast %8 : vector<1x128xf32> to vector<8x128xf32>
    %288 = arith.addf %287, %286 : vector<8x128xf32>
    %c0_96 = arith.constant 0 : index
    %c0_97 = arith.constant 0 : index
    %289 = vector.load %arg6[%c0_96, %c0_97] : memref<128x128xf32, #tpu.memory_space<vmem>>, vector<128x128xf32>
    %cst_98 = arith.constant dense<0.000000e+00> : vector<8x128xf32>
    %290 = tpu.matmul %229, %289, %cst_98 {dimension_numbers = #tpu.dot_dimension_numbers<[1], [0], [0], [1], [0, 0, 1, 1], [], []>} : vector<8x128xf32>, vector<128x128xf32>, vector<8x128xf32> -> vector<8x128xf32>
    %291 = arith.addf %288, %290 : vector<8x128xf32>
    %cst_99 = arith.constant 5.000000e-01 : f32
    %292 = vector.broadcast %cst_99 : f32 to vector<8x128xf32>
    %293 = arith.mulf %292, %291 : vector<8x128xf32>
    %294 = math.tanh %293 : vector<8x128xf32>
    %cst_100 = arith.constant 5.000000e-01 : f32
    %295 = vector.broadcast %cst_100 : f32 to vector<8x128xf32>
    %296 = arith.mulf %295, %294 : vector<8x128xf32>
    %cst_101 = arith.constant 5.000000e-01 : f32
    %297 = vector.broadcast %cst_101 : f32 to vector<8x128xf32>
    %298 = arith.addf %296, %297 : vector<8x128xf32>
    %299 = math.tanh %291 : vector<8x128xf32>
    %300 = vector.extract_strided_slice %298 {offsets = [0, 32], sizes = [8, 96], strides = [1, 1]} : vector<8x128xf32> to vector<8x96xf32>
    %301 = vector.extract_strided_slice %298 {offsets = [0, 0], sizes = [8, 32], strides = [1, 1]} : vector<8x128xf32> to vector<8x32xf32>
    %302 = tpu.concatenate %300, %301 in 1 : vector<8x96xf32>, vector<8x32xf32> -> vector<8x128xf32>
    %303 = arith.mulf %302, %224 : vector<8x128xf32>
    %304 = vector.extract_strided_slice %299 {offsets = [0, 64], sizes = [8, 64], strides = [1, 1]} : vector<8x128xf32> to vector<8x64xf32>
    %305 = vector.extract_strided_slice %299 {offsets = [0, 0], sizes = [8, 64], strides = [1, 1]} : vector<8x128xf32> to vector<8x64xf32>
    %306 = tpu.concatenate %304, %305 in 1 : vector<8x64xf32>, vector<8x64xf32> -> vector<8x128xf32>
    %307 = arith.mulf %298, %306 : vector<8x128xf32>
    %308 = arith.addf %303, %307 : vector<8x128xf32>
    %309 = vector.extract_strided_slice %298 {offsets = [0, 96], sizes = [8, 32], strides = [1, 1]} : vector<8x128xf32> to vector<8x32xf32>
    %310 = vector.extract_strided_slice %298 {offsets = [0, 0], sizes = [8, 96], strides = [1, 1]} : vector<8x128xf32> to vector<8x96xf32>
    %311 = tpu.concatenate %309, %310 in 1 : vector<8x32xf32>, vector<8x96xf32> -> vector<8x128xf32>
    %312 = math.tanh %308 : vector<8x128xf32>
    %313 = arith.mulf %311, %312 : vector<8x128xf32>
    %c0_102 = arith.constant 0 : index
    %c0_103 = arith.constant 0 : index
    %314 = vector.load %arg8[%c0_102, %c0_103] : memref<128x128xf32, #tpu.memory_space<vmem>>, vector<128x128xf32>
    %cst_104 = arith.constant dense<0.000000e+00> : vector<8x128xf32>
    %315 = tpu.matmul %229, %314, %cst_104 {dimension_numbers = #tpu.dot_dimension_numbers<[1], [0], [0], [1], [0, 0, 1, 1], [], []>} : vector<8x128xf32>, vector<128x128xf32>, vector<8x128xf32> -> vector<8x128xf32>
    %316 = vector.broadcast %9 : vector<1x128xf32> to vector<8x128xf32>
    %317 = arith.addf %316, %315 : vector<8x128xf32>
    %c0_105 = arith.constant 0 : index
    %c0_106 = arith.constant 0 : index
    %318 = vector.load %arg9[%c0_105, %c0_106] : memref<128x128xf32, #tpu.memory_space<vmem>>, vector<128x128xf32>
    %cst_107 = arith.constant dense<0.000000e+00> : vector<8x128xf32>
    %319 = tpu.matmul %258, %318, %cst_107 {dimension_numbers = #tpu.dot_dimension_numbers<[1], [0], [0], [1], [0, 0, 1, 1], [], []>} : vector<8x128xf32>, vector<128x128xf32>, vector<8x128xf32> -> vector<8x128xf32>
    %320 = arith.addf %317, %319 : vector<8x128xf32>
    %cst_108 = arith.constant 5.000000e-01 : f32
    %321 = vector.broadcast %cst_108 : f32 to vector<8x128xf32>
    %322 = arith.mulf %321, %320 : vector<8x128xf32>
    %323 = math.tanh %322 : vector<8x128xf32>
    %cst_109 = arith.constant 5.000000e-01 : f32
    %324 = vector.broadcast %cst_109 : f32 to vector<8x128xf32>
    %325 = arith.mulf %324, %323 : vector<8x128xf32>
    %cst_110 = arith.constant 5.000000e-01 : f32
    %326 = vector.broadcast %cst_110 : f32 to vector<8x128xf32>
    %327 = arith.addf %325, %326 : vector<8x128xf32>
    %328 = math.tanh %320 : vector<8x128xf32>
    %329 = vector.extract_strided_slice %327 {offsets = [0, 32], sizes = [8, 96], strides = [1, 1]} : vector<8x128xf32> to vector<8x96xf32>
    %330 = vector.extract_strided_slice %327 {offsets = [0, 0], sizes = [8, 32], strides = [1, 1]} : vector<8x128xf32> to vector<8x32xf32>
    %331 = tpu.concatenate %329, %330 in 1 : vector<8x96xf32>, vector<8x32xf32> -> vector<8x128xf32>
    %332 = arith.mulf %331, %253 : vector<8x128xf32>
    %333 = vector.extract_strided_slice %328 {offsets = [0, 64], sizes = [8, 64], strides = [1, 1]} : vector<8x128xf32> to vector<8x64xf32>
    %334 = vector.extract_strided_slice %328 {offsets = [0, 0], sizes = [8, 64], strides = [1, 1]} : vector<8x128xf32> to vector<8x64xf32>
    %335 = tpu.concatenate %333, %334 in 1 : vector<8x64xf32>, vector<8x64xf32> -> vector<8x128xf32>
    %336 = arith.mulf %327, %335 : vector<8x128xf32>
    %337 = arith.addf %332, %336 : vector<8x128xf32>
    %338 = vector.extract_strided_slice %327 {offsets = [0, 96], sizes = [8, 32], strides = [1, 1]} : vector<8x128xf32> to vector<8x32xf32>
    %339 = vector.extract_strided_slice %327 {offsets = [0, 0], sizes = [8, 96], strides = [1, 1]} : vector<8x128xf32> to vector<8x96xf32>
    %340 = tpu.concatenate %338, %339 in 1 : vector<8x32xf32>, vector<8x96xf32> -> vector<8x128xf32>
    %341 = math.tanh %337 : vector<8x128xf32>
    %342 = arith.mulf %340, %341 : vector<8x128xf32>
    %c40 = arith.constant 40 : index
    %c0_111 = arith.constant 0 : index
    %343 = vector.load %arg14[%c40, %c0_111] : memref<64x128xf32, #tpu.memory_space<vmem>>, vector<8x128xf32>
    %c0_112 = arith.constant 0 : index
    %c0_113 = arith.constant 0 : index
    %344 = vector.load %arg3[%c0_112, %c0_113] : memref<128x128xf32, #tpu.memory_space<vmem>>, vector<128x128xf32>
    %cst_114 = arith.constant dense<0.000000e+00> : vector<8x128xf32>
    %345 = tpu.matmul %284, %344, %cst_114 {dimension_numbers = #tpu.dot_dimension_numbers<[1], [0], [0], [1], [0, 0, 1, 1], [], []>} : vector<8x128xf32>, vector<128x128xf32>, vector<8x128xf32> -> vector<8x128xf32>
    %346 = arith.addf %343, %345 : vector<8x128xf32>
    %cst_115 = arith.constant 5.000000e-01 : f32
    %347 = vector.broadcast %cst_115 : f32 to vector<8x128xf32>
    %348 = arith.mulf %347, %346 : vector<8x128xf32>
    %349 = math.tanh %348 : vector<8x128xf32>
    %cst_116 = arith.constant 5.000000e-01 : f32
    %350 = vector.broadcast %cst_116 : f32 to vector<8x128xf32>
    %351 = arith.mulf %350, %349 : vector<8x128xf32>
    %cst_117 = arith.constant 5.000000e-01 : f32
    %352 = vector.broadcast %cst_117 : f32 to vector<8x128xf32>
    %353 = arith.addf %351, %352 : vector<8x128xf32>
    %354 = math.tanh %346 : vector<8x128xf32>
    %355 = vector.extract_strided_slice %353 {offsets = [0, 16], sizes = [8, 112], strides = [1, 1]} : vector<8x128xf32> to vector<8x112xf32>
    %356 = vector.extract_strided_slice %353 {offsets = [0, 0], sizes = [8, 16], strides = [1, 1]} : vector<8x128xf32> to vector<8x16xf32>
    %357 = tpu.concatenate %355, %356 in 1 : vector<8x112xf32>, vector<8x16xf32> -> vector<8x128xf32>
    %358 = arith.mulf %357, %279 : vector<8x128xf32>
    %359 = vector.extract_strided_slice %354 {offsets = [0, 32], sizes = [8, 96], strides = [1, 1]} : vector<8x128xf32> to vector<8x96xf32>
    %360 = vector.extract_strided_slice %354 {offsets = [0, 0], sizes = [8, 32], strides = [1, 1]} : vector<8x128xf32> to vector<8x32xf32>
    %361 = tpu.concatenate %359, %360 in 1 : vector<8x96xf32>, vector<8x32xf32> -> vector<8x128xf32>
    %362 = arith.mulf %353, %361 : vector<8x128xf32>
    %363 = arith.addf %358, %362 : vector<8x128xf32>
    %364 = vector.extract_strided_slice %353 {offsets = [0, 48], sizes = [8, 80], strides = [1, 1]} : vector<8x128xf32> to vector<8x80xf32>
    %365 = vector.extract_strided_slice %353 {offsets = [0, 0], sizes = [8, 48], strides = [1, 1]} : vector<8x128xf32> to vector<8x48xf32>
    %366 = tpu.concatenate %364, %365 in 1 : vector<8x80xf32>, vector<8x48xf32> -> vector<8x128xf32>
    %367 = math.tanh %363 : vector<8x128xf32>
    %368 = arith.mulf %366, %367 : vector<8x128xf32>
    %c0_118 = arith.constant 0 : index
    %c0_119 = arith.constant 0 : index
    %369 = vector.load %arg5[%c0_118, %c0_119] : memref<128x128xf32, #tpu.memory_space<vmem>>, vector<128x128xf32>
    %cst_120 = arith.constant dense<0.000000e+00> : vector<8x128xf32>
    %370 = tpu.matmul %284, %369, %cst_120 {dimension_numbers = #tpu.dot_dimension_numbers<[1], [0], [0], [1], [0, 0, 1, 1], [], []>} : vector<8x128xf32>, vector<128x128xf32>, vector<8x128xf32> -> vector<8x128xf32>
    %371 = vector.broadcast %8 : vector<1x128xf32> to vector<8x128xf32>
    %372 = arith.addf %371, %370 : vector<8x128xf32>
    %c0_121 = arith.constant 0 : index
    %c0_122 = arith.constant 0 : index
    %373 = vector.load %arg6[%c0_121, %c0_122] : memref<128x128xf32, #tpu.memory_space<vmem>>, vector<128x128xf32>
    %cst_123 = arith.constant dense<0.000000e+00> : vector<8x128xf32>
    %374 = tpu.matmul %313, %373, %cst_123 {dimension_numbers = #tpu.dot_dimension_numbers<[1], [0], [0], [1], [0, 0, 1, 1], [], []>} : vector<8x128xf32>, vector<128x128xf32>, vector<8x128xf32> -> vector<8x128xf32>
    %375 = arith.addf %372, %374 : vector<8x128xf32>
    %cst_124 = arith.constant 5.000000e-01 : f32
    %376 = vector.broadcast %cst_124 : f32 to vector<8x128xf32>
    %377 = arith.mulf %376, %375 : vector<8x128xf32>
    %378 = math.tanh %377 : vector<8x128xf32>
    %cst_125 = arith.constant 5.000000e-01 : f32
    %379 = vector.broadcast %cst_125 : f32 to vector<8x128xf32>
    %380 = arith.mulf %379, %378 : vector<8x128xf32>
    %cst_126 = arith.constant 5.000000e-01 : f32
    %381 = vector.broadcast %cst_126 : f32 to vector<8x128xf32>
    %382 = arith.addf %380, %381 : vector<8x128xf32>
    %383 = math.tanh %375 : vector<8x128xf32>
    %384 = vector.extract_strided_slice %382 {offsets = [0, 32], sizes = [8, 96], strides = [1, 1]} : vector<8x128xf32> to vector<8x96xf32>
    %385 = vector.extract_strided_slice %382 {offsets = [0, 0], sizes = [8, 32], strides = [1, 1]} : vector<8x128xf32> to vector<8x32xf32>
    %386 = tpu.concatenate %384, %385 in 1 : vector<8x96xf32>, vector<8x32xf32> -> vector<8x128xf32>
    %387 = arith.mulf %386, %308 : vector<8x128xf32>
    %388 = vector.extract_strided_slice %383 {offsets = [0, 64], sizes = [8, 64], strides = [1, 1]} : vector<8x128xf32> to vector<8x64xf32>
    %389 = vector.extract_strided_slice %383 {offsets = [0, 0], sizes = [8, 64], strides = [1, 1]} : vector<8x128xf32> to vector<8x64xf32>
    %390 = tpu.concatenate %388, %389 in 1 : vector<8x64xf32>, vector<8x64xf32> -> vector<8x128xf32>
    %391 = arith.mulf %382, %390 : vector<8x128xf32>
    %392 = arith.addf %387, %391 : vector<8x128xf32>
    %393 = vector.extract_strided_slice %382 {offsets = [0, 96], sizes = [8, 32], strides = [1, 1]} : vector<8x128xf32> to vector<8x32xf32>
    %394 = vector.extract_strided_slice %382 {offsets = [0, 0], sizes = [8, 96], strides = [1, 1]} : vector<8x128xf32> to vector<8x96xf32>
    %395 = tpu.concatenate %393, %394 in 1 : vector<8x32xf32>, vector<8x96xf32> -> vector<8x128xf32>
    %396 = math.tanh %392 : vector<8x128xf32>
    %397 = arith.mulf %395, %396 : vector<8x128xf32>
    %c0_127 = arith.constant 0 : index
    %c0_128 = arith.constant 0 : index
    %398 = vector.load %arg8[%c0_127, %c0_128] : memref<128x128xf32, #tpu.memory_space<vmem>>, vector<128x128xf32>
    %cst_129 = arith.constant dense<0.000000e+00> : vector<8x128xf32>
    %399 = tpu.matmul %313, %398, %cst_129 {dimension_numbers = #tpu.dot_dimension_numbers<[1], [0], [0], [1], [0, 0, 1, 1], [], []>} : vector<8x128xf32>, vector<128x128xf32>, vector<8x128xf32> -> vector<8x128xf32>
    %400 = vector.broadcast %9 : vector<1x128xf32> to vector<8x128xf32>
    %401 = arith.addf %400, %399 : vector<8x128xf32>
    %c0_130 = arith.constant 0 : index
    %c0_131 = arith.constant 0 : index
    %402 = vector.load %arg9[%c0_130, %c0_131] : memref<128x128xf32, #tpu.memory_space<vmem>>, vector<128x128xf32>
    %cst_132 = arith.constant dense<0.000000e+00> : vector<8x128xf32>
    %403 = tpu.matmul %342, %402, %cst_132 {dimension_numbers = #tpu.dot_dimension_numbers<[1], [0], [0], [1], [0, 0, 1, 1], [], []>} : vector<8x128xf32>, vector<128x128xf32>, vector<8x128xf32> -> vector<8x128xf32>
    %404 = arith.addf %401, %403 : vector<8x128xf32>
    %cst_133 = arith.constant 5.000000e-01 : f32
    %405 = vector.broadcast %cst_133 : f32 to vector<8x128xf32>
    %406 = arith.mulf %405, %404 : vector<8x128xf32>
    %407 = math.tanh %406 : vector<8x128xf32>
    %cst_134 = arith.constant 5.000000e-01 : f32
    %408 = vector.broadcast %cst_134 : f32 to vector<8x128xf32>
    %409 = arith.mulf %408, %407 : vector<8x128xf32>
    %cst_135 = arith.constant 5.000000e-01 : f32
    %410 = vector.broadcast %cst_135 : f32 to vector<8x128xf32>
    %411 = arith.addf %409, %410 : vector<8x128xf32>
    %412 = math.tanh %404 : vector<8x128xf32>
    %413 = vector.extract_strided_slice %411 {offsets = [0, 32], sizes = [8, 96], strides = [1, 1]} : vector<8x128xf32> to vector<8x96xf32>
    %414 = vector.extract_strided_slice %411 {offsets = [0, 0], sizes = [8, 32], strides = [1, 1]} : vector<8x128xf32> to vector<8x32xf32>
    %415 = tpu.concatenate %413, %414 in 1 : vector<8x96xf32>, vector<8x32xf32> -> vector<8x128xf32>
    %416 = arith.mulf %415, %337 : vector<8x128xf32>
    %417 = vector.extract_strided_slice %412 {offsets = [0, 64], sizes = [8, 64], strides = [1, 1]} : vector<8x128xf32> to vector<8x64xf32>
    %418 = vector.extract_strided_slice %412 {offsets = [0, 0], sizes = [8, 64], strides = [1, 1]} : vector<8x128xf32> to vector<8x64xf32>
    %419 = tpu.concatenate %417, %418 in 1 : vector<8x64xf32>, vector<8x64xf32> -> vector<8x128xf32>
    %420 = arith.mulf %411, %419 : vector<8x128xf32>
    %421 = arith.addf %416, %420 : vector<8x128xf32>
    %422 = vector.extract_strided_slice %411 {offsets = [0, 96], sizes = [8, 32], strides = [1, 1]} : vector<8x128xf32> to vector<8x32xf32>
    %423 = vector.extract_strided_slice %411 {offsets = [0, 0], sizes = [8, 96], strides = [1, 1]} : vector<8x128xf32> to vector<8x96xf32>
    %424 = tpu.concatenate %422, %423 in 1 : vector<8x32xf32>, vector<8x96xf32> -> vector<8x128xf32>
    %425 = math.tanh %421 : vector<8x128xf32>
    %426 = arith.mulf %424, %425 : vector<8x128xf32>
    %c48 = arith.constant 48 : index
    %c0_136 = arith.constant 0 : index
    %427 = vector.load %arg14[%c48, %c0_136] : memref<64x128xf32, #tpu.memory_space<vmem>>, vector<8x128xf32>
    %c0_137 = arith.constant 0 : index
    %c0_138 = arith.constant 0 : index
    %428 = vector.load %arg3[%c0_137, %c0_138] : memref<128x128xf32, #tpu.memory_space<vmem>>, vector<128x128xf32>
    %cst_139 = arith.constant dense<0.000000e+00> : vector<8x128xf32>
    %429 = tpu.matmul %368, %428, %cst_139 {dimension_numbers = #tpu.dot_dimension_numbers<[1], [0], [0], [1], [0, 0, 1, 1], [], []>} : vector<8x128xf32>, vector<128x128xf32>, vector<8x128xf32> -> vector<8x128xf32>
    %430 = arith.addf %427, %429 : vector<8x128xf32>
    %cst_140 = arith.constant 5.000000e-01 : f32
    %431 = vector.broadcast %cst_140 : f32 to vector<8x128xf32>
    %432 = arith.mulf %431, %430 : vector<8x128xf32>
    %433 = math.tanh %432 : vector<8x128xf32>
    %cst_141 = arith.constant 5.000000e-01 : f32
    %434 = vector.broadcast %cst_141 : f32 to vector<8x128xf32>
    %435 = arith.mulf %434, %433 : vector<8x128xf32>
    %cst_142 = arith.constant 5.000000e-01 : f32
    %436 = vector.broadcast %cst_142 : f32 to vector<8x128xf32>
    %437 = arith.addf %435, %436 : vector<8x128xf32>
    %438 = math.tanh %430 : vector<8x128xf32>
    %439 = vector.extract_strided_slice %437 {offsets = [0, 16], sizes = [8, 112], strides = [1, 1]} : vector<8x128xf32> to vector<8x112xf32>
    %440 = vector.extract_strided_slice %437 {offsets = [0, 0], sizes = [8, 16], strides = [1, 1]} : vector<8x128xf32> to vector<8x16xf32>
    %441 = tpu.concatenate %439, %440 in 1 : vector<8x112xf32>, vector<8x16xf32> -> vector<8x128xf32>
    %442 = arith.mulf %441, %363 : vector<8x128xf32>
    %443 = vector.extract_strided_slice %438 {offsets = [0, 32], sizes = [8, 96], strides = [1, 1]} : vector<8x128xf32> to vector<8x96xf32>
    %444 = vector.extract_strided_slice %438 {offsets = [0, 0], sizes = [8, 32], strides = [1, 1]} : vector<8x128xf32> to vector<8x32xf32>
    %445 = tpu.concatenate %443, %444 in 1 : vector<8x96xf32>, vector<8x32xf32> -> vector<8x128xf32>
    %446 = arith.mulf %437, %445 : vector<8x128xf32>
    %447 = arith.addf %442, %446 : vector<8x128xf32>
    %448 = vector.extract_strided_slice %437 {offsets = [0, 48], sizes = [8, 80], strides = [1, 1]} : vector<8x128xf32> to vector<8x80xf32>
    %449 = vector.extract_strided_slice %437 {offsets = [0, 0], sizes = [8, 48], strides = [1, 1]} : vector<8x128xf32> to vector<8x48xf32>
    %450 = tpu.concatenate %448, %449 in 1 : vector<8x80xf32>, vector<8x48xf32> -> vector<8x128xf32>
    %451 = math.tanh %447 : vector<8x128xf32>
    %452 = arith.mulf %450, %451 : vector<8x128xf32>
    %c0_143 = arith.constant 0 : index
    %c0_144 = arith.constant 0 : index
    %453 = vector.load %arg5[%c0_143, %c0_144] : memref<128x128xf32, #tpu.memory_space<vmem>>, vector<128x128xf32>
    %cst_145 = arith.constant dense<0.000000e+00> : vector<8x128xf32>
    %454 = tpu.matmul %368, %453, %cst_145 {dimension_numbers = #tpu.dot_dimension_numbers<[1], [0], [0], [1], [0, 0, 1, 1], [], []>} : vector<8x128xf32>, vector<128x128xf32>, vector<8x128xf32> -> vector<8x128xf32>
    %455 = vector.broadcast %8 : vector<1x128xf32> to vector<8x128xf32>
    %456 = arith.addf %455, %454 : vector<8x128xf32>
    %c0_146 = arith.constant 0 : index
    %c0_147 = arith.constant 0 : index
    %457 = vector.load %arg6[%c0_146, %c0_147] : memref<128x128xf32, #tpu.memory_space<vmem>>, vector<128x128xf32>
    %cst_148 = arith.constant dense<0.000000e+00> : vector<8x128xf32>
    %458 = tpu.matmul %397, %457, %cst_148 {dimension_numbers = #tpu.dot_dimension_numbers<[1], [0], [0], [1], [0, 0, 1, 1], [], []>} : vector<8x128xf32>, vector<128x128xf32>, vector<8x128xf32> -> vector<8x128xf32>
    %459 = arith.addf %456, %458 : vector<8x128xf32>
    %cst_149 = arith.constant 5.000000e-01 : f32
    %460 = vector.broadcast %cst_149 : f32 to vector<8x128xf32>
    %461 = arith.mulf %460, %459 : vector<8x128xf32>
    %462 = math.tanh %461 : vector<8x128xf32>
    %cst_150 = arith.constant 5.000000e-01 : f32
    %463 = vector.broadcast %cst_150 : f32 to vector<8x128xf32>
    %464 = arith.mulf %463, %462 : vector<8x128xf32>
    %cst_151 = arith.constant 5.000000e-01 : f32
    %465 = vector.broadcast %cst_151 : f32 to vector<8x128xf32>
    %466 = arith.addf %464, %465 : vector<8x128xf32>
    %467 = math.tanh %459 : vector<8x128xf32>
    %468 = vector.extract_strided_slice %466 {offsets = [0, 32], sizes = [8, 96], strides = [1, 1]} : vector<8x128xf32> to vector<8x96xf32>
    %469 = vector.extract_strided_slice %466 {offsets = [0, 0], sizes = [8, 32], strides = [1, 1]} : vector<8x128xf32> to vector<8x32xf32>
    %470 = tpu.concatenate %468, %469 in 1 : vector<8x96xf32>, vector<8x32xf32> -> vector<8x128xf32>
    %471 = arith.mulf %470, %392 : vector<8x128xf32>
    %472 = vector.extract_strided_slice %467 {offsets = [0, 64], sizes = [8, 64], strides = [1, 1]} : vector<8x128xf32> to vector<8x64xf32>
    %473 = vector.extract_strided_slice %467 {offsets = [0, 0], sizes = [8, 64], strides = [1, 1]} : vector<8x128xf32> to vector<8x64xf32>
    %474 = tpu.concatenate %472, %473 in 1 : vector<8x64xf32>, vector<8x64xf32> -> vector<8x128xf32>
    %475 = arith.mulf %466, %474 : vector<8x128xf32>
    %476 = arith.addf %471, %475 : vector<8x128xf32>
    %477 = vector.extract_strided_slice %466 {offsets = [0, 96], sizes = [8, 32], strides = [1, 1]} : vector<8x128xf32> to vector<8x32xf32>
    %478 = vector.extract_strided_slice %466 {offsets = [0, 0], sizes = [8, 96], strides = [1, 1]} : vector<8x128xf32> to vector<8x96xf32>
    %479 = tpu.concatenate %477, %478 in 1 : vector<8x32xf32>, vector<8x96xf32> -> vector<8x128xf32>
    %480 = math.tanh %476 : vector<8x128xf32>
    %481 = arith.mulf %479, %480 : vector<8x128xf32>
    %c0_152 = arith.constant 0 : index
    %c0_153 = arith.constant 0 : index
    %482 = vector.load %arg8[%c0_152, %c0_153] : memref<128x128xf32, #tpu.memory_space<vmem>>, vector<128x128xf32>
    %cst_154 = arith.constant dense<0.000000e+00> : vector<8x128xf32>
    %483 = tpu.matmul %397, %482, %cst_154 {dimension_numbers = #tpu.dot_dimension_numbers<[1], [0], [0], [1], [0, 0, 1, 1], [], []>} : vector<8x128xf32>, vector<128x128xf32>, vector<8x128xf32> -> vector<8x128xf32>
    %484 = vector.broadcast %9 : vector<1x128xf32> to vector<8x128xf32>
    %485 = arith.addf %484, %483 : vector<8x128xf32>
    %c0_155 = arith.constant 0 : index
    %c0_156 = arith.constant 0 : index
    %486 = vector.load %arg9[%c0_155, %c0_156] : memref<128x128xf32, #tpu.memory_space<vmem>>, vector<128x128xf32>
    %cst_157 = arith.constant dense<0.000000e+00> : vector<8x128xf32>
    %487 = tpu.matmul %426, %486, %cst_157 {dimension_numbers = #tpu.dot_dimension_numbers<[1], [0], [0], [1], [0, 0, 1, 1], [], []>} : vector<8x128xf32>, vector<128x128xf32>, vector<8x128xf32> -> vector<8x128xf32>
    %488 = arith.addf %485, %487 : vector<8x128xf32>
    %cst_158 = arith.constant 5.000000e-01 : f32
    %489 = vector.broadcast %cst_158 : f32 to vector<8x128xf32>
    %490 = arith.mulf %489, %488 : vector<8x128xf32>
    %491 = math.tanh %490 : vector<8x128xf32>
    %cst_159 = arith.constant 5.000000e-01 : f32
    %492 = vector.broadcast %cst_159 : f32 to vector<8x128xf32>
    %493 = arith.mulf %492, %491 : vector<8x128xf32>
    %cst_160 = arith.constant 5.000000e-01 : f32
    %494 = vector.broadcast %cst_160 : f32 to vector<8x128xf32>
    %495 = arith.addf %493, %494 : vector<8x128xf32>
    %496 = math.tanh %488 : vector<8x128xf32>
    %497 = vector.extract_strided_slice %495 {offsets = [0, 32], sizes = [8, 96], strides = [1, 1]} : vector<8x128xf32> to vector<8x96xf32>
    %498 = vector.extract_strided_slice %495 {offsets = [0, 0], sizes = [8, 32], strides = [1, 1]} : vector<8x128xf32> to vector<8x32xf32>
    %499 = tpu.concatenate %497, %498 in 1 : vector<8x96xf32>, vector<8x32xf32> -> vector<8x128xf32>
    %500 = arith.mulf %499, %421 : vector<8x128xf32>
    %501 = vector.extract_strided_slice %496 {offsets = [0, 64], sizes = [8, 64], strides = [1, 1]} : vector<8x128xf32> to vector<8x64xf32>
    %502 = vector.extract_strided_slice %496 {offsets = [0, 0], sizes = [8, 64], strides = [1, 1]} : vector<8x128xf32> to vector<8x64xf32>
    %503 = tpu.concatenate %501, %502 in 1 : vector<8x64xf32>, vector<8x64xf32> -> vector<8x128xf32>
    %504 = arith.mulf %495, %503 : vector<8x128xf32>
    %505 = arith.addf %500, %504 : vector<8x128xf32>
    %506 = vector.extract_strided_slice %495 {offsets = [0, 96], sizes = [8, 32], strides = [1, 1]} : vector<8x128xf32> to vector<8x32xf32>
    %507 = vector.extract_strided_slice %495 {offsets = [0, 0], sizes = [8, 96], strides = [1, 1]} : vector<8x128xf32> to vector<8x96xf32>
    %508 = tpu.concatenate %506, %507 in 1 : vector<8x32xf32>, vector<8x96xf32> -> vector<8x128xf32>
    %509 = math.tanh %505 : vector<8x128xf32>
    %510 = arith.mulf %508, %509 : vector<8x128xf32>
    %c56 = arith.constant 56 : index
    %c0_161 = arith.constant 0 : index
    %511 = vector.load %arg14[%c56, %c0_161] : memref<64x128xf32, #tpu.memory_space<vmem>>, vector<8x128xf32>
    %c0_162 = arith.constant 0 : index
    %c0_163 = arith.constant 0 : index
    %512 = vector.load %arg3[%c0_162, %c0_163] : memref<128x128xf32, #tpu.memory_space<vmem>>, vector<128x128xf32>
    %cst_164 = arith.constant dense<0.000000e+00> : vector<8x128xf32>
    %513 = tpu.matmul %452, %512, %cst_164 {dimension_numbers = #tpu.dot_dimension_numbers<[1], [0], [0], [1], [0, 0, 1, 1], [], []>} : vector<8x128xf32>, vector<128x128xf32>, vector<8x128xf32> -> vector<8x128xf32>
    %514 = arith.addf %511, %513 : vector<8x128xf32>
    %cst_165 = arith.constant 5.000000e-01 : f32
    %515 = vector.broadcast %cst_165 : f32 to vector<8x128xf32>
    %516 = arith.mulf %515, %514 : vector<8x128xf32>
    %517 = math.tanh %516 : vector<8x128xf32>
    %cst_166 = arith.constant 5.000000e-01 : f32
    %518 = vector.broadcast %cst_166 : f32 to vector<8x128xf32>
    %519 = arith.mulf %518, %517 : vector<8x128xf32>
    %cst_167 = arith.constant 5.000000e-01 : f32
    %520 = vector.broadcast %cst_167 : f32 to vector<8x128xf32>
    %521 = arith.addf %519, %520 : vector<8x128xf32>
    %522 = math.tanh %514 : vector<8x128xf32>
    %523 = vector.extract_strided_slice %521 {offsets = [0, 16], sizes = [8, 112], strides = [1, 1]} : vector<8x128xf32> to vector<8x112xf32>
    %524 = vector.extract_strided_slice %521 {offsets = [0, 0], sizes = [8, 16], strides = [1, 1]} : vector<8x128xf32> to vector<8x16xf32>
    %525 = tpu.concatenate %523, %524 in 1 : vector<8x112xf32>, vector<8x16xf32> -> vector<8x128xf32>
    %526 = arith.mulf %525, %447 : vector<8x128xf32>
    %527 = vector.extract_strided_slice %522 {offsets = [0, 32], sizes = [8, 96], strides = [1, 1]} : vector<8x128xf32> to vector<8x96xf32>
    %528 = vector.extract_strided_slice %522 {offsets = [0, 0], sizes = [8, 32], strides = [1, 1]} : vector<8x128xf32> to vector<8x32xf32>
    %529 = tpu.concatenate %527, %528 in 1 : vector<8x96xf32>, vector<8x32xf32> -> vector<8x128xf32>
    %530 = arith.mulf %521, %529 : vector<8x128xf32>
    %531 = arith.addf %526, %530 : vector<8x128xf32>
    %532 = vector.extract_strided_slice %521 {offsets = [0, 48], sizes = [8, 80], strides = [1, 1]} : vector<8x128xf32> to vector<8x80xf32>
    %533 = vector.extract_strided_slice %521 {offsets = [0, 0], sizes = [8, 48], strides = [1, 1]} : vector<8x128xf32> to vector<8x48xf32>
    %534 = tpu.concatenate %532, %533 in 1 : vector<8x80xf32>, vector<8x48xf32> -> vector<8x128xf32>
    %535 = math.tanh %531 : vector<8x128xf32>
    %536 = arith.mulf %534, %535 : vector<8x128xf32>
    %c0_168 = arith.constant 0 : index
    %c0_169 = arith.constant 0 : index
    %537 = vector.load %arg5[%c0_168, %c0_169] : memref<128x128xf32, #tpu.memory_space<vmem>>, vector<128x128xf32>
    %cst_170 = arith.constant dense<0.000000e+00> : vector<8x128xf32>
    %538 = tpu.matmul %452, %537, %cst_170 {dimension_numbers = #tpu.dot_dimension_numbers<[1], [0], [0], [1], [0, 0, 1, 1], [], []>} : vector<8x128xf32>, vector<128x128xf32>, vector<8x128xf32> -> vector<8x128xf32>
    %539 = vector.broadcast %8 : vector<1x128xf32> to vector<8x128xf32>
    %540 = arith.addf %539, %538 : vector<8x128xf32>
    %c0_171 = arith.constant 0 : index
    %c0_172 = arith.constant 0 : index
    %541 = vector.load %arg6[%c0_171, %c0_172] : memref<128x128xf32, #tpu.memory_space<vmem>>, vector<128x128xf32>
    %cst_173 = arith.constant dense<0.000000e+00> : vector<8x128xf32>
    %542 = tpu.matmul %481, %541, %cst_173 {dimension_numbers = #tpu.dot_dimension_numbers<[1], [0], [0], [1], [0, 0, 1, 1], [], []>} : vector<8x128xf32>, vector<128x128xf32>, vector<8x128xf32> -> vector<8x128xf32>
    %543 = arith.addf %540, %542 : vector<8x128xf32>
    %cst_174 = arith.constant 5.000000e-01 : f32
    %544 = vector.broadcast %cst_174 : f32 to vector<8x128xf32>
    %545 = arith.mulf %544, %543 : vector<8x128xf32>
    %546 = math.tanh %545 : vector<8x128xf32>
    %cst_175 = arith.constant 5.000000e-01 : f32
    %547 = vector.broadcast %cst_175 : f32 to vector<8x128xf32>
    %548 = arith.mulf %547, %546 : vector<8x128xf32>
    %cst_176 = arith.constant 5.000000e-01 : f32
    %549 = vector.broadcast %cst_176 : f32 to vector<8x128xf32>
    %550 = arith.addf %548, %549 : vector<8x128xf32>
    %551 = math.tanh %543 : vector<8x128xf32>
    %552 = vector.extract_strided_slice %550 {offsets = [0, 32], sizes = [8, 96], strides = [1, 1]} : vector<8x128xf32> to vector<8x96xf32>
    %553 = vector.extract_strided_slice %550 {offsets = [0, 0], sizes = [8, 32], strides = [1, 1]} : vector<8x128xf32> to vector<8x32xf32>
    %554 = tpu.concatenate %552, %553 in 1 : vector<8x96xf32>, vector<8x32xf32> -> vector<8x128xf32>
    %555 = arith.mulf %554, %476 : vector<8x128xf32>
    %556 = vector.extract_strided_slice %551 {offsets = [0, 64], sizes = [8, 64], strides = [1, 1]} : vector<8x128xf32> to vector<8x64xf32>
    %557 = vector.extract_strided_slice %551 {offsets = [0, 0], sizes = [8, 64], strides = [1, 1]} : vector<8x128xf32> to vector<8x64xf32>
    %558 = tpu.concatenate %556, %557 in 1 : vector<8x64xf32>, vector<8x64xf32> -> vector<8x128xf32>
    %559 = arith.mulf %550, %558 : vector<8x128xf32>
    %560 = arith.addf %555, %559 : vector<8x128xf32>
    %561 = vector.extract_strided_slice %550 {offsets = [0, 96], sizes = [8, 32], strides = [1, 1]} : vector<8x128xf32> to vector<8x32xf32>
    %562 = vector.extract_strided_slice %550 {offsets = [0, 0], sizes = [8, 96], strides = [1, 1]} : vector<8x128xf32> to vector<8x96xf32>
    %563 = tpu.concatenate %561, %562 in 1 : vector<8x32xf32>, vector<8x96xf32> -> vector<8x128xf32>
    %564 = math.tanh %560 : vector<8x128xf32>
    %565 = arith.mulf %563, %564 : vector<8x128xf32>
    %c0_177 = arith.constant 0 : index
    %c0_178 = arith.constant 0 : index
    %566 = vector.load %arg8[%c0_177, %c0_178] : memref<128x128xf32, #tpu.memory_space<vmem>>, vector<128x128xf32>
    %cst_179 = arith.constant dense<0.000000e+00> : vector<8x128xf32>
    %567 = tpu.matmul %481, %566, %cst_179 {dimension_numbers = #tpu.dot_dimension_numbers<[1], [0], [0], [1], [0, 0, 1, 1], [], []>} : vector<8x128xf32>, vector<128x128xf32>, vector<8x128xf32> -> vector<8x128xf32>
    %568 = vector.broadcast %9 : vector<1x128xf32> to vector<8x128xf32>
    %569 = arith.addf %568, %567 : vector<8x128xf32>
    %c0_180 = arith.constant 0 : index
    %c0_181 = arith.constant 0 : index
    %570 = vector.load %arg9[%c0_180, %c0_181] : memref<128x128xf32, #tpu.memory_space<vmem>>, vector<128x128xf32>
    %cst_182 = arith.constant dense<0.000000e+00> : vector<8x128xf32>
    %571 = tpu.matmul %510, %570, %cst_182 {dimension_numbers = #tpu.dot_dimension_numbers<[1], [0], [0], [1], [0, 0, 1, 1], [], []>} : vector<8x128xf32>, vector<128x128xf32>, vector<8x128xf32> -> vector<8x128xf32>
    %572 = arith.addf %569, %571 : vector<8x128xf32>
    %cst_183 = arith.constant 5.000000e-01 : f32
    %573 = vector.broadcast %cst_183 : f32 to vector<8x128xf32>
    %574 = arith.mulf %573, %572 : vector<8x128xf32>
    %575 = math.tanh %574 : vector<8x128xf32>
    %cst_184 = arith.constant 5.000000e-01 : f32
    %576 = vector.broadcast %cst_184 : f32 to vector<8x128xf32>
    %577 = arith.mulf %576, %575 : vector<8x128xf32>
    %cst_185 = arith.constant 5.000000e-01 : f32
    %578 = vector.broadcast %cst_185 : f32 to vector<8x128xf32>
    %579 = arith.addf %577, %578 : vector<8x128xf32>
    %580 = math.tanh %572 : vector<8x128xf32>
    %581 = vector.extract_strided_slice %579 {offsets = [0, 32], sizes = [8, 96], strides = [1, 1]} : vector<8x128xf32> to vector<8x96xf32>
    %582 = vector.extract_strided_slice %579 {offsets = [0, 0], sizes = [8, 32], strides = [1, 1]} : vector<8x128xf32> to vector<8x32xf32>
    %583 = tpu.concatenate %581, %582 in 1 : vector<8x96xf32>, vector<8x32xf32> -> vector<8x128xf32>
    %584 = arith.mulf %583, %505 : vector<8x128xf32>
    %585 = vector.extract_strided_slice %580 {offsets = [0, 64], sizes = [8, 64], strides = [1, 1]} : vector<8x128xf32> to vector<8x64xf32>
    %586 = vector.extract_strided_slice %580 {offsets = [0, 0], sizes = [8, 64], strides = [1, 1]} : vector<8x128xf32> to vector<8x64xf32>
    %587 = tpu.concatenate %585, %586 in 1 : vector<8x64xf32>, vector<8x64xf32> -> vector<8x128xf32>
    %588 = arith.mulf %579, %587 : vector<8x128xf32>
    %589 = arith.addf %584, %588 : vector<8x128xf32>
    %590 = vector.extract_strided_slice %579 {offsets = [0, 96], sizes = [8, 32], strides = [1, 1]} : vector<8x128xf32> to vector<8x32xf32>
    %591 = vector.extract_strided_slice %579 {offsets = [0, 0], sizes = [8, 96], strides = [1, 1]} : vector<8x128xf32> to vector<8x96xf32>
    %592 = tpu.concatenate %590, %591 in 1 : vector<8x32xf32>, vector<8x96xf32> -> vector<8x128xf32>
    %593 = math.tanh %589 : vector<8x128xf32>
    %594 = arith.mulf %592, %593 : vector<8x128xf32>
    %c0_186 = arith.constant 0 : index
    %c0_187 = arith.constant 0 : index
    %595 = vector.load %arg5[%c0_186, %c0_187] : memref<128x128xf32, #tpu.memory_space<vmem>>, vector<128x128xf32>
    %cst_188 = arith.constant dense<0.000000e+00> : vector<8x128xf32>
    %596 = tpu.matmul %536, %595, %cst_188 {dimension_numbers = #tpu.dot_dimension_numbers<[1], [0], [0], [1], [0, 0, 1, 1], [], []>} : vector<8x128xf32>, vector<128x128xf32>, vector<8x128xf32> -> vector<8x128xf32>
    %597 = vector.broadcast %8 : vector<1x128xf32> to vector<8x128xf32>
    %598 = arith.addf %597, %596 : vector<8x128xf32>
    %c0_189 = arith.constant 0 : index
    %c0_190 = arith.constant 0 : index
    %599 = vector.load %arg6[%c0_189, %c0_190] : memref<128x128xf32, #tpu.memory_space<vmem>>, vector<128x128xf32>
    %cst_191 = arith.constant dense<0.000000e+00> : vector<8x128xf32>
    %600 = tpu.matmul %565, %599, %cst_191 {dimension_numbers = #tpu.dot_dimension_numbers<[1], [0], [0], [1], [0, 0, 1, 1], [], []>} : vector<8x128xf32>, vector<128x128xf32>, vector<8x128xf32> -> vector<8x128xf32>
    %601 = arith.addf %598, %600 : vector<8x128xf32>
    %cst_192 = arith.constant 5.000000e-01 : f32
    %602 = vector.broadcast %cst_192 : f32 to vector<8x128xf32>
    %603 = arith.mulf %602, %601 : vector<8x128xf32>
    %604 = math.tanh %603 : vector<8x128xf32>
    %cst_193 = arith.constant 5.000000e-01 : f32
    %605 = vector.broadcast %cst_193 : f32 to vector<8x128xf32>
    %606 = arith.mulf %605, %604 : vector<8x128xf32>
    %cst_194 = arith.constant 5.000000e-01 : f32
    %607 = vector.broadcast %cst_194 : f32 to vector<8x128xf32>
    %608 = arith.addf %606, %607 : vector<8x128xf32>
    %609 = math.tanh %601 : vector<8x128xf32>
    %610 = vector.extract_strided_slice %608 {offsets = [0, 32], sizes = [8, 96], strides = [1, 1]} : vector<8x128xf32> to vector<8x96xf32>
    %611 = vector.extract_strided_slice %608 {offsets = [0, 0], sizes = [8, 32], strides = [1, 1]} : vector<8x128xf32> to vector<8x32xf32>
    %612 = tpu.concatenate %610, %611 in 1 : vector<8x96xf32>, vector<8x32xf32> -> vector<8x128xf32>
    %613 = arith.mulf %612, %560 : vector<8x128xf32>
    %614 = vector.extract_strided_slice %609 {offsets = [0, 64], sizes = [8, 64], strides = [1, 1]} : vector<8x128xf32> to vector<8x64xf32>
    %615 = vector.extract_strided_slice %609 {offsets = [0, 0], sizes = [8, 64], strides = [1, 1]} : vector<8x128xf32> to vector<8x64xf32>
    %616 = tpu.concatenate %614, %615 in 1 : vector<8x64xf32>, vector<8x64xf32> -> vector<8x128xf32>
    %617 = arith.mulf %608, %616 : vector<8x128xf32>
    %618 = arith.addf %613, %617 : vector<8x128xf32>
    %619 = vector.extract_strided_slice %608 {offsets = [0, 96], sizes = [8, 32], strides = [1, 1]} : vector<8x128xf32> to vector<8x32xf32>
    %620 = vector.extract_strided_slice %608 {offsets = [0, 0], sizes = [8, 96], strides = [1, 1]} : vector<8x128xf32> to vector<8x96xf32>
    %621 = tpu.concatenate %619, %620 in 1 : vector<8x32xf32>, vector<8x96xf32> -> vector<8x128xf32>
    %622 = math.tanh %618 : vector<8x128xf32>
    %623 = arith.mulf %621, %622 : vector<8x128xf32>
    %c0_195 = arith.constant 0 : index
    %c0_196 = arith.constant 0 : index
    %624 = vector.load %arg8[%c0_195, %c0_196] : memref<128x128xf32, #tpu.memory_space<vmem>>, vector<128x128xf32>
    %cst_197 = arith.constant dense<0.000000e+00> : vector<8x128xf32>
    %625 = tpu.matmul %565, %624, %cst_197 {dimension_numbers = #tpu.dot_dimension_numbers<[1], [0], [0], [1], [0, 0, 1, 1], [], []>} : vector<8x128xf32>, vector<128x128xf32>, vector<8x128xf32> -> vector<8x128xf32>
    %626 = vector.broadcast %9 : vector<1x128xf32> to vector<8x128xf32>
    %627 = arith.addf %626, %625 : vector<8x128xf32>
    %c0_198 = arith.constant 0 : index
    %c0_199 = arith.constant 0 : index
    %628 = vector.load %arg9[%c0_198, %c0_199] : memref<128x128xf32, #tpu.memory_space<vmem>>, vector<128x128xf32>
    %cst_200 = arith.constant dense<0.000000e+00> : vector<8x128xf32>
    %629 = tpu.matmul %594, %628, %cst_200 {dimension_numbers = #tpu.dot_dimension_numbers<[1], [0], [0], [1], [0, 0, 1, 1], [], []>} : vector<8x128xf32>, vector<128x128xf32>, vector<8x128xf32> -> vector<8x128xf32>
    %630 = arith.addf %627, %629 : vector<8x128xf32>
    %cst_201 = arith.constant 5.000000e-01 : f32
    %631 = vector.broadcast %cst_201 : f32 to vector<8x128xf32>
    %632 = arith.mulf %631, %630 : vector<8x128xf32>
    %633 = math.tanh %632 : vector<8x128xf32>
    %cst_202 = arith.constant 5.000000e-01 : f32
    %634 = vector.broadcast %cst_202 : f32 to vector<8x128xf32>
    %635 = arith.mulf %634, %633 : vector<8x128xf32>
    %cst_203 = arith.constant 5.000000e-01 : f32
    %636 = vector.broadcast %cst_203 : f32 to vector<8x128xf32>
    %637 = arith.addf %635, %636 : vector<8x128xf32>
    %638 = math.tanh %630 : vector<8x128xf32>
    %639 = vector.extract_strided_slice %637 {offsets = [0, 32], sizes = [8, 96], strides = [1, 1]} : vector<8x128xf32> to vector<8x96xf32>
    %640 = vector.extract_strided_slice %637 {offsets = [0, 0], sizes = [8, 32], strides = [1, 1]} : vector<8x128xf32> to vector<8x32xf32>
    %641 = tpu.concatenate %639, %640 in 1 : vector<8x96xf32>, vector<8x32xf32> -> vector<8x128xf32>
    %642 = arith.mulf %641, %589 : vector<8x128xf32>
    %643 = vector.extract_strided_slice %638 {offsets = [0, 64], sizes = [8, 64], strides = [1, 1]} : vector<8x128xf32> to vector<8x64xf32>
    %644 = vector.extract_strided_slice %638 {offsets = [0, 0], sizes = [8, 64], strides = [1, 1]} : vector<8x128xf32> to vector<8x64xf32>
    %645 = tpu.concatenate %643, %644 in 1 : vector<8x64xf32>, vector<8x64xf32> -> vector<8x128xf32>
    %646 = arith.mulf %637, %645 : vector<8x128xf32>
    %647 = arith.addf %642, %646 : vector<8x128xf32>
    %648 = vector.extract_strided_slice %637 {offsets = [0, 96], sizes = [8, 32], strides = [1, 1]} : vector<8x128xf32> to vector<8x32xf32>
    %649 = vector.extract_strided_slice %637 {offsets = [0, 0], sizes = [8, 96], strides = [1, 1]} : vector<8x128xf32> to vector<8x96xf32>
    %650 = tpu.concatenate %648, %649 in 1 : vector<8x32xf32>, vector<8x96xf32> -> vector<8x128xf32>
    %651 = math.tanh %647 : vector<8x128xf32>
    %652 = arith.mulf %650, %651 : vector<8x128xf32>
    %c0_204 = arith.constant 0 : index
    %c0_205 = arith.constant 0 : index
    %653 = vector.load %arg8[%c0_204, %c0_205] : memref<128x128xf32, #tpu.memory_space<vmem>>, vector<128x128xf32>
    %cst_206 = arith.constant dense<0.000000e+00> : vector<8x128xf32>
    %654 = tpu.matmul %623, %653, %cst_206 {dimension_numbers = #tpu.dot_dimension_numbers<[1], [0], [0], [1], [0, 0, 1, 1], [], []>} : vector<8x128xf32>, vector<128x128xf32>, vector<8x128xf32> -> vector<8x128xf32>
    %655 = vector.broadcast %9 : vector<1x128xf32> to vector<8x128xf32>
    %656 = arith.addf %655, %654 : vector<8x128xf32>
    %c0_207 = arith.constant 0 : index
    %c0_208 = arith.constant 0 : index
    %657 = vector.load %arg9[%c0_207, %c0_208] : memref<128x128xf32, #tpu.memory_space<vmem>>, vector<128x128xf32>
    %cst_209 = arith.constant dense<0.000000e+00> : vector<8x128xf32>
    %658 = tpu.matmul %652, %657, %cst_209 {dimension_numbers = #tpu.dot_dimension_numbers<[1], [0], [0], [1], [0, 0, 1, 1], [], []>} : vector<8x128xf32>, vector<128x128xf32>, vector<8x128xf32> -> vector<8x128xf32>
    %659 = arith.addf %656, %658 : vector<8x128xf32>
    %cst_210 = arith.constant 5.000000e-01 : f32
    %660 = vector.broadcast %cst_210 : f32 to vector<8x128xf32>
    %661 = arith.mulf %660, %659 : vector<8x128xf32>
    %662 = math.tanh %661 : vector<8x128xf32>
    %cst_211 = arith.constant 5.000000e-01 : f32
    %663 = vector.broadcast %cst_211 : f32 to vector<8x128xf32>
    %664 = arith.mulf %663, %662 : vector<8x128xf32>
    %cst_212 = arith.constant 5.000000e-01 : f32
    %665 = vector.broadcast %cst_212 : f32 to vector<8x128xf32>
    %666 = arith.addf %664, %665 : vector<8x128xf32>
    %667 = math.tanh %659 : vector<8x128xf32>
    %668 = vector.extract_strided_slice %666 {offsets = [0, 32], sizes = [8, 96], strides = [1, 1]} : vector<8x128xf32> to vector<8x96xf32>
    %669 = vector.extract_strided_slice %666 {offsets = [0, 0], sizes = [8, 32], strides = [1, 1]} : vector<8x128xf32> to vector<8x32xf32>
    %670 = tpu.concatenate %668, %669 in 1 : vector<8x96xf32>, vector<8x32xf32> -> vector<8x128xf32>
    %671 = arith.mulf %670, %647 : vector<8x128xf32>
    %672 = vector.extract_strided_slice %667 {offsets = [0, 64], sizes = [8, 64], strides = [1, 1]} : vector<8x128xf32> to vector<8x64xf32>
    %673 = vector.extract_strided_slice %667 {offsets = [0, 0], sizes = [8, 64], strides = [1, 1]} : vector<8x128xf32> to vector<8x64xf32>
    %674 = tpu.concatenate %672, %673 in 1 : vector<8x64xf32>, vector<8x64xf32> -> vector<8x128xf32>
    %675 = arith.mulf %666, %674 : vector<8x128xf32>
    %676 = arith.addf %671, %675 : vector<8x128xf32>
    %677 = vector.extract_strided_slice %666 {offsets = [0, 96], sizes = [8, 32], strides = [1, 1]} : vector<8x128xf32> to vector<8x32xf32>
    %678 = vector.extract_strided_slice %666 {offsets = [0, 0], sizes = [8, 96], strides = [1, 1]} : vector<8x128xf32> to vector<8x96xf32>
    %679 = tpu.concatenate %677, %678 in 1 : vector<8x32xf32>, vector<8x96xf32> -> vector<8x128xf32>
    %680 = math.tanh %676 : vector<8x128xf32>
    %681 = arith.mulf %679, %680 : vector<8x128xf32>
    %c0_213 = arith.constant 0 : index
    %c0_214 = arith.constant 0 : index
    %682 = vector.load %arg11[%c0_213, %c0_214] : memref<128x128xf32, #tpu.memory_space<vmem>>, vector<128x128xf32>
    %cst_215 = arith.constant dense<0.000000e+00> : vector<8x128xf32>
    %683 = tpu.matmul %681, %682, %cst_215 {dimension_numbers = #tpu.dot_dimension_numbers<[1], [0], [0], [1], [0, 0, 1, 1], [], []>} : vector<8x128xf32>, vector<128x128xf32>, vector<8x128xf32> -> vector<8x128xf32>
    %c0_216 = arith.constant 0 : index
    %c0_217 = arith.constant 0 : index
    %684 = vector.load %arg12[%c0_216, %c0_217] : memref<1x128xf32, #tpu.memory_space<vmem>>, vector<1x128xf32>
    %685 = vector.broadcast %684 : vector<1x128xf32> to vector<8x128xf32>
    %686 = arith.addf %683, %685 : vector<8x128xf32>
    %c0_218 = arith.constant 0 : index
    %c0_219 = arith.constant 0 : index
    %687 = vector.load %arg13[%c0_218, %c0_219] : memref<8x128xf32, #tpu.memory_space<vmem>>, vector<8x128xf32>
    tpu.vector_store %arg13[%c0_218, %c0_219], %686 {strides = array<i32>} : memref<8x128xf32, #tpu.memory_space<vmem>>, vector<8x128xf32>,
    return
  }
  func.func @transform_0(%arg0: i32) -> (i32, i32) {
    %c0_i32 = arith.constant 0 : i32
    %c0_i32_0 = arith.constant 0 : i32
    %c0_i32_1 = arith.constant 0 : i32
    return %c0_i32, %c0_i32_0 : i32, i32
  }
  func.func @transform_1(%arg0: i32) -> (i32, i32) {
    %c0_i32 = arith.constant 0 : i32
    %c0_i32_0 = arith.constant 0 : i32
    %c0_i32_1 = arith.constant 0 : i32
    return %c0_i32, %c0_i32_0 : i32, i32
  }
  func.func @transform_2(%arg0: i32) -> (i32, i32) {
    %c0_i32 = arith.constant 0 : i32
    %c0_i32_0 = arith.constant 0 : i32
    %c0_i32_1 = arith.constant 0 : i32
    return %c0_i32, %c0_i32_0 : i32, i32
  }
  func.func @transform_3(%arg0: i32) -> (i32, i32) {
    %c0_i32 = arith.constant 0 : i32
    %c0_i32_0 = arith.constant 0 : i32
    %c0_i32_1 = arith.constant 0 : i32
    return %c0_i32, %c0_i32_0 : i32, i32
  }
  func.func @transform_4(%arg0: i32) -> (i32, i32) {
    %c0_i32 = arith.constant 0 : i32
    %c0_i32_0 = arith.constant 0 : i32
    %c0_i32_1 = arith.constant 0 : i32
    return %c0_i32, %c0_i32_0 : i32, i32
  }
  func.func @transform_5(%arg0: i32) -> (i32, i32) {
    %c0_i32 = arith.constant 0 : i32
    %c0_i32_0 = arith.constant 0 : i32
    %c0_i32_1 = arith.constant 0 : i32
    return %c0_i32, %c0_i32_0 : i32, i32
  }
  func.func @transform_6(%arg0: i32) -> (i32, i32) {
    %c0_i32 = arith.constant 0 : i32
    %c0_i32_0 = arith.constant 0 : i32
    %c0_i32_1 = arith.constant 0 : i32
    return %c0_i32, %c0_i32_0 : i32, i32
  }
  func.func @transform_7(%arg0: i32) -> (i32, i32) {
    %c0_i32 = arith.constant 0 : i32
    %c0_i32_0 = arith.constant 0 : i32
    %c0_i32_1 = arith.constant 0 : i32
    return %c0_i32, %c0_i32_0 : i32, i32
  }
  func.func @transform_8(%arg0: i32) -> (i32, i32) {
    %c0_i32 = arith.constant 0 : i32
    %c0_i32_0 = arith.constant 0 : i32
    %c0_i32_1 = arith.constant 0 : i32
    return %c0_i32, %c0_i32_0 : i32, i32
  }
  func.func @transform_9(%arg0: i32) -> (i32, i32) {
    %c0_i32 = arith.constant 0 : i32
    %c0_i32_0 = arith.constant 0 : i32
    %c0_i32_1 = arith.constant 0 : i32
    return %c0_i32, %c0_i32_0 : i32, i32
  }
  func.func @transform_10(%arg0: i32) -> (i32, i32) {
    %c0_i32 = arith.constant 0 : i32
    %c0_i32_0 = arith.constant 0 : i32
    %c0_i32_1 = arith.constant 0 : i32
    return %c0_i32, %c0_i32_0 : i32, i32
  }
  func.func @transform_11(%arg0: i32) -> (i32, i32) {
    %c0_i32 = arith.constant 0 : i32
    %c0_i32_0 = arith.constant 0 : i32
    %c0_i32_1 = arith.constant 0 : i32
    return %c0_i32, %c0_i32_0 : i32, i32
  }
  func.func @transform_12(%arg0: i32) -> (i32, i32) {
    %c0_i32 = arith.constant 0 : i32
    %c0_i32_0 = arith.constant 0 : i32
    %c0_i32_1 = arith.constant 0 : i32
    return %c0_i32, %c0_i32_0 : i32, i32
  }
}

</mosaic_0001>

<llo_original>
// kernel: tpu_custom_call.1
$region0: #{tpu_custom_call.1}
  #allocation0 [shape = 'u32[]', space=smem, size = 0x4, offset = 0x4, fixed_abs, tag = 'smem constant byte address 0x4 - core index']
  #allocation1 [shape = 'u32[72,128]{1,0:T(1,128)}', space=vmem, size = 0x9000, scoped, tag = 'internal scratch']
  %s0 = inlined_call_operand.hbm [shape: f32[8,128], index: 0, kind: input, shape index: {}]
  %s1 = inlined_call_operand.hbm [shape: f32[8,128], index: 1, kind: output, shape index: {}]
  %s2 = sld [smem:[#allocation0]]
  $region18: #{tpu_custom_call.1} parent=0
    _
  %s4 = ssub.s32 1, %s2
  %s5 = scalar_select 0, %s4, %s2
  $region1: #{tpu_custom_call.1} parent=0
    #allocation2 [shape = 'u8[4096]{0}', space=vmem, size = 0x1000, scoped, tag = 'input window, operand 0, single buffered']
    #allocation3 [shape = 's32[1]{0}', space=sflag, size = 0x4, scoped, tag = 'scoped memory for tpu_custom_call.1']
    #allocation4 [shape = 's32[1]{0}', space=sflag, size = 0x4, scoped, tag = 'scoped memory for tpu_custom_call.1']
    #allocation5 [shape = 'u8[4096]{0}', space=vmem, size = 0x1000, scoped, tag = 'output window, operand 0, single buffered']
    %6 = vsyncpa [#allocation3], 0
    %7 = vsyncpa [#allocation4], 0
    // Predicated region
    $region2: #{tpu_custom_call.1} parent=1 // pred_check
      _
    $region3: #{tpu_custom_call.1} parent=1 // pred_check_branch
      %9 = sbr.rel (0) target = $region5
    $region4: #{tpu_custom_call.1} parent=1 // pred_region
      %11 = vsyncadd [#allocation3], 0
      %s13 = sshll.u32 %s0, 4
      %s14 = int_to_ptr.hbm [resolvable:$true] %s13
      %s15 = sshll.u32 [#allocation2], 4
      %s16 = int_to_ptr.vmem [resolvable:$true] %s15
      %18 = dma.hbm_to_vmem [thread:$0]  %s14, 128, %s16, [#allocation3]
    $region5: #{tpu_custom_call.1} parent=1 // pred_fallthru
      _
    // Predicated region
    $region6: #{tpu_custom_call.1} parent=1 // pred_check
      _
    $region7: #{tpu_custom_call.1} parent=1 // pred_check_branch
      %20 = sbr.rel (0) target = $region9
    $region8: #{tpu_custom_call.1} parent=1 // pred_region
      %22 = dma.done [#allocation3], 128
    $region9: #{tpu_custom_call.1} parent=1 // pred_fallthru
      _
    %v23 = vld [vmem:[#allocation2] sm:$0xff]
    %24 = vrot.lane.b32.xlu0 %v23, 1
    %v25 = vpop.permute.xlu0 %24
    %26 = vst [vmem:[#allocation5] sm:$0xff] %v25
    // Predicated region
    $region10: #{tpu_custom_call.1} parent=1 // pred_check
      _
    $region11: #{tpu_custom_call.1} parent=1 // pred_check_branch
      %28 = sbr.rel (0) target = $region13
    $region12: #{tpu_custom_call.1} parent=1 // pred_region
      %30 = vsyncadd [#allocation4], 0
      %s32 = sshll.u32 [#allocation5], 4
      %s33 = int_to_ptr.vmem [resolvable:$true] %s32
      %s34 = sshll.u32 %s1, 4
      %s35 = int_to_ptr.hbm [resolvable:$true] %s34
      %37 = dma.vmem_to_hbm [thread:$0]  %s33, 128, %s35, [#allocation4]
    $region13: #{tpu_custom_call.1} parent=1 // pred_fallthru
      _
    // Predicated region
    $region14: #{tpu_custom_call.1} parent=1 // pred_check
      _
    $region15: #{tpu_custom_call.1} parent=1 // pred_check_branch
      %39 = sbr.rel (0) target = $region17
    $region16: #{tpu_custom_call.1} parent=1 // pred_region
      %41 = dma.done [#allocation4], 128
    $region17: #{tpu_custom_call.1} parent=1 // pred_fallthru
      _
    %42 = vsyncpa [#allocation3], 1
    %43 = vsyncpa [#allocation4], 1

// kernel: tpu_custom_call.1
$region0: #{tpu_custom_call.1}
  #allocation0 [shape = 'u32[]', space=smem, size = 0x4, offset = 0x4, fixed_abs, tag = 'smem constant byte address 0x4 - core index']
  #allocation1 [shape = 'u32[72,128]{1,0:T(1,128)}', space=vmem, size = 0x9000, scoped, tag = 'internal scratch']
  #allocation2 [shape = 'f32[64,128]{1,0:T(8,128)}', space=vmem, size = 0x8000, scoped, tag = 'scratch operand']
  %s0 = inlined_call_operand.hbm [shape: f32[64,128], index: 0, kind: input, shape index: {}]
  %s1 = inlined_call_operand.hbm [shape: f32[128,128], index: 1, kind: input, shape index: {}]
  %s2 = inlined_call_operand.hbm [shape: f32[128,128], index: 2, kind: input, shape index: {}]
  %s3 = inlined_call_operand.vmem [shape: f32[1,128], index: 3, kind: input, shape index: {}]
  %s4 = inlined_call_operand.hbm [shape: f32[128,128], index: 4, kind: input, shape index: {}]
  %s5 = inlined_call_operand.hbm [shape: f32[128,128], index: 5, kind: input, shape index: {}]
  %s6 = inlined_call_operand.vmem [shape: f32[1,128], index: 6, kind: input, shape index: {}]
  %s7 = inlined_call_operand.hbm [shape: f32[128,128], index: 7, kind: input, shape index: {}]
  %s8 = inlined_call_operand.hbm [shape: f32[128,128], index: 8, kind: input, shape index: {}]
  %s9 = inlined_call_operand.vmem [shape: f32[1,128], index: 9, kind: input, shape index: {}]
  %s10 = inlined_call_operand.hbm [shape: f32[128,128], index: 10, kind: input, shape index: {}]
  %s11 = inlined_call_operand.vmem [shape: f32[1,128], index: 11, kind: input, shape index: {}]
  %s12 = inlined_call_operand.hbm [shape: f32[8,128], index: 12, kind: output, shape index: {}]
  %s13 = sld [smem:[#allocation0]]
  $region90: #{tpu_custom_call.1} parent=0
    _
  %s15 = ssub.s32 1, %s13
  %s16 = scalar_select 0, %s15, %s13
  $region1: #{tpu_custom_call.1} parent=0
    #allocation3 [shape = 'u8[32768]{0}', space=vmem, size = 0x8000, scoped, tag = 'input window, operand 0, single buffered']
    #allocation4 [shape = 's32[1]{0}', space=sflag, size = 0x4, scoped, tag = 'scoped memory for tpu_custom_call.1']
    #allocation5 [shape = 's32[1]{0}', space=sflag, size = 0x4, scoped, tag = 'scoped memory for tpu_custom_call.1']
    #allocation6 [shape = 'u8[65536]{0}', space=vmem, size = 0x10000, scoped, tag = 'input window, operand 1, single buffered']
    #allocation7 [shape = 's32[1]{0}', space=sflag, size = 0x4, scoped, tag = 'scoped memory for tpu_custom_call.1']
    #allocation8 [shape = 'u8[65536]{0}', space=vmem, size = 0x10000, scoped, tag = 'input window, operand 2, single buffered']
    #allocation9 [shape = 'u8[65536]{0}', space=vmem, size = 0x10000, scoped, tag = 'input window, operand 4, single buffered']
    #allocation10 [shape = 's32[1]{0}', space=sflag, size = 0x4, scoped, tag = 'scoped memory for tpu_custom_call.1']
    #allocation11 [shape = 'u8[65536]{0}', space=vmem, size = 0x10000, scoped, tag = 'input window, operand 5, single buffered']
    #allocation12 [shape = 'u8[65536]{0}', space=vmem, size = 0x10000, scoped, tag = 'input window, operand 7, single buffered']
    #allocation13 [shape = 's32[1]{0}', space=sflag, size = 0x4, scoped, tag = 'scoped memory for tpu_custom_call.1']
    #allocation14 [shape = 'u8[65536]{0}', space=vmem, size = 0x10000, scoped, tag = 'input window, operand 8, single buffered']
    #allocation15 [shape = 'u8[65536]{0}', space=vmem, size = 0x10000, scoped, tag = 'input window, operand 10, single buffered']
    #allocation16 [shape = 's32[1]{0}', space=sflag, size = 0x4, scoped, tag = 'scoped memory for tpu_custom_call.1']
    #allocation17 [shape = 'u8[4096]{0}', space=vmem, size = 0x1000, scoped, tag = 'output window, operand 0, single buffered']
    %17 = vsyncpa [#allocation4], 0
    %18 = vsyncpa [#allocation7], 0
    %19 = vsyncpa [#allocation10], 0
    %20 = vsyncpa [#allocation13], 0
    %21 = vsyncpa [#allocation16], 0
    %22 = vsyncpa [#allocation5], 0
    // Predicated region
    $region2: #{tpu_custom_call.1} parent=1 // pred_check
      _
    $region3: #{tpu_custom_call.1} parent=1 // pred_check_branch
      %24 = sbr.rel (0) target = $region5
    $region4: #{tpu_custom_call.1} parent=1 // pred_region
      %26 = vsyncadd [#allocation4], 0
      %s27 = sshll.u32 %s0, 4
      %s28 = int_to_ptr.hbm [resolvable:$true] %s27
      %s29 = sshll.u32 [#allocation3], 4
      %s30 = int_to_ptr.vmem [resolvable:$true] %s29
      %35 = dma.hbm_to_vmem [thread:$0]  %s28, 1024, %s30, [#allocation4], 128, 128, 8
    $region5: #{tpu_custom_call.1} parent=1 // pred_fallthru
      _
    // Predicated region
    $region6: #{tpu_custom_call.1} parent=1 // pred_check
      _
    $region7: #{tpu_custom_call.1} parent=1 // pred_check_branch
      %37 = sbr.rel (0) target = $region9
    $region8: #{tpu_custom_call.1} parent=1 // pred_region
      %39 = vsyncadd [#allocation7], 0
      %s40 = sshll.u32 %s1, 4
      %s41 = int_to_ptr.hbm [resolvable:$true] %s40
      %s42 = sshll.u32 [#allocation6], 4
      %s43 = int_to_ptr.vmem [resolvable:$true] %s42
      %48 = dma.hbm_to_vmem [thread:$0]  %s41, 2048, %s43, [#allocation7], 128, 128, 8
    $region9: #{tpu_custom_call.1} parent=1 // pred_fallthru
      _
    // Predicated region
    $region10: #{tpu_custom_call.1} parent=1 // pred_check
      _
    $region11: #{tpu_custom_call.1} parent=1 // pred_check_branch
      %50 = sbr.rel (0) target = $region13
    $region12: #{tpu_custom_call.1} parent=1 // pred_region
      %52 = vsyncadd [#allocation7], 0
      %s53 = sshll.u32 %s2, 4
      %s54 = int_to_ptr.hbm [resolvable:$true] %s53
      %s55 = sshll.u32 [#allocation8], 4
      %s56 = int_to_ptr.vmem [resolvable:$true] %s55
      %61 = dma.hbm_to_vmem [thread:$0]  %s54, 2048, %s56, [#allocation7], 128, 128, 8
    $region13: #{tpu_custom_call.1} parent=1 // pred_fallthru
      _
    // Predicated region
    $region14: #{tpu_custom_call.1} parent=1 // pred_check
      _
    $region15: #{tpu_custom_call.1} parent=1 // pred_check_branch
      %63 = sbr.rel (0) target = $region17
    $region16: #{tpu_custom_call.1} parent=1 // pred_region
      _
    $region17: #{tpu_custom_call.1} parent=1 // pred_fallthru
      _
    // Predicated region
    $region18: #{tpu_custom_call.1} parent=1 // pred_check
      _
    $region19: #{tpu_custom_call.1} parent=1 // pred_check_branch
      %65 = sbr.rel (0) target = $region21
    $region20: #{tpu_custom_call.1} parent=1 // pred_region
      %67 = vsyncadd [#allocation10], 0
      %s68 = sshll.u32 %s4, 4
      %s69 = int_to_ptr.hbm [resolvable:$true] %s68
      %s70 = sshll.u32 [#allocation9], 4
      %s71 = int_to_ptr.vmem [resolvable:$true] %s70
      %76 = dma.hbm_to_vmem [thread:$0]  %s69, 2048, %s71, [#allocation10], 128, 128, 8
    $region21: #{tpu_custom_call.1} parent=1 // pred_fallthru
      _
    // Predicated region
    $region22: #{tpu_custom_call.1} parent=1 // pred_check
      _
    $region23: #{tpu_custom_call.1} parent=1 // pred_check_branch
      %78 = sbr.rel (0) target = $region25
    $region24: #{tpu_custom_call.1} parent=1 // pred_region
      %80 = vsyncadd [#allocation10], 0
      %s81 = sshll.u32 %s5, 4
      %s82 = int_to_ptr.hbm [resolvable:$true] %s81
      %s83 = sshll.u32 [#allocation11], 4
      %s84 = int_to_ptr.vmem [resolvable:$true] %s83
      %89 = dma.hbm_to_vmem [thread:$0]  %s82, 2048, %s84, [#allocation10], 128, 128, 8
    $region25: #{tpu_custom_call.1} parent=1 // pred_fallthru
      _
    // Predicated region
    $region26: #{tpu_custom_call.1} parent=1 // pred_check
      _
    $region27: #{tpu_custom_call.1} parent=1 // pred_check_branch
      %91 = sbr.rel (0) target = $region29
    $region28: #{tpu_custom_call.1} parent=1 // pred_region
      _
    $region29: #{tpu_custom_call.1} parent=1 // pred_fallthru
      _
    // Predicated region
    $region30: #{tpu_custom_call.1} parent=1 // pred_check
      _
    $region31: #{tpu_custom_call.1} parent=1 // pred_check_branch
      %93 = sbr.rel (0) target = $region33
    $region32: #{tpu_custom_call.1} parent=1 // pred_region
      %95 = vsyncadd [#allocation13], 0
      %s96 = sshll.u32 %s7, 4
      %s97 = int_to_ptr.hbm [resolvable:$true] %s96
      %s98 = sshll.u32 [#allocation12], 4
      %s99 = int_to_ptr.vmem [resolvable:$true] %s98
      %104 = dma.hbm_to_vmem [thread:$0]  %s97, 2048, %s99, [#allocation13], 128, 128, 8
    $region33: #{tpu_custom_call.1} parent=1 // pred_fallthru
      _
    // Predicated region
    $region34: #{tpu_custom_call.1} parent=1 // pred_check
      _
    $region35: #{tpu_custom_call.1} parent=1 // pred_check_branch
      %106 = sbr.rel (0) target = $region37
    $region36: #{tpu_custom_call.1} parent=1 // pred_region
      %108 = vsyncadd [#allocation13], 0
      %s109 = sshll.u32 %s8, 4
      %s110 = int_to_ptr.hbm [resolvable:$true] %s109
      %s111 = sshll.u32 [#allocation14], 4
      %s112 = int_to_ptr.vmem [resolvable:$true] %s111
      %117 = dma.hbm_to_vmem [thread:$0]  %s110, 2048, %s112, [#allocation13], 128, 128, 8
    $region37: #{tpu_custom_call.1} parent=1 // pred_fallthru
      _
    // Predicated region
    $region38: #{tpu_custom_call.1} parent=1 // pred_check
      _
    $region39: #{tpu_custom_call.1} parent=1 // pred_check_branch
      %119 = sbr.rel (0) target = $region41
    $region40: #{tpu_custom_call.1} parent=1 // pred_region
      _
    $region41: #{tpu_custom_call.1} parent=1 // pred_fallthru
      _
    // Predicated region
    $region42: #{tpu_custom_call.1} parent=1 // pred_check
      _
    $region43: #{tpu_custom_call.1} parent=1 // pred_check_branch
      %121 = sbr.rel (0) target = $region45
    $region44: #{tpu_custom_call.1} parent=1 // pred_region
      %123 = vsyncadd [#allocation16], 0
      %s124 = sshll.u32 %s10, 4
      %s125 = int_to_ptr.hbm [resolvable:$true] %s124
      %s126 = sshll.u32 [#allocation15], 4
      %s127 = int_to_ptr.vmem [resolvable:$true] %s126
      %132 = dma.hbm_to_vmem [thread:$0]  %s125, 2048, %s127, [#allocation16], 128, 128, 8
    $region45: #{tpu_custom_call.1} parent=1 // pred_fallthru
      _
    // Predicated region
    $region46: #{tpu_custom_call.1} parent=1 // pred_check
      _
    $region47: #{tpu_custom_call.1} parent=1 // pred_check_branch
      %134 = sbr.rel (0) target = $region49
    $region48: #{tpu_custom_call.1} parent=1 // pred_region
      _
    $region49: #{tpu_custom_call.1} parent=1 // pred_fallthru
      _
    // Predicated region
    $region50: #{tpu_custom_call.1} parent=1 // pred_check
      _
    $region51: #{tpu_custom_call.1} parent=1 // pred_check_branch
      %136 = sbr.rel (0) target = $region53
    $region52: #{tpu_custom_call.1} parent=1 // pred_region
      %138 = dma.done [#allocation4], 1024
    $region53: #{tpu_custom_call.1} parent=1 // pred_fallthru
      _
    // Predicated region
    $region54: #{tpu_custom_call.1} parent=1 // pred_check
      _
    $region55: #{tpu_custom_call.1} parent=1 // pred_check_branch
      %140 = sbr.rel (0) target = $region57
    $region56: #{tpu_custom_call.1} parent=1 // pred_region
      %142 = dma.done [#allocation7], 2048
    $region57: #{tpu_custom_call.1} parent=1 // pred_fallthru
      _
    // Predicated region
    $region58: #{tpu_custom_call.1} parent=1 // pred_check
      _
    $region59: #{tpu_custom_call.1} parent=1 // pred_check_branch
      %144 = sbr.rel (0) target = $region61
    $region60: #{tpu_custom_call.1} parent=1 // pred_region
      %146 = dma.done [#allocation7], 2048
    $region61: #{tpu_custom_call.1} parent=1 // pred_fallthru
      _
    // Predicated region
    $region62: #{tpu_custom_call.1} parent=1 // pred_check
      _
    $region63: #{tpu_custom_call.1} parent=1 // pred_check_branch
      %148 = sbr.rel (0) target = $region65
    $region64: #{tpu_custom_call.1} parent=1 // pred_region
      %150 = dma.done [#allocation10], 2048
    $region65: #{tpu_custom_call.1} parent=1 // pred_fallthru
      _
    // Predicated region
    $region66: #{tpu_custom_call.1} parent=1 // pred_check
      _
    $region67: #{tpu_custom_call.1} parent=1 // pred_check_branch
      %152 = sbr.rel (0) target = $region69
    $region68: #{tpu_custom_call.1} parent=1 // pred_region
      %154 = dma.done [#allocation10], 2048
    $region69: #{tpu_custom_call.1} parent=1 // pred_fallthru
      _
    // Predicated region
    $region70: #{tpu_custom_call.1} parent=1 // pred_check
      _
    $region71: #{tpu_custom_call.1} parent=1 // pred_check_branch
      %156 = sbr.rel (0) target = $region73
    $region72: #{tpu_custom_call.1} parent=1 // pred_region
      %158 = dma.done [#allocation13], 2048
    $region73: #{tpu_custom_call.1} parent=1 // pred_fallthru
      _
    // Predicated region
    $region74: #{tpu_custom_call.1} parent=1 // pred_check
      _
    $region75: #{tpu_custom_call.1} parent=1 // pred_check_branch
      %160 = sbr.rel (0) target = $region77
    $region76: #{tpu_custom_call.1} parent=1 // pred_region
      %162 = dma.done [#allocation13], 2048
    $region77: #{tpu_custom_call.1} parent=1 // pred_fallthru
      _
    // Predicated region
    $region78: #{tpu_custom_call.1} parent=1 // pred_check
      _
    $region79: #{tpu_custom_call.1} parent=1 // pred_check_branch
      %164 = sbr.rel (0) target = $region81
    $region80: #{tpu_custom_call.1} parent=1 // pred_region
      %166 = dma.done [#allocation16], 2048
    $region81: #{tpu_custom_call.1} parent=1 // pred_fallthru
      _
    %v167 = vld [vmem:[#allocation3] sm:$0xff]
    %v168 = vld [vmem:[#allocation3 + $0x8] sm:$0xff]
    %v169 = vld [vmem:[#allocation3 + $0x10] sm:$0xff]
    %v170 = vld [vmem:[#allocation3 + $0x18] sm:$0xff]
    %v171 = vld [vmem:[#allocation3 + $0x20] sm:$0xff]
    %v172 = vld [vmem:[#allocation3 + $0x28] sm:$0xff]
    %v173 = vld [vmem:[#allocation3 + $0x30] sm:$0xff]
    %v174 = vld [vmem:[#allocation3 + $0x38] sm:$0xff]
    %v175 = vld [vmem:[#allocation6] sm:$0xff]
    %v176 = vld [vmem:[#allocation6 + $0x8] sm:$0xff]
    %v177 = vld [vmem:[#allocation6 + $0x10] sm:$0xff]
    %v178 = vld [vmem:[#allocation6 + $0x18] sm:$0xff]
    %v179 = vld [vmem:[#allocation6 + $0x20] sm:$0xff]
    %v180 = vld [vmem:[#allocation6 + $0x28] sm:$0xff]
    %v181 = vld [vmem:[#allocation6 + $0x30] sm:$0xff]
    %v182 = vld [vmem:[#allocation6 + $0x38] sm:$0xff]
    %v183 = vld [vmem:[#allocation6 + $0x40] sm:$0xff]
    %v184 = vld [vmem:[#allocation6 + $0x48] sm:$0xff]
    %v185 = vld [vmem:[#allocation6 + $0x50] sm:$0xff]
    %v186 = vld [vmem:[#allocation6 + $0x58] sm:$0xff]
    %v187 = vld [vmem:[#allocation6 + $0x60] sm:$0xff]
    %v188 = vld [vmem:[#allocation6 + $0x68] sm:$0xff]
    %v189 = vld [vmem:[#allocation6 + $0x70] sm:$0xff]
    %v190 = vld [vmem:[#allocation6 + $0x78] sm:$0xff]
    %v191 = vld [vmem:[%s3] sm:$0x1]
    %v193 = vperm.slane %v191, 0
    %195 = vmatpush.msra.mxu0 %v190
    %196 = vmatpush.msra.mxu0 %v189
    %197 = vmatpush.msra.mxu0 %v188
    %198 = vmatpush.msra.mxu0 %v187
    %199 = vmatpush.msra.mxu0 %v186
    %200 = vmatpush.msra.mxu0 %v185
    %201 = vmatpush.msra.mxu0 %v184
    %202 = vmatpush.msra.mxu0 %v183
    %203 = vmatpush.msra.mxu0 %v182
    %204 = vmatpush.msra.mxu0 %v181
    %205 = vmatpush.msra.mxu0 %v180
    %206 = vmatpush.msra.mxu0 %v179
    %207 = vmatpush.msra.mxu0 %v178
    %208 = vmatpush.msra.mxu0 %v177
    %209 = vmatpush.msra.mxu0 %v176
    %210 = vmatpush.msra.mxu0 %v175
    %211 = vmatmul.f32.gmra.mxu0 %v167
    %v212 = vpop.f32.mrf.mxu0
    %v213 = vadd.f32 %v193, %v212
    %214 = vmatmul.f32.gmra.mxu0 %v168
    %v215 = vpop.f32.mrf.mxu0
    %v216 = vadd.f32 %v193, %v215
    %217 = vmatmul.f32.gmra.mxu0 %v169
    %v218 = vpop.f32.mrf.mxu0
    %v219 = vadd.f32 %v193, %v218
    %220 = vmatmul.f32.gmra.mxu0 %v170
    %v221 = vpop.f32.mrf.mxu0
    %v222 = vadd.f32 %v193, %v221
    %223 = vmatmul.f32.gmra.mxu0 %v171
    %v224 = vpop.f32.mrf.mxu0
    %v225 = vadd.f32 %v193, %v224
    %226 = vmatmul.f32.gmra.mxu0 %v172
    %v227 = vpop.f32.mrf.mxu0
    %v228 = vadd.f32 %v193, %v227
    %229 = vmatmul.f32.gmra.mxu0 %v173
    %v230 = vpop.f32.mrf.mxu0
    %v231 = vadd.f32 %v193, %v230
    %232 = vmatmul.f32.gmra.mxu0 %v174
    %v233 = vpop.f32.mrf.mxu0
    %v234 = vadd.f32 %v193, %v233
    %235 = vdwg.mxu0
    %236 = vst [vmem:[#allocation2] sm:$0xff] %v213
    %237 = vst [vmem:[#allocation2 + $0x8] sm:$0xff] %v216
    %238 = vst [vmem:[#allocation2 + $0x10] sm:$0xff] %v219
    %239 = vst [vmem:[#allocation2 + $0x18] sm:$0xff] %v222
    %240 = vst [vmem:[#allocation2 + $0x20] sm:$0xff] %v225
    %241 = vst [vmem:[#allocation2 + $0x28] sm:$0xff] %v228
    %242 = vst [vmem:[#allocation2 + $0x30] sm:$0xff] %v231
    %243 = vst [vmem:[#allocation2 + $0x38] sm:$0xff] %v234
    %v244 = vld [vmem:[%s6] sm:$0x1]
    %v245 = vld [vmem:[%s9] sm:$0x1]
    %v246 = vld [vmem:[#allocation2] sm:$0xff]
    %v247 = vld [vmem:[#allocation8] sm:$0xff]
    %v248 = vld [vmem:[#allocation8 + $0x8] sm:$0xff]
    %v249 = vld [vmem:[#allocation8 + $0x10] sm:$0xff]
    %v250 = vld [vmem:[#allocation8 + $0x18] sm:$0xff]
    %v251 = vld [vmem:[#allocation8 + $0x20] sm:$0xff]
    %v252 = vld [vmem:[#allocation8 + $0x28] sm:$0xff]
    %v253 = vld [vmem:[#allocation8 + $0x30] sm:$0xff]
    %v254 = vld [vmem:[#allocation8 + $0x38] sm:$0xff]
    %v255 = vld [vmem:[#allocation8 + $0x40] sm:$0xff]
    %v256 = vld [vmem:[#allocation8 + $0x48] sm:$0xff]
    %v257 = vld [vmem:[#allocation8 + $0x50] sm:$0xff]
    %v258 = vld [vmem:[#allocation8 + $0x58] sm:$0xff]
    %v259 = vld [vmem:[#allocation8 + $0x60] sm:$0xff]
    %v260 = vld [vmem:[#allocation8 + $0x68] sm:$0xff]
    %v261 = vld [vmem:[#allocation8 + $0x70] sm:$0xff]
    %v262 = vld [vmem:[#allocation8 + $0x78] sm:$0xff]
    %263 = vmatpush.msra.mxu0 %v262
    %264 = vmatpush.msra.mxu0 %v261
    %265 = vmatpush.msra.mxu0 %v260
    %266 = vmatpush.msra.mxu0 %v259
    %267 = vmatpush.msra.mxu0 %v258
    %268 = vmatpush.msra.mxu0 %v257
    %269 = vmatpush.msra.mxu0 %v256
    %270 = vmatpush.msra.mxu0 %v255
    %271 = vmatpush.msra.mxu0 %v254
    %272 = vmatpush.msra.mxu0 %v253
    %273 = vmatpush.msra.mxu0 %v252
    %274 = vmatpush.msra.mxu0 %v251
    %275 = vmatpush.msra.mxu0 %v250
    %276 = vmatpush.msra.mxu0 %v249
    %277 = vmatpush.msra.mxu0 %v248
    %278 = vmatpush.msra.mxu0 %v247
    %279 = vmatmul.f32.gmra.mxu0 0.0
    %v280 = vpop.f32.mrf.mxu0
    %v281 = vadd.f32 0.0, %v280
    %282 = vdwg.mxu0
    %v283 = vadd.f32 %v246, %v281
    %v284 = vmul.f32 %v283, 0.5
    %v285 = vtanh.pop %v284
    %v286 = vmul.f32 %v285, 0.5
    %v287 = vadd.f32 %v286, 0.5
    %v288 = vtanh.pop %v283
    %290 = vrot.lane.b32.xlu0 %v287, 112
    %v291 = vpop.permute.xlu0 %290
    %v293 = vmul.f32 %v291, 0.0
    %295 = vrot.lane.b32.xlu0 %v288, 96
    %v296 = vpop.permute.xlu0 %295
    %v298 = vmul.f32 %v287, %v296
    %v299 = vadd.f32 %v293, %v298
    %300 = vrot.lane.b32.xlu0 %v287, 80
    %v301 = vpop.permute.xlu0 %300
    %v303 = vtanh.pop %v299
    %v304 = vmul.f32 %v301, %v303
    %v305 = vld [vmem:[#allocation2 + $0x8] sm:$0xff]
    %306 = vmatpush.msra.mxu0 %v262
    %307 = vmatpush.msra.mxu0 %v261
    %308 = vmatpush.msra.mxu0 %v260
    %309 = vmatpush.msra.mxu0 %v259
    %310 = vmatpush.msra.mxu0 %v258
    %311 = vmatpush.msra.mxu0 %v257
    %312 = vmatpush.msra.mxu0 %v256
    %313 = vmatpush.msra.mxu0 %v255
    %314 = vmatpush.msra.mxu0 %v254
    %315 = vmatpush.msra.mxu0 %v253
    %316 = vmatpush.msra.mxu0 %v252
    %317 = vmatpush.msra.mxu0 %v251
    %318 = vmatpush.msra.mxu0 %v250
    %319 = vmatpush.msra.mxu0 %v249
    %320 = vmatpush.msra.mxu0 %v248
    %321 = vmatpush.msra.mxu0 %v247
    %322 = vmatmul.f32.gmra.mxu0 %v304
    %v323 = vpop.f32.mrf.mxu0
    %v324 = vadd.f32 0.0, %v323
    %325 = vdwg.mxu0
    %v326 = vadd.f32 %v305, %v324
    %v327 = vmul.f32 %v326, 0.5
    %v328 = vtanh.pop %v327
    %v329 = vmul.f32 %v328, 0.5
    %v330 = vadd.f32 %v329, 0.5
    %v331 = vtanh.pop %v326
    %333 = vrot.lane.b32.xlu0 %v330, 112
    %v334 = vpop.permute.xlu0 %333
    %v336 = vmul.f32 %v334, %v299
    %338 = vrot.lane.b32.xlu0 %v331, 96
    %v339 = vpop.permute.xlu0 %338
    %v341 = vmul.f32 %v330, %v339
    %v342 = vadd.f32 %v336, %v341
    %343 = vrot.lane.b32.xlu0 %v330, 80
    %v344 = vpop.permute.xlu0 %343
    %v346 = vtanh.pop %v342
    %v347 = vmul.f32 %v344, %v346
    %v348 = vld [vmem:[#allocation9] sm:$0xff]
    %v349 = vld [vmem:[#allocation9 + $0x8] sm:$0xff]
    %v350 = vld [vmem:[#allocation9 + $0x10] sm:$0xff]
    %v351 = vld [vmem:[#allocation9 + $0x18] sm:$0xff]
    %v352 = vld [vmem:[#allocation9 + $0x20] sm:$0xff]
    %v353 = vld [vmem:[#allocation9 + $0x28] sm:$0xff]
    %v354 = vld [vmem:[#allocation9 + $0x30] sm:$0xff]
    %v355 = vld [vmem:[#allocation9 + $0x38] sm:$0xff]
    %v356 = vld [vmem:[#allocation9 + $0x40] sm:$0xff]
    %v357 = vld [vmem:[#allocation9 + $0x48] sm:$0xff]
    %v358 = vld [vmem:[#allocation9 + $0x50] sm:$0xff]
    %v359 = vld [vmem:[#allocation9 + $0x58] sm:$0xff]
    %v360 = vld [vmem:[#allocation9 + $0x60] sm:$0xff]
    %v361 = vld [vmem:[#allocation9 + $0x68] sm:$0xff]
    %v362 = vld [vmem:[#allocation9 + $0x70] sm:$0xff]
    %v363 = vld [vmem:[#allocation9 + $0x78] sm:$0xff]
    %364 = vmatpush.msra.mxu0 %v363
    %365 = vmatpush.msra.mxu0 %v362
    %366 = vmatpush.msra.mxu0 %v361
    %367 = vmatpush.msra.mxu0 %v360
    %368 = vmatpush.msra.mxu0 %v359
    %369 = vmatpush.msra.mxu0 %v358
    %370 = vmatpush.msra.mxu0 %v357
    %371 = vmatpush.msra.mxu0 %v356
    %372 = vmatpush.msra.mxu0 %v355
    %373 = vmatpush.msra.mxu0 %v354
    %374 = vmatpush.msra.mxu0 %v353
    %375 = vmatpush.msra.mxu0 %v352
    %376 = vmatpush.msra.mxu0 %v351
    %377 = vmatpush.msra.mxu0 %v350
    %378 = vmatpush.msra.mxu0 %v349
    %379 = vmatpush.msra.mxu0 %v348
    %380 = vmatmul.f32.gmra.mxu0 %v304
    %v381 = vpop.f32.mrf.mxu0
    %v382 = vadd.f32 0.0, %v381
    %383 = vdwg.mxu0
    %v385 = vperm.slane %v244, 0
    %v387 = vadd.f32 %v385, %v382
    %v388 = vld [vmem:[#allocation11] sm:$0xff]
    %v389 = vld [vmem:[#allocation11 + $0x8] sm:$0xff]
    %v390 = vld [vmem:[#allocation11 + $0x10] sm:$0xff]
    %v391 = vld [vmem:[#allocation11 + $0x18] sm:$0xff]
    %v392 = vld [vmem:[#allocation11 + $0x20] sm:$0xff]
    %v393 = vld [vmem:[#allocation11 + $0x28] sm:$0xff]
    %v394 = vld [vmem:[#allocation11 + $0x30] sm:$0xff]
    %v395 = vld [vmem:[#allocation11 + $0x38] sm:$0xff]
    %v396 = vld [vmem:[#allocation11 + $0x40] sm:$0xff]
    %v397 = vld [vmem:[#allocation11 + $0x48] sm:$0xff]
    %v398 = vld [vmem:[#allocation11 + $0x50] sm:$0xff]
    %v399 = vld [vmem:[#allocation11 + $0x58] sm:$0xff]
    %v400 = vld [vmem:[#allocation11 + $0x60] sm:$0xff]
    %v401 = vld [vmem:[#allocation11 + $0x68] sm:$0xff]
    %v402 = vld [vmem:[#allocation11 + $0x70] sm:$0xff]
    %v403 = vld [vmem:[#allocation11 + $0x78] sm:$0xff]
    %404 = vmatpush.msra.mxu0 %v403
    %405 = vmatpush.msra.mxu0 %v402
    %406 = vmatpush.msra.mxu0 %v401
    %407 = vmatpush.msra.mxu0 %v400
    %408 = vmatpush.msra.mxu0 %v399
    %409 = vmatpush.msra.mxu0 %v398
    %410 = vmatpush.msra.mxu0 %v397
    %411 = vmatpush.msra.mxu0 %v396
    %412 = vmatpush.msra.mxu0 %v395
    %413 = vmatpush.msra.mxu0 %v394
    %414 = vmatpush.msra.mxu0 %v393
    %415 = vmatpush.msra.mxu0 %v392
    %416 = vmatpush.msra.mxu0 %v391
    %417 = vmatpush.msra.mxu0 %v390
    %418 = vmatpush.msra.mxu0 %v389
    %419 = vmatpush.msra.mxu0 %v388
    %420 = vmatmul.f32.gmra.mxu0 0.0
    %v421 = vpop.f32.mrf.mxu0
    %v422 = vadd.f32 0.0, %v421
    %423 = vdwg.mxu0
    %v424 = vadd.f32 %v387, %v422
    %v425 = vmul.f32 %v424, 0.5
    %v426 = vtanh.pop %v425
    %v427 = vmul.f32 %v426, 0.5
    %v428 = vadd.f32 %v427, 0.5
    %v429 = vtanh.pop %v424
    %431 = vrot.lane.b32.xlu0 %v428, 96
    %v432 = vpop.permute.xlu0 %431
    %v434 = vmul.f32 %v432, 0.0
    %436 = vrot.lane.b32.xlu0 %v429, 64
    %v437 = vpop.permute.xlu0 %436
    %v439 = vmul.f32 %v428, %v437
    %v440 = vadd.f32 %v434, %v439
    %441 = vrot.lane.b32.xlu0 %v428, 32
    %v442 = vpop.permute.xlu0 %441
    %v444 = vtanh.pop %v440
    %v445 = vmul.f32 %v442, %v444
    %v446 = vld [vmem:[#allocation2 + $0x10] sm:$0xff]
    %447 = vmatpush.msra.mxu0 %v262
    %448 = vmatpush.msra.mxu0 %v261
    %449 = vmatpush.msra.mxu0 %v260
    %450 = vmatpush.msra.mxu0 %v259
    %451 = vmatpush.msra.mxu0 %v258
    %452 = vmatpush.msra.mxu0 %v257
    %453 = vmatpush.msra.mxu0 %v256
    %454 = vmatpush.msra.mxu0 %v255
    %455 = vmatpush.msra.mxu0 %v254
    %456 = vmatpush.msra.mxu0 %v253
    %457 = vmatpush.msra.mxu0 %v252
    %458 = vmatpush.msra.mxu0 %v251
    %459 = vmatpush.msra.mxu0 %v250
    %460 = vmatpush.msra.mxu0 %v249
    %461 = vmatpush.msra.mxu0 %v248
    %462 = vmatpush.msra.mxu0 %v247
    %463 = vmatmul.f32.gmra.mxu0 %v347
    %v464 = vpop.f32.mrf.mxu0
    %v465 = vadd.f32 0.0, %v464
    %466 = vdwg.mxu0
    %v467 = vadd.f32 %v446, %v465
    %v468 = vmul.f32 %v467, 0.5
    %v469 = vtanh.pop %v468
    %v470 = vmul.f32 %v469, 0.5
    %v471 = vadd.f32 %v470, 0.5
    %v472 = vtanh.pop %v467
    %474 = vrot.lane.b32.xlu0 %v471, 112
    %v475 = vpop.permute.xlu0 %474
    %v477 = vmul.f32 %v475, %v342
    %479 = vrot.lane.b32.xlu0 %v472, 96
    %v480 = vpop.permute.xlu0 %479
    %v482 = vmul.f32 %v471, %v480
    %v483 = vadd.f32 %v477, %v482
    %484 = vrot.lane.b32.xlu0 %v471, 80
    %v485 = vpop.permute.xlu0 %484
    %v487 = vtanh.pop %v483
    %v488 = vmul.f32 %v485, %v487
    %489 = vmatpush.msra.mxu0 %v363
    %490 = vmatpush.msra.mxu0 %v362
    %491 = vmatpush.msra.mxu0 %v361
    %492 = vmatpush.msra.mxu0 %v360
    %493 = vmatpush.msra.mxu0 %v359
    %494 = vmatpush.msra.mxu0 %v358
    %495 = vmatpush.msra.mxu0 %v357
    %496 = vmatpush.msra.mxu0 %v356
    %497 = vmatpush.msra.mxu0 %v355
    %498 = vmatpush.msra.mxu0 %v354
    %499 = vmatpush.msra.mxu0 %v353
    %500 = vmatpush.msra.mxu0 %v352
    %501 = vmatpush.msra.mxu0 %v351
    %502 = vmatpush.msra.mxu0 %v350
    %503 = vmatpush.msra.mxu0 %v349
    %504 = vmatpush.msra.mxu0 %v348
    %505 = vmatmul.f32.gmra.mxu0 %v347
    %v506 = vpop.f32.mrf.mxu0
    %v507 = vadd.f32 0.0, %v506
    %508 = vdwg.mxu0
    %v509 = vadd.f32 %v385, %v507
    %510 = vmatpush.msra.mxu0 %v403
    %511 = vmatpush.msra.mxu0 %v402
    %512 = vmatpush.msra.mxu0 %v401
    %513 = vmatpush.msra.mxu0 %v400
    %514 = vmatpush.msra.mxu0 %v399
    %515 = vmatpush.msra.mxu0 %v398
    %516 = vmatpush.msra.mxu0 %v397
    %517 = vmatpush.msra.mxu0 %v396
    %518 = vmatpush.msra.mxu0 %v395
    %519 = vmatpush.msra.mxu0 %v394
    %520 = vmatpush.msra.mxu0 %v393
    %521 = vmatpush.msra.mxu0 %v392
    %522 = vmatpush.msra.mxu0 %v391
    %523 = vmatpush.msra.mxu0 %v390
    %524 = vmatpush.msra.mxu0 %v389
    %525 = vmatpush.msra.mxu0 %v388
    %526 = vmatmul.f32.gmra.mxu0 %v445
    %v527 = vpop.f32.mrf.mxu0
    %v528 = vadd.f32 0.0, %v527
    %529 = vdwg.mxu0
    %v530 = vadd.f32 %v509, %v528
    %v531 = vmul.f32 %v530, 0.5
    %v532 = vtanh.pop %v531
    %v533 = vmul.f32 %v532, 0.5
    %v534 = vadd.f32 %v533, 0.5
    %v535 = vtanh.pop %v530
    %537 = vrot.lane.b32.xlu0 %v534, 96
    %v538 = vpop.permute.xlu0 %537
    %v540 = vmul.f32 %v538, %v440
    %542 = vrot.lane.b32.xlu0 %v535, 64
    %v543 = vpop.permute.xlu0 %542
    %v545 = vmul.f32 %v534, %v543
    %v546 = vadd.f32 %v540, %v545
    %547 = vrot.lane.b32.xlu0 %v534, 32
    %v548 = vpop.permute.xlu0 %547
    %v550 = vtanh.pop %v546
    %v551 = vmul.f32 %v548, %v550
    %v552 = vld [vmem:[#allocation12] sm:$0xff]
    %v553 = vld [vmem:[#allocation12 + $0x8] sm:$0xff]
    %v554 = vld [vmem:[#allocation12 + $0x10] sm:$0xff]
    %v555 = vld [vmem:[#allocation12 + $0x18] sm:$0xff]
    %v556 = vld [vmem:[#allocation12 + $0x20] sm:$0xff]
    %v557 = vld [vmem:[#allocation12 + $0x28] sm:$0xff]
    %v558 = vld [vmem:[#allocation12 + $0x30] sm:$0xff]
    %v559 = vld [vmem:[#allocation12 + $0x38] sm:$0xff]
    %v560 = vld [vmem:[#allocation12 + $0x40] sm:$0xff]
    %v561 = vld [vmem:[#allocation12 + $0x48] sm:$0xff]
    %v562 = vld [vmem:[#allocation12 + $0x50] sm:$0xff]
    %v563 = vld [vmem:[#allocation12 + $0x58] sm:$0xff]
    %v564 = vld [vmem:[#allocation12 + $0x60] sm:$0xff]
    %v565 = vld [vmem:[#allocation12 + $0x68] sm:$0xff]
    %v566 = vld [vmem:[#allocation12 + $0x70] sm:$0xff]
    %v567 = vld [vmem:[#allocation12 + $0x78] sm:$0xff]
    %568 = vmatpush.msra.mxu0 %v567
    %569 = vmatpush.msra.mxu0 %v566
    %570 = vmatpush.msra.mxu0 %v565
    %571 = vmatpush.msra.mxu0 %v564
    %572 = vmatpush.msra.mxu0 %v563
    %573 = vmatpush.msra.mxu0 %v562
    %574 = vmatpush.msra.mxu0 %v561
    %575 = vmatpush.msra.mxu0 %v560
    %576 = vmatpush.msra.mxu0 %v559
    %577 = vmatpush.msra.mxu0 %v558
    %578 = vmatpush.msra.mxu0 %v557
    %579 = vmatpush.msra.mxu0 %v556
    %580 = vmatpush.msra.mxu0 %v555
    %581 = vmatpush.msra.mxu0 %v554
    %582 = vmatpush.msra.mxu0 %v553
    %583 = vmatpush.msra.mxu0 %v552
    %584 = vmatmul.f32.gmra.mxu0 %v445
    %v585 = vpop.f32.mrf.mxu0
    %v586 = vadd.f32 0.0, %v585
    %587 = vdwg.mxu0
    %v589 = vperm.slane %v245, 0
    %v591 = vadd.f32 %v589, %v586
    %v592 = vld [vmem:[#allocation14] sm:$0xff]
    %v593 = vld [vmem:[#allocation14 + $0x8] sm:$0xff]
    %v594 = vld [vmem:[#allocation14 + $0x10] sm:$0xff]
    %v595 = vld [vmem:[#allocation14 + $0x18] sm:$0xff]
    %v596 = vld [vmem:[#allocation14 + $0x20] sm:$0xff]
    %v597 = vld [vmem:[#allocation14 + $0x28] sm:$0xff]
    %v598 = vld [vmem:[#allocation14 + $0x30] sm:$0xff]
    %v599 = vld [vmem:[#allocation14 + $0x38] sm:$0xff]
    %v600 = vld [vmem:[#allocation14 + $0x40] sm:$0xff]
    %v601 = vld [vmem:[#allocation14 + $0x48] sm:$0xff]
    %v602 = vld [vmem:[#allocation14 + $0x50] sm:$0xff]
    %v603 = vld [vmem:[#allocation14 + $0x58] sm:$0xff]
    %v604 = vld [vmem:[#allocation14 + $0x60] sm:$0xff]
    %v605 = vld [vmem:[#allocation14 + $0x68] sm:$0xff]
    %v606 = vld [vmem:[#allocation14 + $0x70] sm:$0xff]
    %v607 = vld [vmem:[#allocation14 + $0x78] sm:$0xff]
    %608 = vmatpush.msra.mxu0 %v607
    %609 = vmatpush.msra.mxu0 %v606
    %610 = vmatpush.msra.mxu0 %v605
    %611 = vmatpush.msra.mxu0 %v604
    %612 = vmatpush.msra.mxu0 %v603
    %613 = vmatpush.msra.mxu0 %v602
    %614 = vmatpush.msra.mxu0 %v601
    %615 = vmatpush.msra.mxu0 %v600
    %616 = vmatpush.msra.mxu0 %v599
    %617 = vmatpush.msra.mxu0 %v598
    %618 = vmatpush.msra.mxu0 %v597
    %619 = vmatpush.msra.mxu0 %v596
    %620 = vmatpush.msra.mxu0 %v595
    %621 = vmatpush.msra.mxu0 %v594
    %622 = vmatpush.msra.mxu0 %v593
    %623 = vmatpush.msra.mxu0 %v592
    %624 = vmatmul.f32.gmra.mxu0 0.0
    %v625 = vpop.f32.mrf.mxu0
    %v626 = vadd.f32 0.0, %v625
    %627 = vdwg.mxu0
    %v628 = vadd.f32 %v591, %v626
    %v629 = vmul.f32 %v628, 0.5
    %v630 = vtanh.pop %v629
    %v631 = vmul.f32 %v630, 0.5
    %v632 = vadd.f32 %v631, 0.5
    %v633 = vtanh.pop %v628
    %635 = vrot.lane.b32.xlu0 %v632, 96
    %v636 = vpop.permute.xlu0 %635
    %v638 = vmul.f32 %v636, 0.0
    %640 = vrot.lane.b32.xlu0 %v633, 64
    %v641 = vpop.permute.xlu0 %640
    %v643 = vmul.f32 %v632, %v641
    %v644 = vadd.f32 %v638, %v643
    %645 = vrot.lane.b32.xlu0 %v632, 32
    %v646 = vpop.permute.xlu0 %645
    %v648 = vtanh.pop %v644
    %v649 = vmul.f32 %v646, %v648
    %v650 = vld [vmem:[#allocation2 + $0x18] sm:$0xff]
    %651 = vmatpush.msra.mxu0 %v262
    %652 = vmatpush.msra.mxu0 %v261
    %653 = vmatpush.msra.mxu0 %v260
    %654 = vmatpush.msra.mxu0 %v259
    %655 = vmatpush.msra.mxu0 %v258
    %656 = vmatpush.msra.mxu0 %v257
    %657 = vmatpush.msra.mxu0 %v256
    %658 = vmatpush.msra.mxu0 %v255
    %659 = vmatpush.msra.mxu0 %v254
    %660 = vmatpush.msra.mxu0 %v253
    %661 = vmatpush.msra.mxu0 %v252
    %662 = vmatpush.msra.mxu0 %v251
    %663 = vmatpush.msra.mxu0 %v250
    %664 = vmatpush.msra.mxu0 %v249
    %665 = vmatpush.msra.mxu0 %v248
    %666 = vmatpush.msra.mxu0 %v247
    %667 = vmatmul.f32.gmra.mxu0 %v488
    %v668 = vpop.f32.mrf.mxu0
    %v669 = vadd.f32 0.0, %v668
    %670 = vdwg.mxu0
    %v671 = vadd.f32 %v650, %v669
    %v672 = vmul.f32 %v671, 0.5
    %v673 = vtanh.pop %v672
    %v674 = vmul.f32 %v673, 0.5
    %v675 = vadd.f32 %v674, 0.5
    %v676 = vtanh.pop %v671
    %678 = vrot.lane.b32.xlu0 %v675, 112
    %v679 = vpop.permute.xlu0 %678
    %v681 = vmul.f32 %v679, %v483
    %683 = vrot.lane.b32.xlu0 %v676, 96
    %v684 = vpop.permute.xlu0 %683
    %v686 = vmul.f32 %v675, %v684
    %v687 = vadd.f32 %v681, %v686
    %688 = vrot.lane.b32.xlu0 %v675, 80
    %v689 = vpop.permute.xlu0 %688
    %v691 = vtanh.pop %v687
    %v692 = vmul.f32 %v689, %v691
    %693 = vmatpush.msra.mxu0 %v363
    %694 = vmatpush.msra.mxu0 %v362
    %695 = vmatpush.msra.mxu0 %v361
    %696 = vmatpush.msra.mxu0 %v360
    %697 = vmatpush.msra.mxu0 %v359
    %698 = vmatpush.msra.mxu0 %v358
    %699 = vmatpush.msra.mxu0 %v357
    %700 = vmatpush.msra.mxu0 %v356
    %701 = vmatpush.msra.mxu0 %v355
    %702 = vmatpush.msra.mxu0 %v354
    %703 = vmatpush.msra.mxu0 %v353
    %704 = vmatpush.msra.mxu0 %v352
    %705 = vmatpush.msra.mxu0 %v351
    %706 = vmatpush.msra.mxu0 %v350
    %707 = vmatpush.msra.mxu0 %v349
    %708 = vmatpush.msra.mxu0 %v348
    %709 = vmatmul.f32.gmra.mxu0 %v488
    %v710 = vpop.f32.mrf.mxu0
    %v711 = vadd.f32 0.0, %v710
    %712 = vdwg.mxu0
    %v713 = vadd.f32 %v385, %v711
    %714 = vmatpush.msra.mxu0 %v403
    %715 = vmatpush.msra.mxu0 %v402
    %716 = vmatpush.msra.mxu0 %v401
    %717 = vmatpush.msra.mxu0 %v400
    %718 = vmatpush.msra.mxu0 %v399
    %719 = vmatpush.msra.mxu0 %v398
    %720 = vmatpush.msra.mxu0 %v397
    %721 = vmatpush.msra.mxu0 %v396
    %722 = vmatpush.msra.mxu0 %v395
    %723 = vmatpush.msra.mxu0 %v394
    %724 = vmatpush.msra.mxu0 %v393
    %725 = vmatpush.msra.mxu0 %v392
    %726 = vmatpush.msra.mxu0 %v391
    %727 = vmatpush.msra.mxu0 %v390
    %728 = vmatpush.msra.mxu0 %v389
    %729 = vmatpush.msra.mxu0 %v388
    %730 = vmatmul.f32.gmra.mxu0 %v551
    %v731 = vpop.f32.mrf.mxu0
    %v732 = vadd.f32 0.0, %v731
    %733 = vdwg.mxu0
    %v734 = vadd.f32 %v713, %v732
    %v735 = vmul.f32 %v734, 0.5
    %v736 = vtanh.pop %v735
    %v737 = vmul.f32 %v736, 0.5
    %v738 = vadd.f32 %v737, 0.5
    %v739 = vtanh.pop %v734
    %741 = vrot.lane.b32.xlu0 %v738, 96
    %v742 = vpop.permute.xlu0 %741
    %v744 = vmul.f32 %v742, %v546
    %746 = vrot.lane.b32.xlu0 %v739, 64
    %v747 = vpop.permute.xlu0 %746
    %v749 = vmul.f32 %v738, %v747
    %v750 = vadd.f32 %v744, %v749
    %751 = vrot.lane.b32.xlu0 %v738, 32
    %v752 = vpop.permute.xlu0 %751
    %v754 = vtanh.pop %v750
    %v755 = vmul.f32 %v752, %v754
    %756 = vmatpush.msra.mxu0 %v567
    %757 = vmatpush.msra.mxu0 %v566
    %758 = vmatpush.msra.mxu0 %v565
    %759 = vmatpush.msra.mxu0 %v564
    %760 = vmatpush.msra.mxu0 %v563
    %761 = vmatpush.msra.mxu0 %v562
    %762 = vmatpush.msra.mxu0 %v561
    %763 = vmatpush.msra.mxu0 %v560
    %764 = vmatpush.msra.mxu0 %v559
    %765 = vmatpush.msra.mxu0 %v558
    %766 = vmatpush.msra.mxu0 %v557
    %767 = vmatpush.msra.mxu0 %v556
    %768 = vmatpush.msra.mxu0 %v555
    %769 = vmatpush.msra.mxu0 %v554
    %770 = vmatpush.msra.mxu0 %v553
    %771 = vmatpush.msra.mxu0 %v552
    %772 = vmatmul.f32.gmra.mxu0 %v551
    %v773 = vpop.f32.mrf.mxu0
    %v774 = vadd.f32 0.0, %v773
    %775 = vdwg.mxu0
    %v776 = vadd.f32 %v589, %v774
    %777 = vmatpush.msra.mxu0 %v607
    %778 = vmatpush.msra.mxu0 %v606
    %779 = vmatpush.msra.mxu0 %v605
    %780 = vmatpush.msra.mxu0 %v604
    %781 = vmatpush.msra.mxu0 %v603
    %782 = vmatpush.msra.mxu0 %v602
    %783 = vmatpush.msra.mxu0 %v601
    %784 = vmatpush.msra.mxu0 %v600
    %785 = vmatpush.msra.mxu0 %v599
    %786 = vmatpush.msra.mxu0 %v598
    %787 = vmatpush.msra.mxu0 %v597
    %788 = vmatpush.msra.mxu0 %v596
    %789 = vmatpush.msra.mxu0 %v595
    %790 = vmatpush.msra.mxu0 %v594
    %791 = vmatpush.msra.mxu0 %v593
    %792 = vmatpush.msra.mxu0 %v592
    %793 = vmatmul.f32.gmra.mxu0 %v649
    %v794 = vpop.f32.mrf.mxu0
    %v795 = vadd.f32 0.0, %v794
    %796 = vdwg.mxu0
    %v797 = vadd.f32 %v776, %v795
    %v798 = vmul.f32 %v797, 0.5
    %v799 = vtanh.pop %v798
    %v800 = vmul.f32 %v799, 0.5
    %v801 = vadd.f32 %v800, 0.5
    %v802 = vtanh.pop %v797
    %804 = vrot.lane.b32.xlu0 %v801, 96
    %v805 = vpop.permute.xlu0 %804
    %v807 = vmul.f32 %v805, %v644
    %809 = vrot.lane.b32.xlu0 %v802, 64
    %v810 = vpop.permute.xlu0 %809
    %v812 = vmul.f32 %v801, %v810
    %v813 = vadd.f32 %v807, %v812
    %814 = vrot.lane.b32.xlu0 %v801, 32
    %v815 = vpop.permute.xlu0 %814
    %v817 = vtanh.pop %v813
    %v818 = vmul.f32 %v815, %v817
    %v819 = vld [vmem:[#allocation2 + $0x20] sm:$0xff]
    %820 = vmatpush.msra.mxu0 %v262
    %821 = vmatpush.msra.mxu0 %v261
    %822 = vmatpush.msra.mxu0 %v260
    %823 = vmatpush.msra.mxu0 %v259
    %824 = vmatpush.msra.mxu0 %v258
    %825 = vmatpush.msra.mxu0 %v257
    %826 = vmatpush.msra.mxu0 %v256
    %827 = vmatpush.msra.mxu0 %v255
    %828 = vmatpush.msra.mxu0 %v254
    %829 = vmatpush.msra.mxu0 %v253
    %830 = vmatpush.msra.mxu0 %v252
    %831 = vmatpush.msra.mxu0 %v251
    %832 = vmatpush.msra.mxu0 %v250
    %833 = vmatpush.msra.mxu0 %v249
    %834 = vmatpush.msra.mxu0 %v248
    %835 = vmatpush.msra.mxu0 %v247
    %836 = vmatmul.f32.gmra.mxu0 %v692
    %v837 = vpop.f32.mrf.mxu0
    %v838 = vadd.f32 0.0, %v837
    %839 = vdwg.mxu0
    %v840 = vadd.f32 %v819, %v838
    %v841 = vmul.f32 %v840, 0.5
    %v842 = vtanh.pop %v841
    %v843 = vmul.f32 %v842, 0.5
    %v844 = vadd.f32 %v843, 0.5
    %v845 = vtanh.pop %v840
    %847 = vrot.lane.b32.xlu0 %v844, 112
    %v848 = vpop.permute.xlu0 %847
    %v850 = vmul.f32 %v848, %v687
    %852 = vrot.lane.b32.xlu0 %v845, 96
    %v853 = vpop.permute.xlu0 %852
    %v855 = vmul.f32 %v844, %v853
    %v856 = vadd.f32 %v850, %v855
    %857 = vrot.lane.b32.xlu0 %v844, 80
    %v858 = vpop.permute.xlu0 %857
    %v860 = vtanh.pop %v856
    %v861 = vmul.f32 %v858, %v860
    %862 = vmatpush.msra.mxu0 %v363
    %863 = vmatpush.msra.mxu0 %v362
    %864 = vmatpush.msra.mxu0 %v361
    %865 = vmatpush.msra.mxu0 %v360
    %866 = vmatpush.msra.mxu0 %v359
    %867 = vmatpush.msra.mxu0 %v358
    %868 = vmatpush.msra.mxu0 %v357
    %869 = vmatpush.msra.mxu0 %v356
    %870 = vmatpush.msra.mxu0 %v355
    %871 = vmatpush.msra.mxu0 %v354
    %872 = vmatpush.msra.mxu0 %v353
    %873 = vmatpush.msra.mxu0 %v352
    %874 = vmatpush.msra.mxu0 %v351
    %875 = vmatpush.msra.mxu0 %v350
    %876 = vmatpush.msra.mxu0 %v349
    %877 = vmatpush.msra.mxu0 %v348
    %878 = vmatmul.f32.gmra.mxu0 %v692
    %v879 = vpop.f32.mrf.mxu0
    %v880 = vadd.f32 0.0, %v879
    %881 = vdwg.mxu0
    %v882 = vadd.f32 %v385, %v880
    %883 = vmatpush.msra.mxu0 %v403
    %884 = vmatpush.msra.mxu0 %v402
    %885 = vmatpush.msra.mxu0 %v401
    %886 = vmatpush.msra.mxu0 %v400
    %887 = vmatpush.msra.mxu0 %v399
    %888 = vmatpush.msra.mxu0 %v398
    %889 = vmatpush.msra.mxu0 %v397
    %890 = vmatpush.msra.mxu0 %v396
    %891 = vmatpush.msra.mxu0 %v395
    %892 = vmatpush.msra.mxu0 %v394
    %893 = vmatpush.msra.mxu0 %v393
    %894 = vmatpush.msra.mxu0 %v392
    %895 = vmatpush.msra.mxu0 %v391
    %896 = vmatpush.msra.mxu0 %v390
    %897 = vmatpush.msra.mxu0 %v389
    %898 = vmatpush.msra.mxu0 %v388
    %899 = vmatmul.f32.gmra.mxu0 %v755
    %v900 = vpop.f32.mrf.mxu0
    %v901 = vadd.f32 0.0, %v900
    %902 = vdwg.mxu0
    %v903 = vadd.f32 %v882, %v901
    %v904 = vmul.f32 %v903, 0.5
    %v905 = vtanh.pop %v904
    %v906 = vmul.f32 %v905, 0.5
    %v907 = vadd.f32 %v906, 0.5
    %v908 = vtanh.pop %v903
    %910 = vrot.lane.b32.xlu0 %v907, 96
    %v911 = vpop.permute.xlu0 %910
    %v913 = vmul.f32 %v911, %v750
    %915 = vrot.lane.b32.xlu0 %v908, 64
    %v916 = vpop.permute.xlu0 %915
    %v918 = vmul.f32 %v907, %v916
    %v919 = vadd.f32 %v913, %v918
    %920 = vrot.lane.b32.xlu0 %v907, 32
    %v921 = vpop.permute.xlu0 %920
    %v923 = vtanh.pop %v919
    %v924 = vmul.f32 %v921, %v923
    %925 = vmatpush.msra.mxu0 %v567
    %926 = vmatpush.msra.mxu0 %v566
    %927 = vmatpush.msra.mxu0 %v565
    %928 = vmatpush.msra.mxu0 %v564
    %929 = vmatpush.msra.mxu0 %v563
    %930 = vmatpush.msra.mxu0 %v562
    %931 = vmatpush.msra.mxu0 %v561
    %932 = vmatpush.msra.mxu0 %v560
    %933 = vmatpush.msra.mxu0 %v559
    %934 = vmatpush.msra.mxu0 %v558
    %935 = vmatpush.msra.mxu0 %v557
    %936 = vmatpush.msra.mxu0 %v556
    %937 = vmatpush.msra.mxu0 %v555
    %938 = vmatpush.msra.mxu0 %v554
    %939 = vmatpush.msra.mxu0 %v553
    %940 = vmatpush.msra.mxu0 %v552
    %941 = vmatmul.f32.gmra.mxu0 %v755
    %v942 = vpop.f32.mrf.mxu0
    %v943 = vadd.f32 0.0, %v942
    %944 = vdwg.mxu0
    %v945 = vadd.f32 %v589, %v943
    %946 = vmatpush.msra.mxu0 %v607
    %947 = vmatpush.msra.mxu0 %v606
    %948 = vmatpush.msra.mxu0 %v605
    %949 = vmatpush.msra.mxu0 %v604
    %950 = vmatpush.msra.mxu0 %v603
    %951 = vmatpush.msra.mxu0 %v602
    %952 = vmatpush.msra.mxu0 %v601
    %953 = vmatpush.msra.mxu0 %v600
    %954 = vmatpush.msra.mxu0 %v599
    %955 = vmatpush.msra.mxu0 %v598
    %956 = vmatpush.msra.mxu0 %v597
    %957 = vmatpush.msra.mxu0 %v596
    %958 = vmatpush.msra.mxu0 %v595
    %959 = vmatpush.msra.mxu0 %v594
    %960 = vmatpush.msra.mxu0 %v593
    %961 = vmatpush.msra.mxu0 %v592
    %962 = vmatmul.f32.gmra.mxu0 %v818
    %v963 = vpop.f32.mrf.mxu0
    %v964 = vadd.f32 0.0, %v963
    %965 = vdwg.mxu0
    %v966 = vadd.f32 %v945, %v964
    %v967 = vmul.f32 %v966, 0.5
    %v968 = vtanh.pop %v967
    %v969 = vmul.f32 %v968, 0.5
    %v970 = vadd.f32 %v969, 0.5
    %v971 = vtanh.pop %v966
    %973 = vrot.lane.b32.xlu0 %v970, 96
    %v974 = vpop.permute.xlu0 %973
    %v976 = vmul.f32 %v974, %v813
    %978 = vrot.lane.b32.xlu0 %v971, 64
    %v979 = vpop.permute.xlu0 %978
    %v981 = vmul.f32 %v970, %v979
    %v982 = vadd.f32 %v976, %v981
    %983 = vrot.lane.b32.xlu0 %v970, 32
    %v984 = vpop.permute.xlu0 %983
    %v986 = vtanh.pop %v982
    %v987 = vmul.f32 %v984, %v986
    %v988 = vld [vmem:[#allocation2 + $0x28] sm:$0xff]
    %989 = vmatpush.msra.mxu0 %v262
    %990 = vmatpush.msra.mxu0 %v261
    %991 = vmatpush.msra.mxu0 %v260
    %992 = vmatpush.msra.mxu0 %v259
    %993 = vmatpush.msra.mxu0 %v258
    %994 = vmatpush.msra.mxu0 %v257
    %995 = vmatpush.msra.mxu0 %v256
    %996 = vmatpush.msra.mxu0 %v255
    %997 = vmatpush.msra.mxu0 %v254
    %998 = vmatpush.msra.mxu0 %v253
    %999 = vmatpush.msra.mxu0 %v252
    %1000 = vmatpush.msra.mxu0 %v251
    %1001 = vmatpush.msra.mxu0 %v250
    %1002 = vmatpush.msra.mxu0 %v249
    %1003 = vmatpush.msra.mxu0 %v248
    %1004 = vmatpush.msra.mxu0 %v247
    %1005 = vmatmul.f32.gmra.mxu0 %v861
    %v1006 = vpop.f32.mrf.mxu0
    %v1007 = vadd.f32 0.0, %v1006
    %1008 = vdwg.mxu0
    %v1009 = vadd.f32 %v988, %v1007
    %v1010 = vmul.f32 %v1009, 0.5
    %v1011 = vtanh.pop %v1010
    %v1012 = vmul.f32 %v1011, 0.5
    %v1013 = vadd.f32 %v1012, 0.5
    %v1014 = vtanh.pop %v1009
    %1016 = vrot.lane.b32.xlu0 %v1013, 112
    %v1017 = vpop.permute.xlu0 %1016
    %v1019 = vmul.f32 %v1017, %v856
    %1021 = vrot.lane.b32.xlu0 %v1014, 96
    %v1022 = vpop.permute.xlu0 %1021
    %v1024 = vmul.f32 %v1013, %v1022
    %v1025 = vadd.f32 %v1019, %v1024
    %1026 = vrot.lane.b32.xlu0 %v1013, 80
    %v1027 = vpop.permute.xlu0 %1026
    %v1029 = vtanh.pop %v1025
    %v1030 = vmul.f32 %v1027, %v1029
    %1031 = vmatpush.msra.mxu0 %v363
    %1032 = vmatpush.msra.mxu0 %v362
    %1033 = vmatpush.msra.mxu0 %v361
    %1034 = vmatpush.msra.mxu0 %v360
    %1035 = vmatpush.msra.mxu0 %v359
    %1036 = vmatpush.msra.mxu0 %v358
    %1037 = vmatpush.msra.mxu0 %v357
    %1038 = vmatpush.msra.mxu0 %v356
    %1039 = vmatpush.msra.mxu0 %v355
    %1040 = vmatpush.msra.mxu0 %v354
    %1041 = vmatpush.msra.mxu0 %v353
    %1042 = vmatpush.msra.mxu0 %v352
    %1043 = vmatpush.msra.mxu0 %v351
    %1044 = vmatpush.msra.mxu0 %v350
    %1045 = vmatpush.msra.mxu0 %v349
    %1046 = vmatpush.msra.mxu0 %v348
    %1047 = vmatmul.f32.gmra.mxu0 %v861
    %v1048 = vpop.f32.mrf.mxu0
    %v1049 = vadd.f32 0.0, %v1048
    %1050 = vdwg.mxu0
    %v1051 = vadd.f32 %v385, %v1049
    %1052 = vmatpush.msra.mxu0 %v403
    %1053 = vmatpush.msra.mxu0 %v402
    %1054 = vmatpush.msra.mxu0 %v401
    %1055 = vmatpush.msra.mxu0 %v400
    %1056 = vmatpush.msra.mxu0 %v399
    %1057 = vmatpush.msra.mxu0 %v398
    %1058 = vmatpush.msra.mxu0 %v397
    %1059 = vmatpush.msra.mxu0 %v396
    %1060 = vmatpush.msra.mxu0 %v395
    %1061 = vmatpush.msra.mxu0 %v394
    %1062 = vmatpush.msra.mxu0 %v393
    %1063 = vmatpush.msra.mxu0 %v392
    %1064 = vmatpush.msra.mxu0 %v391
    %1065 = vmatpush.msra.mxu0 %v390
    %1066 = vmatpush.msra.mxu0 %v389
    %1067 = vmatpush.msra.mxu0 %v388
    %1068 = vmatmul.f32.gmra.mxu0 %v924
    %v1069 = vpop.f32.mrf.mxu0
    %v1070 = vadd.f32 0.0, %v1069
    %1071 = vdwg.mxu0
    %v1072 = vadd.f32 %v1051, %v1070
    %v1073 = vmul.f32 %v1072, 0.5
    %v1074 = vtanh.pop %v1073
    %v1075 = vmul.f32 %v1074, 0.5
    %v1076 = vadd.f32 %v1075, 0.5
    %v1077 = vtanh.pop %v1072
    %1079 = vrot.lane.b32.xlu0 %v1076, 96
    %v1080 = vpop.permute.xlu0 %1079
    %v1082 = vmul.f32 %v1080, %v919
    %1084 = vrot.lane.b32.xlu0 %v1077, 64
    %v1085 = vpop.permute.xlu0 %1084
    %v1087 = vmul.f32 %v1076, %v1085
    %v1088 = vadd.f32 %v1082, %v1087
    %1089 = vrot.lane.b32.xlu0 %v1076, 32
    %v1090 = vpop.permute.xlu0 %1089
    %v1092 = vtanh.pop %v1088
    %v1093 = vmul.f32 %v1090, %v1092
    %1094 = vmatpush.msra.mxu0 %v567
    %1095 = vmatpush.msra.mxu0 %v566
    %1096 = vmatpush.msra.mxu0 %v565
    %1097 = vmatpush.msra.mxu0 %v564
    %1098 = vmatpush.msra.mxu0 %v563
    %1099 = vmatpush.msra.mxu0 %v562
    %1100 = vmatpush.msra.mxu0 %v561
    %1101 = vmatpush.msra.mxu0 %v560
    %1102 = vmatpush.msra.mxu0 %v559
    %1103 = vmatpush.msra.mxu0 %v558
    %1104 = vmatpush.msra.mxu0 %v557
    %1105 = vmatpush.msra.mxu0 %v556
    %1106 = vmatpush.msra.mxu0 %v555
    %1107 = vmatpush.msra.mxu0 %v554
    %1108 = vmatpush.msra.mxu0 %v553
    %1109 = vmatpush.msra.mxu0 %v552
    %1110 = vmatmul.f32.gmra.mxu0 %v924
    %v1111 = vpop.f32.mrf.mxu0
    %v1112 = vadd.f32 0.0, %v1111
    %1113 = vdwg.mxu0
    %v1114 = vadd.f32 %v589, %v1112
    %1115 = vmatpush.msra.mxu0 %v607
    %1116 = vmatpush.msra.mxu0 %v606
    %1117 = vmatpush.msra.mxu0 %v605
    %1118 = vmatpush.msra.mxu0 %v604
    %1119 = vmatpush.msra.mxu0 %v603
    %1120 = vmatpush.msra.mxu0 %v602
    %1121 = vmatpush.msra.mxu0 %v601
    %1122 = vmatpush.msra.mxu0 %v600
    %1123 = vmatpush.msra.mxu0 %v599
    %1124 = vmatpush.msra.mxu0 %v598
    %1125 = vmatpush.msra.mxu0 %v597
    %1126 = vmatpush.msra.mxu0 %v596
    %1127 = vmatpush.msra.mxu0 %v595
    %1128 = vmatpush.msra.mxu0 %v594
    %1129 = vmatpush.msra.mxu0 %v593
    %1130 = vmatpush.msra.mxu0 %v592
    %1131 = vmatmul.f32.gmra.mxu0 %v987
    %v1132 = vpop.f32.mrf.mxu0
    %v1133 = vadd.f32 0.0, %v1132
    %1134 = vdwg.mxu0
    %v1135 = vadd.f32 %v1114, %v1133
    %v1136 = vmul.f32 %v1135, 0.5
    %v1137 = vtanh.pop %v1136
    %v1138 = vmul.f32 %v1137, 0.5
    %v1139 = vadd.f32 %v1138, 0.5
    %v1140 = vtanh.pop %v1135
    %1142 = vrot.lane.b32.xlu0 %v1139, 96
    %v1143 = vpop.permute.xlu0 %1142
    %v1145 = vmul.f32 %v1143, %v982
    %1147 = vrot.lane.b32.xlu0 %v1140, 64
    %v1148 = vpop.permute.xlu0 %1147
    %v1150 = vmul.f32 %v1139, %v1148
    %v1151 = vadd.f32 %v1145, %v1150
    %1152 = vrot.lane.b32.xlu0 %v1139, 32
    %v1153 = vpop.permute.xlu0 %1152
    %v1155 = vtanh.pop %v1151
    %v1156 = vmul.f32 %v1153, %v1155
    %v1157 = vld [vmem:[#allocation2 + $0x30] sm:$0xff]
    %1158 = vmatpush.msra.mxu0 %v262
    %1159 = vmatpush.msra.mxu0 %v261
    %1160 = vmatpush.msra.mxu0 %v260
    %1161 = vmatpush.msra.mxu0 %v259
    %1162 = vmatpush.msra.mxu0 %v258
    %1163 = vmatpush.msra.mxu0 %v257
    %1164 = vmatpush.msra.mxu0 %v256
    %1165 = vmatpush.msra.mxu0 %v255
    %1166 = vmatpush.msra.mxu0 %v254
    %1167 = vmatpush.msra.mxu0 %v253
    %1168 = vmatpush.msra.mxu0 %v252
    %1169 = vmatpush.msra.mxu0 %v251
    %1170 = vmatpush.msra.mxu0 %v250
    %1171 = vmatpush.msra.mxu0 %v249
    %1172 = vmatpush.msra.mxu0 %v248
    %1173 = vmatpush.msra.mxu0 %v247
    %1174 = vmatmul.f32.gmra.mxu0 %v1030
    %v1175 = vpop.f32.mrf.mxu0
    %v1176 = vadd.f32 0.0, %v1175
    %1177 = vdwg.mxu0
    %v1178 = vadd.f32 %v1157, %v1176
    %v1179 = vmul.f32 %v1178, 0.5
    %v1180 = vtanh.pop %v1179
    %v1181 = vmul.f32 %v1180, 0.5
    %v1182 = vadd.f32 %v1181, 0.5
    %v1183 = vtanh.pop %v1178
    %1185 = vrot.lane.b32.xlu0 %v1182, 112
    %v1186 = vpop.permute.xlu0 %1185
    %v1188 = vmul.f32 %v1186, %v1025
    %1190 = vrot.lane.b32.xlu0 %v1183, 96
    %v1191 = vpop.permute.xlu0 %1190
    %v1193 = vmul.f32 %v1182, %v1191
    %v1194 = vadd.f32 %v1188, %v1193
    %1195 = vrot.lane.b32.xlu0 %v1182, 80
    %v1196 = vpop.permute.xlu0 %1195
    %v1198 = vtanh.pop %v1194
    %v1199 = vmul.f32 %v1196, %v1198
    %1200 = vmatpush.msra.mxu0 %v363
    %1201 = vmatpush.msra.mxu0 %v362
    %1202 = vmatpush.msra.mxu0 %v361
    %1203 = vmatpush.msra.mxu0 %v360
    %1204 = vmatpush.msra.mxu0 %v359
    %1205 = vmatpush.msra.mxu0 %v358
    %1206 = vmatpush.msra.mxu0 %v357
    %1207 = vmatpush.msra.mxu0 %v356
    %1208 = vmatpush.msra.mxu0 %v355
    %1209 = vmatpush.msra.mxu0 %v354
    %1210 = vmatpush.msra.mxu0 %v353
    %1211 = vmatpush.msra.mxu0 %v352
    %1212 = vmatpush.msra.mxu0 %v351
    %1213 = vmatpush.msra.mxu0 %v350
    %1214 = vmatpush.msra.mxu0 %v349
    %1215 = vmatpush.msra.mxu0 %v348
    %1216 = vmatmul.f32.gmra.mxu0 %v1030
    %v1217 = vpop.f32.mrf.mxu0
    %v1218 = vadd.f32 0.0, %v1217
    %1219 = vdwg.mxu0
    %v1220 = vadd.f32 %v385, %v1218
    %1221 = vmatpush.msra.mxu0 %v403
    %1222 = vmatpush.msra.mxu0 %v402
    %1223 = vmatpush.msra.mxu0 %v401
    %1224 = vmatpush.msra.mxu0 %v400
    %1225 = vmatpush.msra.mxu0 %v399
    %1226 = vmatpush.msra.mxu0 %v398
    %1227 = vmatpush.msra.mxu0 %v397
    %1228 = vmatpush.msra.mxu0 %v396
    %1229 = vmatpush.msra.mxu0 %v395
    %1230 = vmatpush.msra.mxu0 %v394
    %1231 = vmatpush.msra.mxu0 %v393
    %1232 = vmatpush.msra.mxu0 %v392
    %1233 = vmatpush.msra.mxu0 %v391
    %1234 = vmatpush.msra.mxu0 %v390
    %1235 = vmatpush.msra.mxu0 %v389
    %1236 = vmatpush.msra.mxu0 %v388
    %1237 = vmatmul.f32.gmra.mxu0 %v1093
    %v1238 = vpop.f32.mrf.mxu0
    %v1239 = vadd.f32 0.0, %v1238
    %1240 = vdwg.mxu0
    %v1241 = vadd.f32 %v1220, %v1239
    %v1242 = vmul.f32 %v1241, 0.5
    %v1243 = vtanh.pop %v1242
    %v1244 = vmul.f32 %v1243, 0.5
    %v1245 = vadd.f32 %v1244, 0.5
    %v1246 = vtanh.pop %v1241
    %1248 = vrot.lane.b32.xlu0 %v1245, 96
    %v1249 = vpop.permute.xlu0 %1248
    %v1251 = vmul.f32 %v1249, %v1088
    %1253 = vrot.lane.b32.xlu0 %v1246, 64
    %v1254 = vpop.permute.xlu0 %1253
    %v1256 = vmul.f32 %v1245, %v1254
    %v1257 = vadd.f32 %v1251, %v1256
    %1258 = vrot.lane.b32.xlu0 %v1245, 32
    %v1259 = vpop.permute.xlu0 %1258
    %v1261 = vtanh.pop %v1257
    %v1262 = vmul.f32 %v1259, %v1261
    %1263 = vmatpush.msra.mxu0 %v567
    %1264 = vmatpush.msra.mxu0 %v566
    %1265 = vmatpush.msra.mxu0 %v565
    %1266 = vmatpush.msra.mxu0 %v564
    %1267 = vmatpush.msra.mxu0 %v563
    %1268 = vmatpush.msra.mxu0 %v562
    %1269 = vmatpush.msra.mxu0 %v561
    %1270 = vmatpush.msra.mxu0 %v560
    %1271 = vmatpush.msra.mxu0 %v559
    %1272 = vmatpush.msra.mxu0 %v558
    %1273 = vmatpush.msra.mxu0 %v557
    %1274 = vmatpush.msra.mxu0 %v556
    %1275 = vmatpush.msra.mxu0 %v555
    %1276 = vmatpush.msra.mxu0 %v554
    %1277 = vmatpush.msra.mxu0 %v553
    %1278 = vmatpush.msra.mxu0 %v552
    %1279 = vmatmul.f32.gmra.mxu0 %v1093
    %v1280 = vpop.f32.mrf.mxu0
    %v1281 = vadd.f32 0.0, %v1280
    %1282 = vdwg.mxu0
    %v1283 = vadd.f32 %v589, %v1281
    %1284 = vmatpush.msra.mxu0 %v607
    %1285 = vmatpush.msra.mxu0 %v606
    %1286 = vmatpush.msra.mxu0 %v605
    %1287 = vmatpush.msra.mxu0 %v604
    %1288 = vmatpush.msra.mxu0 %v603
    %1289 = vmatpush.msra.mxu0 %v602
    %1290 = vmatpush.msra.mxu0 %v601
    %1291 = vmatpush.msra.mxu0 %v600
    %1292 = vmatpush.msra.mxu0 %v599
    %1293 = vmatpush.msra.mxu0 %v598
    %1294 = vmatpush.msra.mxu0 %v597
    %1295 = vmatpush.msra.mxu0 %v596
    %1296 = vmatpush.msra.mxu0 %v595
    %1297 = vmatpush.msra.mxu0 %v594
    %1298 = vmatpush.msra.mxu0 %v593
    %1299 = vmatpush.msra.mxu0 %v592
    %1300 = vmatmul.f32.gmra.mxu0 %v1156
    %v1301 = vpop.f32.mrf.mxu0
    %v1302 = vadd.f32 0.0, %v1301
    %1303 = vdwg.mxu0
    %v1304 = vadd.f32 %v1283, %v1302
    %v1305 = vmul.f32 %v1304, 0.5
    %v1306 = vtanh.pop %v1305
    %v1307 = vmul.f32 %v1306, 0.5
    %v1308 = vadd.f32 %v1307, 0.5
    %v1309 = vtanh.pop %v1304
    %1311 = vrot.lane.b32.xlu0 %v1308, 96
    %v1312 = vpop.permute.xlu0 %1311
    %v1314 = vmul.f32 %v1312, %v1151
    %1316 = vrot.lane.b32.xlu0 %v1309, 64
    %v1317 = vpop.permute.xlu0 %1316
    %v1319 = vmul.f32 %v1308, %v1317
    %v1320 = vadd.f32 %v1314, %v1319
    %1321 = vrot.lane.b32.xlu0 %v1308, 32
    %v1322 = vpop.permute.xlu0 %1321
    %v1324 = vtanh.pop %v1320
    %v1325 = vmul.f32 %v1322, %v1324
    %v1326 = vld [vmem:[#allocation2 + $0x38] sm:$0xff]
    %1327 = vmatpush.msra.mxu0 %v262
    %1328 = vmatpush.msra.mxu0 %v261
    %1329 = vmatpush.msra.mxu0 %v260
    %1330 = vmatpush.msra.mxu0 %v259
    %1331 = vmatpush.msra.mxu0 %v258
    %1332 = vmatpush.msra.mxu0 %v257
    %1333 = vmatpush.msra.mxu0 %v256
    %1334 = vmatpush.msra.mxu0 %v255
    %1335 = vmatpush.msra.mxu0 %v254
    %1336 = vmatpush.msra.mxu0 %v253
    %1337 = vmatpush.msra.mxu0 %v252
    %1338 = vmatpush.msra.mxu0 %v251
    %1339 = vmatpush.msra.mxu0 %v250
    %1340 = vmatpush.msra.mxu0 %v249
    %1341 = vmatpush.msra.mxu0 %v248
    %1342 = vmatpush.msra.mxu0 %v247
    %1343 = vmatmul.f32.gmra.mxu0 %v1199
    %v1344 = vpop.f32.mrf.mxu0
    %v1345 = vadd.f32 0.0, %v1344
    %1346 = vdwg.mxu0
    %v1347 = vadd.f32 %v1326, %v1345
    %v1348 = vmul.f32 %v1347, 0.5
    %v1349 = vtanh.pop %v1348
    %v1350 = vmul.f32 %v1349, 0.5
    %v1351 = vadd.f32 %v1350, 0.5
    %v1352 = vtanh.pop %v1347
    %1354 = vrot.lane.b32.xlu0 %v1351, 112
    %v1355 = vpop.permute.xlu0 %1354
    %v1357 = vmul.f32 %v1355, %v1194
    %1359 = vrot.lane.b32.xlu0 %v1352, 96
    %v1360 = vpop.permute.xlu0 %1359
    %v1362 = vmul.f32 %v1351, %v1360
    %v1363 = vadd.f32 %v1357, %v1362
    %1364 = vrot.lane.b32.xlu0 %v1351, 80
    %v1365 = vpop.permute.xlu0 %1364
    %v1367 = vtanh.pop %v1363
    %v1368 = vmul.f32 %v1365, %v1367
    %1369 = vmatpush.msra.mxu0 %v363
    %1370 = vmatpush.msra.mxu0 %v362
    %1371 = vmatpush.msra.mxu0 %v361
    %1372 = vmatpush.msra.mxu0 %v360
    %1373 = vmatpush.msra.mxu0 %v359
    %1374 = vmatpush.msra.mxu0 %v358
    %1375 = vmatpush.msra.mxu0 %v357
    %1376 = vmatpush.msra.mxu0 %v356
    %1377 = vmatpush.msra.mxu0 %v355
    %1378 = vmatpush.msra.mxu0 %v354
    %1379 = vmatpush.msra.mxu0 %v353
    %1380 = vmatpush.msra.mxu0 %v352
    %1381 = vmatpush.msra.mxu0 %v351
    %1382 = vmatpush.msra.mxu0 %v350
    %1383 = vmatpush.msra.mxu0 %v349
    %1384 = vmatpush.msra.mxu0 %v348
    %1385 = vmatmul.f32.gmra.mxu0 %v1199
    %v1386 = vpop.f32.mrf.mxu0
    %v1387 = vadd.f32 0.0, %v1386
    %1388 = vdwg.mxu0
    %v1389 = vadd.f32 %v385, %v1387
    %1390 = vmatpush.msra.mxu0 %v403
    %1391 = vmatpush.msra.mxu0 %v402
    %1392 = vmatpush.msra.mxu0 %v401
    %1393 = vmatpush.msra.mxu0 %v400
    %1394 = vmatpush.msra.mxu0 %v399
    %1395 = vmatpush.msra.mxu0 %v398
    %1396 = vmatpush.msra.mxu0 %v397
    %1397 = vmatpush.msra.mxu0 %v396
    %1398 = vmatpush.msra.mxu0 %v395
    %1399 = vmatpush.msra.mxu0 %v394
    %1400 = vmatpush.msra.mxu0 %v393
    %1401 = vmatpush.msra.mxu0 %v392
    %1402 = vmatpush.msra.mxu0 %v391
    %1403 = vmatpush.msra.mxu0 %v390
    %1404 = vmatpush.msra.mxu0 %v389
    %1405 = vmatpush.msra.mxu0 %v388
    %1406 = vmatmul.f32.gmra.mxu0 %v1262
    %v1407 = vpop.f32.mrf.mxu0
    %v1408 = vadd.f32 0.0, %v1407
    %1409 = vdwg.mxu0
    %v1410 = vadd.f32 %v1389, %v1408
    %v1411 = vmul.f32 %v1410, 0.5
    %v1412 = vtanh.pop %v1411
    %v1413 = vmul.f32 %v1412, 0.5
    %v1414 = vadd.f32 %v1413, 0.5
    %v1415 = vtanh.pop %v1410
    %1417 = vrot.lane.b32.xlu0 %v1414, 96
    %v1418 = vpop.permute.xlu0 %1417
    %v1420 = vmul.f32 %v1418, %v1257
    %1422 = vrot.lane.b32.xlu0 %v1415, 64
    %v1423 = vpop.permute.xlu0 %1422
    %v1425 = vmul.f32 %v1414, %v1423
    %v1426 = vadd.f32 %v1420, %v1425
    %1427 = vrot.lane.b32.xlu0 %v1414, 32
    %v1428 = vpop.permute.xlu0 %1427
    %v1430 = vtanh.pop %v1426
    %v1431 = vmul.f32 %v1428, %v1430
    %1432 = vmatpush.msra.mxu0 %v567
    %1433 = vmatpush.msra.mxu0 %v566
    %1434 = vmatpush.msra.mxu0 %v565
    %1435 = vmatpush.msra.mxu0 %v564
    %1436 = vmatpush.msra.mxu0 %v563
    %1437 = vmatpush.msra.mxu0 %v562
    %1438 = vmatpush.msra.mxu0 %v561
    %1439 = vmatpush.msra.mxu0 %v560
    %1440 = vmatpush.msra.mxu0 %v559
    %1441 = vmatpush.msra.mxu0 %v558
    %1442 = vmatpush.msra.mxu0 %v557
    %1443 = vmatpush.msra.mxu0 %v556
    %1444 = vmatpush.msra.mxu0 %v555
    %1445 = vmatpush.msra.mxu0 %v554
    %1446 = vmatpush.msra.mxu0 %v553
    %1447 = vmatpush.msra.mxu0 %v552
    %1448 = vmatmul.f32.gmra.mxu0 %v1262
    %v1449 = vpop.f32.mrf.mxu0
    %v1450 = vadd.f32 0.0, %v1449
    %1451 = vdwg.mxu0
    %v1452 = vadd.f32 %v589, %v1450
    %1453 = vmatpush.msra.mxu0 %v607
    %1454 = vmatpush.msra.mxu0 %v606
    %1455 = vmatpush.msra.mxu0 %v605
    %1456 = vmatpush.msra.mxu0 %v604
    %1457 = vmatpush.msra.mxu0 %v603
    %1458 = vmatpush.msra.mxu0 %v602
    %1459 = vmatpush.msra.mxu0 %v601
    %1460 = vmatpush.msra.mxu0 %v600
    %1461 = vmatpush.msra.mxu0 %v599
    %1462 = vmatpush.msra.mxu0 %v598
    %1463 = vmatpush.msra.mxu0 %v597
    %1464 = vmatpush.msra.mxu0 %v596
    %1465 = vmatpush.msra.mxu0 %v595
    %1466 = vmatpush.msra.mxu0 %v594
    %1467 = vmatpush.msra.mxu0 %v593
    %1468 = vmatpush.msra.mxu0 %v592
    %1469 = vmatmul.f32.gmra.mxu0 %v1325
    %v1470 = vpop.f32.mrf.mxu0
    %v1471 = vadd.f32 0.0, %v1470
    %1472 = vdwg.mxu0
    %v1473 = vadd.f32 %v1452, %v1471
    %v1474 = vmul.f32 %v1473, 0.5
    %v1475 = vtanh.pop %v1474
    %v1476 = vmul.f32 %v1475, 0.5
    %v1477 = vadd.f32 %v1476, 0.5
    %v1478 = vtanh.pop %v1473
    %1480 = vrot.lane.b32.xlu0 %v1477, 96
    %v1481 = vpop.permute.xlu0 %1480
    %v1483 = vmul.f32 %v1481, %v1320
    %1485 = vrot.lane.b32.xlu0 %v1478, 64
    %v1486 = vpop.permute.xlu0 %1485
    %v1488 = vmul.f32 %v1477, %v1486
    %v1489 = vadd.f32 %v1483, %v1488
    %1490 = vrot.lane.b32.xlu0 %v1477, 32
    %v1491 = vpop.permute.xlu0 %1490
    %v1493 = vtanh.pop %v1489
    %v1494 = vmul.f32 %v1491, %v1493
    %1495 = vmatpush.msra.mxu0 %v363
    %1496 = vmatpush.msra.mxu0 %v362
    %1497 = vmatpush.msra.mxu0 %v361
    %1498 = vmatpush.msra.mxu0 %v360
    %1499 = vmatpush.msra.mxu0 %v359
    %1500 = vmatpush.msra.mxu0 %v358
    %1501 = vmatpush.msra.mxu0 %v357
    %1502 = vmatpush.msra.mxu0 %v356
    %1503 = vmatpush.msra.mxu0 %v355
    %1504 = vmatpush.msra.mxu0 %v354
    %1505 = vmatpush.msra.mxu0 %v353
    %1506 = vmatpush.msra.mxu0 %v352
    %1507 = vmatpush.msra.mxu0 %v351
    %1508 = vmatpush.msra.mxu0 %v350
    %1509 = vmatpush.msra.mxu0 %v349
    %1510 = vmatpush.msra.mxu0 %v348
    %1511 = vmatmul.f32.gmra.mxu0 %v1368
    %v1512 = vpop.f32.mrf.mxu0
    %v1513 = vadd.f32 0.0, %v1512
    %1514 = vdwg.mxu0
    %v1515 = vadd.f32 %v385, %v1513
    %1516 = vmatpush.msra.mxu0 %v403
    %1517 = vmatpush.msra.mxu0 %v402
    %1518 = vmatpush.msra.mxu0 %v401
    %1519 = vmatpush.msra.mxu0 %v400
    %1520 = vmatpush.msra.mxu0 %v399
    %1521 = vmatpush.msra.mxu0 %v398
    %1522 = vmatpush.msra.mxu0 %v397
    %1523 = vmatpush.msra.mxu0 %v396
    %1524 = vmatpush.msra.mxu0 %v395
    %1525 = vmatpush.msra.mxu0 %v394
    %1526 = vmatpush.msra.mxu0 %v393
    %1527 = vmatpush.msra.mxu0 %v392
    %1528 = vmatpush.msra.mxu0 %v391
    %1529 = vmatpush.msra.mxu0 %v390
    %1530 = vmatpush.msra.mxu0 %v389
    %1531 = vmatpush.msra.mxu0 %v388
    %1532 = vmatmul.f32.gmra.mxu0 %v1431
    %v1533 = vpop.f32.mrf.mxu0
    %v1534 = vadd.f32 0.0, %v1533
    %1535 = vdwg.mxu0
    %v1536 = vadd.f32 %v1515, %v1534
    %v1537 = vmul.f32 %v1536, 0.5
    %v1538 = vtanh.pop %v1537
    %v1539 = vmul.f32 %v1538, 0.5
    %v1540 = vadd.f32 %v1539, 0.5
    %v1541 = vtanh.pop %v1536
    %1543 = vrot.lane.b32.xlu0 %v1540, 96
    %v1544 = vpop.permute.xlu0 %1543
    %v1546 = vmul.f32 %v1544, %v1426
    %1548 = vrot.lane.b32.xlu0 %v1541, 64
    %v1549 = vpop.permute.xlu0 %1548
    %v1551 = vmul.f32 %v1540, %v1549
    %v1552 = vadd.f32 %v1546, %v1551
    %1553 = vrot.lane.b32.xlu0 %v1540, 32
    %v1554 = vpop.permute.xlu0 %1553
    %v1556 = vtanh.pop %v1552
    %v1557 = vmul.f32 %v1554, %v1556
    %1558 = vmatpush.msra.mxu0 %v567
    %1559 = vmatpush.msra.mxu0 %v566
    %1560 = vmatpush.msra.mxu0 %v565
    %1561 = vmatpush.msra.mxu0 %v564
    %1562 = vmatpush.msra.mxu0 %v563
    %1563 = vmatpush.msra.mxu0 %v562
    %1564 = vmatpush.msra.mxu0 %v561
    %1565 = vmatpush.msra.mxu0 %v560
    %1566 = vmatpush.msra.mxu0 %v559
    %1567 = vmatpush.msra.mxu0 %v558
    %1568 = vmatpush.msra.mxu0 %v557
    %1569 = vmatpush.msra.mxu0 %v556
    %1570 = vmatpush.msra.mxu0 %v555
    %1571 = vmatpush.msra.mxu0 %v554
    %1572 = vmatpush.msra.mxu0 %v553
    %1573 = vmatpush.msra.mxu0 %v552
    %1574 = vmatmul.f32.gmra.mxu0 %v1431
    %v1575 = vpop.f32.mrf.mxu0
    %v1576 = vadd.f32 0.0, %v1575
    %1577 = vdwg.mxu0
    %v1578 = vadd.f32 %v589, %v1576
    %1579 = vmatpush.msra.mxu0 %v607
    %1580 = vmatpush.msra.mxu0 %v606
    %1581 = vmatpush.msra.mxu0 %v605
    %1582 = vmatpush.msra.mxu0 %v604
    %1583 = vmatpush.msra.mxu0 %v603
    %1584 = vmatpush.msra.mxu0 %v602
    %1585 = vmatpush.msra.mxu0 %v601
    %1586 = vmatpush.msra.mxu0 %v600
    %1587 = vmatpush.msra.mxu0 %v599
    %1588 = vmatpush.msra.mxu0 %v598
    %1589 = vmatpush.msra.mxu0 %v597
    %1590 = vmatpush.msra.mxu0 %v596
    %1591 = vmatpush.msra.mxu0 %v595
    %1592 = vmatpush.msra.mxu0 %v594
    %1593 = vmatpush.msra.mxu0 %v593
    %1594 = vmatpush.msra.mxu0 %v592
    %1595 = vmatmul.f32.gmra.mxu0 %v1494
    %v1596 = vpop.f32.mrf.mxu0
    %v1597 = vadd.f32 0.0, %v1596
    %1598 = vdwg.mxu0
    %v1599 = vadd.f32 %v1578, %v1597
    %v1600 = vmul.f32 %v1599, 0.5
    %v1601 = vtanh.pop %v1600
    %v1602 = vmul.f32 %v1601, 0.5
    %v1603 = vadd.f32 %v1602, 0.5
    %v1604 = vtanh.pop %v1599
    %1606 = vrot.lane.b32.xlu0 %v1603, 96
    %v1607 = vpop.permute.xlu0 %1606
    %v1609 = vmul.f32 %v1607, %v1489
    %1611 = vrot.lane.b32.xlu0 %v1604, 64
    %v1612 = vpop.permute.xlu0 %1611
    %v1614 = vmul.f32 %v1603, %v1612
    %v1615 = vadd.f32 %v1609, %v1614
    %1616 = vrot.lane.b32.xlu0 %v1603, 32
    %v1617 = vpop.permute.xlu0 %1616
    %v1619 = vtanh.pop %v1615
    %v1620 = vmul.f32 %v1617, %v1619
    %1621 = vmatpush.msra.mxu0 %v567
    %1622 = vmatpush.msra.mxu0 %v566
    %1623 = vmatpush.msra.mxu0 %v565
    %1624 = vmatpush.msra.mxu0 %v564
    %1625 = vmatpush.msra.mxu0 %v563
    %1626 = vmatpush.msra.mxu0 %v562
    %1627 = vmatpush.msra.mxu0 %v561
    %1628 = vmatpush.msra.mxu0 %v560
    %1629 = vmatpush.msra.mxu0 %v559
    %1630 = vmatpush.msra.mxu0 %v558
    %1631 = vmatpush.msra.mxu0 %v557
    %1632 = vmatpush.msra.mxu0 %v556
    %1633 = vmatpush.msra.mxu0 %v555
    %1634 = vmatpush.msra.mxu0 %v554
    %1635 = vmatpush.msra.mxu0 %v553
    %1636 = vmatpush.msra.mxu0 %v552
    %1637 = vmatmul.f32.gmra.mxu0 %v1557
    %v1638 = vpop.f32.mrf.mxu0
    %v1639 = vadd.f32 0.0, %v1638
    %1640 = vdwg.mxu0
    %v1641 = vadd.f32 %v589, %v1639
    %1642 = vmatpush.msra.mxu0 %v607
    %1643 = vmatpush.msra.mxu0 %v606
    %1644 = vmatpush.msra.mxu0 %v605
    %1645 = vmatpush.msra.mxu0 %v604
    %1646 = vmatpush.msra.mxu0 %v603
    %1647 = vmatpush.msra.mxu0 %v602
    %1648 = vmatpush.msra.mxu0 %v601
    %1649 = vmatpush.msra.mxu0 %v600
    %1650 = vmatpush.msra.mxu0 %v599
    %1651 = vmatpush.msra.mxu0 %v598
    %1652 = vmatpush.msra.mxu0 %v597
    %1653 = vmatpush.msra.mxu0 %v596
    %1654 = vmatpush.msra.mxu0 %v595
    %1655 = vmatpush.msra.mxu0 %v594
    %1656 = vmatpush.msra.mxu0 %v593
    %1657 = vmatpush.msra.mxu0 %v592
    %1658 = vmatmul.f32.gmra.mxu0 %v1620
    %v1659 = vpop.f32.mrf.mxu0
    %v1660 = vadd.f32 0.0, %v1659
    %1661 = vdwg.mxu0
    %v1662 = vadd.f32 %v1641, %v1660
    %v1663 = vmul.f32 %v1662, 0.5
    %v1664 = vtanh.pop %v1663
    %v1665 = vmul.f32 %v1664, 0.5
    %v1666 = vadd.f32 %v1665, 0.5
    %v1667 = vtanh.pop %v1662
    %1669 = vrot.lane.b32.xlu0 %v1666, 96
    %v1670 = vpop.permute.xlu0 %1669
    %v1672 = vmul.f32 %v1670, %v1615
    %1674 = vrot.lane.b32.xlu0 %v1667, 64
    %v1675 = vpop.permute.xlu0 %1674
    %v1677 = vmul.f32 %v1666, %v1675
    %v1678 = vadd.f32 %v1672, %v1677
    %1679 = vrot.lane.b32.xlu0 %v1666, 32
    %v1680 = vpop.permute.xlu0 %1679
    %v1682 = vtanh.pop %v1678
    %v1683 = vmul.f32 %v1680, %v1682
    %v1684 = vld [vmem:[#allocation15] sm:$0xff]
    %v1685 = vld [vmem:[#allocation15 + $0x8] sm:$0xff]
    %v1686 = vld [vmem:[#allocation15 + $0x10] sm:$0xff]
    %v1687 = vld [vmem:[#allocation15 + $0x18] sm:$0xff]
    %v1688 = vld [vmem:[#allocation15 + $0x20] sm:$0xff]
    %v1689 = vld [vmem:[#allocation15 + $0x28] sm:$0xff]
    %v1690 = vld [vmem:[#allocation15 + $0x30] sm:$0xff]
    %v1691 = vld [vmem:[#allocation15 + $0x38] sm:$0xff]
    %v1692 = vld [vmem:[#allocation15 + $0x40] sm:$0xff]
    %v1693 = vld [vmem:[#allocation15 + $0x48] sm:$0xff]
    %v1694 = vld [vmem:[#allocation15 + $0x50] sm:$0xff]
    %v1695 = vld [vmem:[#allocation15 + $0x58] sm:$0xff]
    %v1696 = vld [vmem:[#allocation15 + $0x60] sm:$0xff]
    %v1697 = vld [vmem:[#allocation15 + $0x68] sm:$0xff]
    %v1698 = vld [vmem:[#allocation15 + $0x70] sm:$0xff]
    %v1699 = vld [vmem:[#allocation15 + $0x78] sm:$0xff]
    %v1700 = vld [vmem:[%s11] sm:$0x1]
    %v1702 = vperm.slane %v1700, 0
    %1704 = vmatpush.msra.mxu0 %v1699
    %1705 = vmatpush.msra.mxu0 %v1698
    %1706 = vmatpush.msra.mxu0 %v1697
    %1707 = vmatpush.msra.mxu0 %v1696
    %1708 = vmatpush.msra.mxu0 %v1695
    %1709 = vmatpush.msra.mxu0 %v1694
    %1710 = vmatpush.msra.mxu0 %v1693
    %1711 = vmatpush.msra.mxu0 %v1692
    %1712 = vmatpush.msra.mxu0 %v1691
    %1713 = vmatpush.msra.mxu0 %v1690
    %1714 = vmatpush.msra.mxu0 %v1689
    %1715 = vmatpush.msra.mxu0 %v1688
    %1716 = vmatpush.msra.mxu0 %v1687
    %1717 = vmatpush.msra.mxu0 %v1686
    %1718 = vmatpush.msra.mxu0 %v1685
    %1719 = vmatpush.msra.mxu0 %v1684
    %1720 = vmatmul.f32.gmra.mxu0 %v1683
    %v1721 = vpop.f32.mrf.mxu0
    %v1722 = vadd.f32 %v1702, %v1721
    %1723 = vdwg.mxu0
    %1724 = vst [vmem:[#allocation17] sm:$0xff] %v1722
    // Predicated region
    $region82: #{tpu_custom_call.1} parent=1 // pred_check
      _
    $region83: #{tpu_custom_call.1} parent=1 // pred_check_branch
      %1726 = sbr.rel (0) target = $region85
    $region84: #{tpu_custom_call.1} parent=1 // pred_region
      %1728 = vsyncadd [#allocation5], 0
      %s1730 = sshll.u32 [#allocation17], 4
      %s1731 = int_to_ptr.vmem [resolvable:$true] %s1730
      %s1732 = sshll.u32 %s12, 4
      %s1733 = int_to_ptr.hbm [resolvable:$true] %s1732
      %1735 = dma.vmem_to_hbm [thread:$0]  %s1731, 128, %s1733, [#allocation5]
    $region85: #{tpu_custom_call.1} parent=1 // pred_fallthru
      _
    // Predicated region
    $region86: #{tpu_custom_call.1} parent=1 // pred_check
      _
    $region87: #{tpu_custom_call.1} parent=1 // pred_check_branch
      %1737 = sbr.rel (0) target = $region89
    $region88: #{tpu_custom_call.1} parent=1 // pred_region
      %1739 = dma.done [#allocation5], 128
    $region89: #{tpu_custom_call.1} parent=1 // pred_fallthru
      _
    %1740 = vsyncpa [#allocation4], 1
    %1741 = vsyncpa [#allocation7], 1
    %1742 = vsyncpa [#allocation10], 1
    %1743 = vsyncpa [#allocation13], 1
    %1744 = vsyncpa [#allocation16], 1
    %1745 = vsyncpa [#allocation5], 1

</llo_original>
